<compile_context>
chip_gen: v5e
topology: v5e:2x2
jax: 0.10.0
libtpu: 0.0.40
codegen_flags: <defaults>
</compile_context>

<pallas_src>
import math
from functools import partial

import jax
import jax.numpy as jnp
from jax.experimental import pallas as pl
from jax.experimental.pallas import tpu as pltpu  # noqa: F401  (kept for CompilerParams if VMEM limits ever need raising)


# --------------------------------------------------------------------------------------
# Fused kernel builder (num_layers / n_head are static -> loops fully unrolled)
# --------------------------------------------------------------------------------------
def _make_fused_kernel(num_layers, n_head):
    def kernel(*refs):
        # ---- unpack refs -----------------------------------------------------------
        x_ref, h0_ref, c0_ref = refs[0], refs[1], refs[2]
        p = 3
        lstm_w = []
        for _ in range(num_layers):
            lstm_w.append((refs[p], refs[p + 1], refs[p + 2]))
            p += 3
        wq_ref, wk_ref, wv_ref, wo_ref, w_reg_ref, b_reg_ref = refs[p:p + 6]
        y_ref, attn_ref = refs[p + 6], refs[p + 7]

        S, B, _ = x_ref.shape
        L, _, H = h0_ref.shape               # L == num_layers (encoder hidden states)
        proj = wq_ref.shape[-1]
        A = wo_ref.shape[-1]                 # attn_size
        d_head = proj // n_head
        AH = A + H

        # ---- LSTM stack: layers x time fully unrolled, weights resident -------------
        # PyTorch gate order [i, f, g, o]; c' = f*c + i*g; h' = o*tanh(c')
        xs = [x_ref[t] for t in range(S)]                      # S x (B, In)
        for l in range(num_layers):
            w_ih_ref, w_hh_ref, b_ref = lstm_w[l]
            w_ih = w_ih_ref[...]                               # (In_l, 4H) loaded once
            w_hh = w_hh_ref[...]                               # (H,   4H) loaded once
            b = b_ref[...]                                     # (1,   4H)
            h = h0_ref[l]                                      # (B, H)
            c = c0_ref[l]                                      # (B, H)
            outs = []
            for t in range(S):
                gates = (jnp.dot(xs[t], w_ih, preferred_element_type=jnp.float32)
                         + jnp.dot(h, w_hh, preferred_element_type=jnp.float32)
                         + b)                                  # (B, 4H)
                i_g = jax.nn.sigmoid(gates[:, 0 * H:1 * H])
                f_g = jax.nn.sigmoid(gates[:, 1 * H:2 * H])
                g_g = jnp.tanh(gates[:, 2 * H:3 * H])
                o_g = jax.nn.sigmoid(gates[:, 3 * H:4 * H])
                c = f_g * c + i_g * g_g
                h = o_g * jnp.tanh(c)
                outs.append(h)
            xs = outs
        h_seq = xs                                             # S x (B, H): last-layer states

        # ---- Multi-head attention + regressor, per batch row (B tiny & static) ------
        # queries  : lstm_out (batch-first)  -> (S, H)
        # keys/vals: encoder h0 (batch-first) -> (L, H)
        # TODO(synk): the reference uses an external `attention.Attention` whose code is
        # not provided; we implement standard scaled-dot-product MHA over these tensors.
        bias = b_reg_ref[...]                                  # (1, Dout)
        for bb in range(B):
            q_b = jnp.concatenate([h_seq[t][bb:bb + 1, :] for t in range(S)], axis=0)    # (S, H)
            kv_b = jnp.concatenate([h0_ref[l][bb:bb + 1, :] for l in range(L)], axis=0)  # (L, H)

            ctx_heads = []
            for hd in range(n_head):
                sl = slice(hd * d_head, (hd + 1) * d_head)
                # static weight-ref slices -> per-head projections (no activation lane-slicing)
                q_h = jnp.dot(q_b, wq_ref[:, sl], preferred_element_type=jnp.float32)    # (S, dh)
                k_h = jnp.dot(kv_b, wk_ref[:, sl], preferred_element_type=jnp.float32)   # (L, dh)
                v_h = jnp.dot(kv_b, wv_ref[:, sl], preferred_element_type=jnp.float32)   # (L, dh)
                # wq is pre-scaled by 1/sqrt(d_head) at init -> no per-head scale multiply.
                s = jnp.dot(q_h, k_h.T, preferred_element_type=jnp.float32)              # (S, L)
                m = jnp.max(s, axis=-1, keepdims=True)
                e = jnp.exp(s - m)
                pw = e * pl.reciprocal(jnp.sum(e, axis=-1, keepdims=True), approx=True)  # softmax
                attn_ref[bb, hd] = pw
                ctx_heads.append(jnp.dot(pw, v_h, preferred_element_type=jnp.float32))   # (S, dh)

            ctx = jnp.concatenate(ctx_heads, axis=-1)                                    # (S, proj)
            attn_out_b = jnp.dot(ctx, wo_ref[...], preferred_element_type=jnp.float32)   # (S, A)

            # Regressor without flatten / concat materialization:
            #   y_b = b + sum_t [ relu(attn_t) @ Wreg[t*AH : t*AH+A]
            #                   + relu(h_t)    @ Wreg[t*AH+A : (t+1)*AH] ]
            # which is exactly ReLU(cat([attn, lstm], -1)).view(B,-1) @ w_reg + b.
            y_b = bias
            for t in range(S):
                base = t * AH
                a_t = jnp.maximum(attn_out_b[t:t + 1, :], 0.0)                           # (1, A)
                h_t = jnp.maximum(h_seq[t][bb:bb + 1, :], 0.0)                           # (1, H)
                y_b = y_b + jnp.dot(a_t, w_reg_ref[base:base + A, :],
                                    preferred_element_type=jnp.float32)
                y_b = y_b + jnp.dot(h_t, w_reg_ref[base + A:base + AH, :],
                                    preferred_element_type=jnp.float32)
            y_ref[bb:bb + 1, :] = y_b

    return kernel


# --------------------------------------------------------------------------------------
# Forward wrapper: one pallas_call, no grid (everything fits comfortably in VMEM)
# --------------------------------------------------------------------------------------
def lstm_dec_forward(params, x, encoder_hidden_states, num_layers, attn_head):
    h0, c0 = encoder_hidden_states
    S, B, _ = x.shape
    L = h0.shape[0]
    Dout = params["w_reg"].shape[-1]

    args = [x, h0, c0]
    for l in range(num_layers):
        args += [params[f"w_ih_{l}"], params[f"w_hh_{l}"], params[f"b_{l}"]]
    args += [params["wq"], params["wk"], params["wv"], params["wo"],
             params["w_reg"], params["b_reg"]]

    kernel = _make_fused_kernel(num_layers, attn_head)
    y_pred, attn_w = pl.pallas_call(
        kernel,
        out_shape=(jax.ShapeDtypeStruct((B, Dout), jnp.float32),
                   jax.ShapeDtypeStruct((B, attn_head, S, L), jnp.float32)),
    )(*args)
    return y_pred, attn_w


# --------------------------------------------------------------------------------------
# Deterministic parameter init
#  - dropout is an inference no-op; use_bn=False -> no BatchNorm.
#  - TODO(synk): the use_bn=True BatchNorm1d path of make_regressor is not implemented.
# --------------------------------------------------------------------------------------
def init_params(key, input_dim, hidden_dim, output_dim, num_layers,
                attn_head, attn_size, seq_len):
    def uni(k, shape, scale=0.1):
        return jax.random.uniform(k, shape, jnp.float32, -scale, scale)

    keys = iter(jax.random.split(key, 3 * num_layers + 6))
    params = {}
    for l in range(num_layers):
        in_l = input_dim if l == 0 else hidden_dim
        params[f"w_ih_{l}"] = uni(next(keys), (in_l, 4 * hidden_dim))
        params[f"w_hh_{l}"] = uni(next(keys), (hidden_dim, 4 * hidden_dim))
        params[f"b_{l}"] = uni(next(keys), (1, 4 * hidden_dim))     # b_ih + b_hh combined

    proj = attn_size                       # attn_head * d_head
    d_head = proj // attn_head
    # wq carries the 1/sqrt(d_head) attention scale (exactly equivalent to scaling the
    # scores; fold it in the same way when converting a real checkpoint).
    params["wq"] = uni(next(keys), (hidden_dim, proj)) * (1.0 / math.sqrt(d_head))
    params["wk"] = uni(next(keys), (hidden_dim, proj))
    params["wv"] = uni(next(keys), (hidden_dim, proj))
    params["wo"] = uni(next(keys), (proj, attn_size))

    reg_in = seq_len * (attn_size + hidden_dim)
    params["w_reg"] = uni(next(keys), (reg_in, output_dim))         # nn.Linear weight, transposed
    params["b_reg"] = uni(next(keys), (1, output_dim))
    return params


if __name__ == "__main__":
    # Module hyper-parameters (small, consistent with the forward pass).
    # Note: B=2 / H=32 under-utilize sublanes/lanes - if serving shapes are tunable,
    # batch multiples of 8 and hidden_dim=128 are the sweet spot (see perf notes).
    input_dim, hidden_dim, output_dim = 16, 32, 8
    num_layers, batch_size = 2, 2
    dropout, use_bn = 0.0, False
    attn_head, attn_size, x_frames = 4, 32, 8

    key = jax.random.PRNGKey(0)
    kp, kx, kh, kc = jax.random.split(key, 4)
    params = init_params(kp, input_dim, hidden_dim, output_dim, num_layers,
                         attn_head, attn_size, x_frames)

    x = jax.random.normal(kx, (x_frames, batch_size, input_dim), jnp.float32)
    h0 = jax.random.normal(kh, (num_layers, batch_size, hidden_dim), jnp.float32)
    c0 = jax.random.normal(kc, (num_layers, batch_size, hidden_dim), jnp.float32)

    fwd = jax.jit(lstm_dec_forward, static_argnames=("num_layers", "attn_head"))
    y_pred, attn_w = fwd(params, x, (h0, c0),
                         num_layers=num_layers, attn_head=attn_head)
    y_pred, attn_w = jax.block_until_ready((y_pred, attn_w))

    assert y_pred.shape == (batch_size, output_dim)
    assert attn_w.shape == (batch_size, attn_head, x_frames, num_layers)
    assert bool(jnp.all(jnp.isfinite(y_pred)))
    assert bool(jnp.all(jnp.isfinite(attn_w)))
    print("KERNEL_OK")
</pallas_src>

<mosaic_0001>
module attributes {stable_mosaic.version = 11 : i64} {
  func.func @kernel(%arg0: memref<8x2x16xf32, #tpu.memory_space<vmem>>, %arg1: memref<2x2x32xf32, #tpu.memory_space<vmem>>, %arg2: memref<2x2x32xf32, #tpu.memory_space<vmem>>, %arg3: memref<16x128xf32, #tpu.memory_space<vmem>>, %arg4: memref<32x128xf32, #tpu.memory_space<vmem>>, %arg5: memref<1x128xf32, #tpu.memory_space<vmem>>, %arg6: memref<32x128xf32, #tpu.memory_space<vmem>>, %arg7: memref<32x128xf32, #tpu.memory_space<vmem>>, %arg8: memref<1x128xf32, #tpu.memory_space<vmem>>, %arg9: memref<32x32xf32, #tpu.memory_space<vmem>>, %arg10: memref<32x32xf32, #tpu.memory_space<vmem>>, %arg11: memref<32x32xf32, #tpu.memory_space<vmem>>, %arg12: memref<32x32xf32, #tpu.memory_space<vmem>>, %arg13: memref<512x8xf32, #tpu.memory_space<vmem>>, %arg14: memref<1x8xf32, #tpu.memory_space<vmem>>, %arg15: memref<2x8xf32, #tpu.memory_space<vmem>>, %arg16: memref<2x4x8x2xf32, #tpu.memory_space<vmem>>) attributes {dimension_semantics = [], scalar_prefetch = 0 : i64, scratch_operands = 0 : i64, tpu.core_type = #tpu.core_type<tc>} {
    %c0 = arith.constant 0 : index
    %c0_0 = arith.constant 0 : index
    %c0_1 = arith.constant 0 : index
    %0 = vector.load %arg0[%c0, %c0_0, %c0_1] : memref<8x2x16xf32, #tpu.memory_space<vmem>>, vector<1x2x16xf32>
    %1 = vector.shape_cast %0 : vector<1x2x16xf32> to vector<2x16xf32>
    %c1 = arith.constant 1 : index
    %c0_2 = arith.constant 0 : index
    %c0_3 = arith.constant 0 : index
    %2 = vector.load %arg0[%c1, %c0_2, %c0_3] : memref<8x2x16xf32, #tpu.memory_space<vmem>>, vector<1x2x16xf32>
    %3 = vector.shape_cast %2 : vector<1x2x16xf32> to vector<2x16xf32>
    %c2 = arith.constant 2 : index
    %c0_4 = arith.constant 0 : index
    %c0_5 = arith.constant 0 : index
    %4 = vector.load %arg0[%c2, %c0_4, %c0_5] : memref<8x2x16xf32, #tpu.memory_space<vmem>>, vector<1x2x16xf32>
    %5 = vector.shape_cast %4 : vector<1x2x16xf32> to vector<2x16xf32>
    %c3 = arith.constant 3 : index
    %c0_6 = arith.constant 0 : index
    %c0_7 = arith.constant 0 : index
    %6 = vector.load %arg0[%c3, %c0_6, %c0_7] : memref<8x2x16xf32, #tpu.memory_space<vmem>>, vector<1x2x16xf32>
    %7 = vector.shape_cast %6 : vector<1x2x16xf32> to vector<2x16xf32>
    %c4 = arith.constant 4 : index
    %c0_8 = arith.constant 0 : index
    %c0_9 = arith.constant 0 : index
    %8 = vector.load %arg0[%c4, %c0_8, %c0_9] : memref<8x2x16xf32, #tpu.memory_space<vmem>>, vector<1x2x16xf32>
    %9 = vector.shape_cast %8 : vector<1x2x16xf32> to vector<2x16xf32>
    %c5 = arith.constant 5 : index
    %c0_10 = arith.constant 0 : index
    %c0_11 = arith.constant 0 : index
    %10 = vector.load %arg0[%c5, %c0_10, %c0_11] : memref<8x2x16xf32, #tpu.memory_space<vmem>>, vector<1x2x16xf32>
    %11 = vector.shape_cast %10 : vector<1x2x16xf32> to vector<2x16xf32>
    %c6 = arith.constant 6 : index
    %c0_12 = arith.constant 0 : index
    %c0_13 = arith.constant 0 : index
    %12 = vector.load %arg0[%c6, %c0_12, %c0_13] : memref<8x2x16xf32, #tpu.memory_space<vmem>>, vector<1x2x16xf32>
    %13 = vector.shape_cast %12 : vector<1x2x16xf32> to vector<2x16xf32>
    %c7 = arith.constant 7 : index
    %c0_14 = arith.constant 0 : index
    %c0_15 = arith.constant 0 : index
    %14 = vector.load %arg0[%c7, %c0_14, %c0_15] : memref<8x2x16xf32, #tpu.memory_space<vmem>>, vector<1x2x16xf32>
    %15 = vector.shape_cast %14 : vector<1x2x16xf32> to vector<2x16xf32>
    %c0_16 = arith.constant 0 : index
    %c0_17 = arith.constant 0 : index
    %16 = vector.load %arg3[%c0_16, %c0_17] : memref<16x128xf32, #tpu.memory_space<vmem>>, vector<16x128xf32>
    %c0_18 = arith.constant 0 : index
    %c0_19 = arith.constant 0 : index
    %17 = vector.load %arg4[%c0_18, %c0_19] : memref<32x128xf32, #tpu.memory_space<vmem>>, vector<32x128xf32>
    %c0_20 = arith.constant 0 : index
    %c0_21 = arith.constant 0 : index
    %18 = vector.load %arg5[%c0_20, %c0_21] : memref<1x128xf32, #tpu.memory_space<vmem>>, vector<1x128xf32>
    %c0_22 = arith.constant 0 : index
    %c0_23 = arith.constant 0 : index
    %c0_24 = arith.constant 0 : index
    %19 = vector.load %arg1[%c0_22, %c0_23, %c0_24] : memref<2x2x32xf32, #tpu.memory_space<vmem>>, vector<1x2x32xf32>
    %20 = vector.shape_cast %19 : vector<1x2x32xf32> to vector<2x32xf32>
    %c0_25 = arith.constant 0 : index
    %c0_26 = arith.constant 0 : index
    %c0_27 = arith.constant 0 : index
    %21 = vector.load %arg2[%c0_25, %c0_26, %c0_27] : memref<2x2x32xf32, #tpu.memory_space<vmem>>, vector<1x2x32xf32>
    %22 = vector.shape_cast %21 : vector<1x2x32xf32> to vector<2x32xf32>
    %cst = arith.constant dense<0.000000e+00> : vector<2x128xf32>
    %23 = tpu.matmul %1, %16, %cst {dimension_numbers = #tpu.dot_dimension_numbers<[1], [0], [0], [1], [0, 0, 1, 1], [], []>} : vector<2x16xf32>, vector<16x128xf32>, vector<2x128xf32> -> vector<2x128xf32>
    %cst_28 = arith.constant dense<0.000000e+00> : vector<2x128xf32>
    %24 = tpu.matmul %20, %17, %cst_28 {dimension_numbers = #tpu.dot_dimension_numbers<[1], [0], [0], [1], [0, 0, 1, 1], [], []>} : vector<2x32xf32>, vector<32x128xf32>, vector<2x128xf32> -> vector<2x128xf32>
    %25 = arith.addf %23, %24 : vector<2x128xf32>
    %26 = vector.broadcast %18 : vector<1x128xf32> to vector<2x128xf32>
    %27 = arith.addf %25, %26 : vector<2x128xf32>
    %28 = vector.extract_strided_slice %27 {offsets = [0, 0], sizes = [2, 32], strides = [1, 1]} : vector<2x128xf32> to vector<2x32xf32>
    %29 = arith.negf %28 : vector<2x32xf32>
    %30 = math.exp %29 : vector<2x32xf32>
    %cst_29 = arith.constant 1.000000e+00 : f32
    %31 = vector.broadcast %cst_29 : f32 to vector<2x32xf32>
    %32 = arith.addf %31, %30 : vector<2x32xf32>
    %33 = arith.divf %31, %32 : vector<2x32xf32>
    %34 = vector.extract_strided_slice %27 {offsets = [0, 32], sizes = [2, 32], strides = [1, 1]} : vector<2x128xf32> to vector<2x32xf32>
    %35 = arith.negf %34 : vector<2x32xf32>
    %36 = math.exp %35 : vector<2x32xf32>
    %cst_30 = arith.constant 1.000000e+00 : f32
    %37 = vector.broadcast %cst_30 : f32 to vector<2x32xf32>
    %38 = arith.addf %37, %36 : vector<2x32xf32>
    %39 = arith.divf %37, %38 : vector<2x32xf32>
    %40 = vector.extract_strided_slice %27 {offsets = [0, 64], sizes = [2, 32], strides = [1, 1]} : vector<2x128xf32> to vector<2x32xf32>
    %41 = math.tanh %40 : vector<2x32xf32>
    %42 = vector.extract_strided_slice %27 {offsets = [0, 96], sizes = [2, 32], strides = [1, 1]} : vector<2x128xf32> to vector<2x32xf32>
    %43 = arith.negf %42 : vector<2x32xf32>
    %44 = math.exp %43 : vector<2x32xf32>
    %cst_31 = arith.constant 1.000000e+00 : f32
    %45 = vector.broadcast %cst_31 : f32 to vector<2x32xf32>
    %46 = arith.addf %45, %44 : vector<2x32xf32>
    %47 = arith.divf %45, %46 : vector<2x32xf32>
    %48 = arith.mulf %39, %22 : vector<2x32xf32>
    %49 = arith.mulf %33, %41 : vector<2x32xf32>
    %50 = arith.addf %48, %49 : vector<2x32xf32>
    %51 = math.tanh %50 : vector<2x32xf32>
    %52 = arith.mulf %47, %51 : vector<2x32xf32>
    %cst_32 = arith.constant dense<0.000000e+00> : vector<2x128xf32>
    %53 = tpu.matmul %3, %16, %cst_32 {dimension_numbers = #tpu.dot_dimension_numbers<[1], [0], [0], [1], [0, 0, 1, 1], [], []>} : vector<2x16xf32>, vector<16x128xf32>, vector<2x128xf32> -> vector<2x128xf32>
    %cst_33 = arith.constant dense<0.000000e+00> : vector<2x128xf32>
    %54 = tpu.matmul %52, %17, %cst_33 {dimension_numbers = #tpu.dot_dimension_numbers<[1], [0], [0], [1], [0, 0, 1, 1], [], []>} : vector<2x32xf32>, vector<32x128xf32>, vector<2x128xf32> -> vector<2x128xf32>
    %55 = arith.addf %53, %54 : vector<2x128xf32>
    %56 = vector.broadcast %18 : vector<1x128xf32> to vector<2x128xf32>
    %57 = arith.addf %55, %56 : vector<2x128xf32>
    %58 = vector.extract_strided_slice %57 {offsets = [0, 0], sizes = [2, 32], strides = [1, 1]} : vector<2x128xf32> to vector<2x32xf32>
    %59 = arith.negf %58 : vector<2x32xf32>
    %60 = math.exp %59 : vector<2x32xf32>
    %cst_34 = arith.constant 1.000000e+00 : f32
    %61 = vector.broadcast %cst_34 : f32 to vector<2x32xf32>
    %62 = arith.addf %61, %60 : vector<2x32xf32>
    %63 = arith.divf %61, %62 : vector<2x32xf32>
    %64 = vector.extract_strided_slice %57 {offsets = [0, 32], sizes = [2, 32], strides = [1, 1]} : vector<2x128xf32> to vector<2x32xf32>
    %65 = arith.negf %64 : vector<2x32xf32>
    %66 = math.exp %65 : vector<2x32xf32>
    %cst_35 = arith.constant 1.000000e+00 : f32
    %67 = vector.broadcast %cst_35 : f32 to vector<2x32xf32>
    %68 = arith.addf %67, %66 : vector<2x32xf32>
    %69 = arith.divf %67, %68 : vector<2x32xf32>
    %70 = vector.extract_strided_slice %57 {offsets = [0, 64], sizes = [2, 32], strides = [1, 1]} : vector<2x128xf32> to vector<2x32xf32>
    %71 = math.tanh %70 : vector<2x32xf32>
    %72 = vector.extract_strided_slice %57 {offsets = [0, 96], sizes = [2, 32], strides = [1, 1]} : vector<2x128xf32> to vector<2x32xf32>
    %73 = arith.negf %72 : vector<2x32xf32>
    %74 = math.exp %73 : vector<2x32xf32>
    %cst_36 = arith.constant 1.000000e+00 : f32
    %75 = vector.broadcast %cst_36 : f32 to vector<2x32xf32>
    %76 = arith.addf %75, %74 : vector<2x32xf32>
    %77 = arith.divf %75, %76 : vector<2x32xf32>
    %78 = arith.mulf %69, %50 : vector<2x32xf32>
    %79 = arith.mulf %63, %71 : vector<2x32xf32>
    %80 = arith.addf %78, %79 : vector<2x32xf32>
    %81 = math.tanh %80 : vector<2x32xf32>
    %82 = arith.mulf %77, %81 : vector<2x32xf32>
    %cst_37 = arith.constant dense<0.000000e+00> : vector<2x128xf32>
    %83 = tpu.matmul %5, %16, %cst_37 {dimension_numbers = #tpu.dot_dimension_numbers<[1], [0], [0], [1], [0, 0, 1, 1], [], []>} : vector<2x16xf32>, vector<16x128xf32>, vector<2x128xf32> -> vector<2x128xf32>
    %cst_38 = arith.constant dense<0.000000e+00> : vector<2x128xf32>
    %84 = tpu.matmul %82, %17, %cst_38 {dimension_numbers = #tpu.dot_dimension_numbers<[1], [0], [0], [1], [0, 0, 1, 1], [], []>} : vector<2x32xf32>, vector<32x128xf32>, vector<2x128xf32> -> vector<2x128xf32>
    %85 = arith.addf %83, %84 : vector<2x128xf32>
    %86 = vector.broadcast %18 : vector<1x128xf32> to vector<2x128xf32>
    %87 = arith.addf %85, %86 : vector<2x128xf32>
    %88 = vector.extract_strided_slice %87 {offsets = [0, 0], sizes = [2, 32], strides = [1, 1]} : vector<2x128xf32> to vector<2x32xf32>
    %89 = arith.negf %88 : vector<2x32xf32>
    %90 = math.exp %89 : vector<2x32xf32>
    %cst_39 = arith.constant 1.000000e+00 : f32
    %91 = vector.broadcast %cst_39 : f32 to vector<2x32xf32>
    %92 = arith.addf %91, %90 : vector<2x32xf32>
    %93 = arith.divf %91, %92 : vector<2x32xf32>
    %94 = vector.extract_strided_slice %87 {offsets = [0, 32], sizes = [2, 32], strides = [1, 1]} : vector<2x128xf32> to vector<2x32xf32>
    %95 = arith.negf %94 : vector<2x32xf32>
    %96 = math.exp %95 : vector<2x32xf32>
    %cst_40 = arith.constant 1.000000e+00 : f32
    %97 = vector.broadcast %cst_40 : f32 to vector<2x32xf32>
    %98 = arith.addf %97, %96 : vector<2x32xf32>
    %99 = arith.divf %97, %98 : vector<2x32xf32>
    %100 = vector.extract_strided_slice %87 {offsets = [0, 64], sizes = [2, 32], strides = [1, 1]} : vector<2x128xf32> to vector<2x32xf32>
    %101 = math.tanh %100 : vector<2x32xf32>
    %102 = vector.extract_strided_slice %87 {offsets = [0, 96], sizes = [2, 32], strides = [1, 1]} : vector<2x128xf32> to vector<2x32xf32>
    %103 = arith.negf %102 : vector<2x32xf32>
    %104 = math.exp %103 : vector<2x32xf32>
    %cst_41 = arith.constant 1.000000e+00 : f32
    %105 = vector.broadcast %cst_41 : f32 to vector<2x32xf32>
    %106 = arith.addf %105, %104 : vector<2x32xf32>
    %107 = arith.divf %105, %106 : vector<2x32xf32>
    %108 = arith.mulf %99, %80 : vector<2x32xf32>
    %109 = arith.mulf %93, %101 : vector<2x32xf32>
    %110 = arith.addf %108, %109 : vector<2x32xf32>
    %111 = math.tanh %110 : vector<2x32xf32>
    %112 = arith.mulf %107, %111 : vector<2x32xf32>
    %cst_42 = arith.constant dense<0.000000e+00> : vector<2x128xf32>
    %113 = tpu.matmul %7, %16, %cst_42 {dimension_numbers = #tpu.dot_dimension_numbers<[1], [0], [0], [1], [0, 0, 1, 1], [], []>} : vector<2x16xf32>, vector<16x128xf32>, vector<2x128xf32> -> vector<2x128xf32>
    %cst_43 = arith.constant dense<0.000000e+00> : vector<2x128xf32>
    %114 = tpu.matmul %112, %17, %cst_43 {dimension_numbers = #tpu.dot_dimension_numbers<[1], [0], [0], [1], [0, 0, 1, 1], [], []>} : vector<2x32xf32>, vector<32x128xf32>, vector<2x128xf32> -> vector<2x128xf32>
    %115 = arith.addf %113, %114 : vector<2x128xf32>
    %116 = vector.broadcast %18 : vector<1x128xf32> to vector<2x128xf32>
    %117 = arith.addf %115, %116 : vector<2x128xf32>
    %118 = vector.extract_strided_slice %117 {offsets = [0, 0], sizes = [2, 32], strides = [1, 1]} : vector<2x128xf32> to vector<2x32xf32>
    %119 = arith.negf %118 : vector<2x32xf32>
    %120 = math.exp %119 : vector<2x32xf32>
    %cst_44 = arith.constant 1.000000e+00 : f32
    %121 = vector.broadcast %cst_44 : f32 to vector<2x32xf32>
    %122 = arith.addf %121, %120 : vector<2x32xf32>
    %123 = arith.divf %121, %122 : vector<2x32xf32>
    %124 = vector.extract_strided_slice %117 {offsets = [0, 32], sizes = [2, 32], strides = [1, 1]} : vector<2x128xf32> to vector<2x32xf32>
    %125 = arith.negf %124 : vector<2x32xf32>
    %126 = math.exp %125 : vector<2x32xf32>
    %cst_45 = arith.constant 1.000000e+00 : f32
    %127 = vector.broadcast %cst_45 : f32 to vector<2x32xf32>
    %128 = arith.addf %127, %126 : vector<2x32xf32>
    %129 = arith.divf %127, %128 : vector<2x32xf32>
    %130 = vector.extract_strided_slice %117 {offsets = [0, 64], sizes = [2, 32], strides = [1, 1]} : vector<2x128xf32> to vector<2x32xf32>
    %131 = math.tanh %130 : vector<2x32xf32>
    %132 = vector.extract_strided_slice %117 {offsets = [0, 96], sizes = [2, 32], strides = [1, 1]} : vector<2x128xf32> to vector<2x32xf32>
    %133 = arith.negf %132 : vector<2x32xf32>
    %134 = math.exp %133 : vector<2x32xf32>
    %cst_46 = arith.constant 1.000000e+00 : f32
    %135 = vector.broadcast %cst_46 : f32 to vector<2x32xf32>
    %136 = arith.addf %135, %134 : vector<2x32xf32>
    %137 = arith.divf %135, %136 : vector<2x32xf32>
    %138 = arith.mulf %129, %110 : vector<2x32xf32>
    %139 = arith.mulf %123, %131 : vector<2x32xf32>
    %140 = arith.addf %138, %139 : vector<2x32xf32>
    %141 = math.tanh %140 : vector<2x32xf32>
    %142 = arith.mulf %137, %141 : vector<2x32xf32>
    %cst_47 = arith.constant dense<0.000000e+00> : vector<2x128xf32>
    %143 = tpu.matmul %9, %16, %cst_47 {dimension_numbers = #tpu.dot_dimension_numbers<[1], [0], [0], [1], [0, 0, 1, 1], [], []>} : vector<2x16xf32>, vector<16x128xf32>, vector<2x128xf32> -> vector<2x128xf32>
    %cst_48 = arith.constant dense<0.000000e+00> : vector<2x128xf32>
    %144 = tpu.matmul %142, %17, %cst_48 {dimension_numbers = #tpu.dot_dimension_numbers<[1], [0], [0], [1], [0, 0, 1, 1], [], []>} : vector<2x32xf32>, vector<32x128xf32>, vector<2x128xf32> -> vector<2x128xf32>
    %145 = arith.addf %143, %144 : vector<2x128xf32>
    %146 = vector.broadcast %18 : vector<1x128xf32> to vector<2x128xf32>
    %147 = arith.addf %145, %146 : vector<2x128xf32>
    %148 = vector.extract_strided_slice %147 {offsets = [0, 0], sizes = [2, 32], strides = [1, 1]} : vector<2x128xf32> to vector<2x32xf32>
    %149 = arith.negf %148 : vector<2x32xf32>
    %150 = math.exp %149 : vector<2x32xf32>
    %cst_49 = arith.constant 1.000000e+00 : f32
    %151 = vector.broadcast %cst_49 : f32 to vector<2x32xf32>
    %152 = arith.addf %151, %150 : vector<2x32xf32>
    %153 = arith.divf %151, %152 : vector<2x32xf32>
    %154 = vector.extract_strided_slice %147 {offsets = [0, 32], sizes = [2, 32], strides = [1, 1]} : vector<2x128xf32> to vector<2x32xf32>
    %155 = arith.negf %154 : vector<2x32xf32>
    %156 = math.exp %155 : vector<2x32xf32>
    %cst_50 = arith.constant 1.000000e+00 : f32
    %157 = vector.broadcast %cst_50 : f32 to vector<2x32xf32>
    %158 = arith.addf %157, %156 : vector<2x32xf32>
    %159 = arith.divf %157, %158 : vector<2x32xf32>
    %160 = vector.extract_strided_slice %147 {offsets = [0, 64], sizes = [2, 32], strides = [1, 1]} : vector<2x128xf32> to vector<2x32xf32>
    %161 = math.tanh %160 : vector<2x32xf32>
    %162 = vector.extract_strided_slice %147 {offsets = [0, 96], sizes = [2, 32], strides = [1, 1]} : vector<2x128xf32> to vector<2x32xf32>
    %163 = arith.negf %162 : vector<2x32xf32>
    %164 = math.exp %163 : vector<2x32xf32>
    %cst_51 = arith.constant 1.000000e+00 : f32
    %165 = vector.broadcast %cst_51 : f32 to vector<2x32xf32>
    %166 = arith.addf %165, %164 : vector<2x32xf32>
    %167 = arith.divf %165, %166 : vector<2x32xf32>
    %168 = arith.mulf %159, %140 : vector<2x32xf32>
    %169 = arith.mulf %153, %161 : vector<2x32xf32>
    %170 = arith.addf %168, %169 : vector<2x32xf32>
    %171 = math.tanh %170 : vector<2x32xf32>
    %172 = arith.mulf %167, %171 : vector<2x32xf32>
    %cst_52 = arith.constant dense<0.000000e+00> : vector<2x128xf32>
    %173 = tpu.matmul %11, %16, %cst_52 {dimension_numbers = #tpu.dot_dimension_numbers<[1], [0], [0], [1], [0, 0, 1, 1], [], []>} : vector<2x16xf32>, vector<16x128xf32>, vector<2x128xf32> -> vector<2x128xf32>
    %cst_53 = arith.constant dense<0.000000e+00> : vector<2x128xf32>
    %174 = tpu.matmul %172, %17, %cst_53 {dimension_numbers = #tpu.dot_dimension_numbers<[1], [0], [0], [1], [0, 0, 1, 1], [], []>} : vector<2x32xf32>, vector<32x128xf32>, vector<2x128xf32> -> vector<2x128xf32>
    %175 = arith.addf %173, %174 : vector<2x128xf32>
    %176 = vector.broadcast %18 : vector<1x128xf32> to vector<2x128xf32>
    %177 = arith.addf %175, %176 : vector<2x128xf32>
    %178 = vector.extract_strided_slice %177 {offsets = [0, 0], sizes = [2, 32], strides = [1, 1]} : vector<2x128xf32> to vector<2x32xf32>
    %179 = arith.negf %178 : vector<2x32xf32>
    %180 = math.exp %179 : vector<2x32xf32>
    %cst_54 = arith.constant 1.000000e+00 : f32
    %181 = vector.broadcast %cst_54 : f32 to vector<2x32xf32>
    %182 = arith.addf %181, %180 : vector<2x32xf32>
    %183 = arith.divf %181, %182 : vector<2x32xf32>
    %184 = vector.extract_strided_slice %177 {offsets = [0, 32], sizes = [2, 32], strides = [1, 1]} : vector<2x128xf32> to vector<2x32xf32>
    %185 = arith.negf %184 : vector<2x32xf32>
    %186 = math.exp %185 : vector<2x32xf32>
    %cst_55 = arith.constant 1.000000e+00 : f32
    %187 = vector.broadcast %cst_55 : f32 to vector<2x32xf32>
    %188 = arith.addf %187, %186 : vector<2x32xf32>
    %189 = arith.divf %187, %188 : vector<2x32xf32>
    %190 = vector.extract_strided_slice %177 {offsets = [0, 64], sizes = [2, 32], strides = [1, 1]} : vector<2x128xf32> to vector<2x32xf32>
    %191 = math.tanh %190 : vector<2x32xf32>
    %192 = vector.extract_strided_slice %177 {offsets = [0, 96], sizes = [2, 32], strides = [1, 1]} : vector<2x128xf32> to vector<2x32xf32>
    %193 = arith.negf %192 : vector<2x32xf32>
    %194 = math.exp %193 : vector<2x32xf32>
    %cst_56 = arith.constant 1.000000e+00 : f32
    %195 = vector.broadcast %cst_56 : f32 to vector<2x32xf32>
    %196 = arith.addf %195, %194 : vector<2x32xf32>
    %197 = arith.divf %195, %196 : vector<2x32xf32>
    %198 = arith.mulf %189, %170 : vector<2x32xf32>
    %199 = arith.mulf %183, %191 : vector<2x32xf32>
    %200 = arith.addf %198, %199 : vector<2x32xf32>
    %201 = math.tanh %200 : vector<2x32xf32>
    %202 = arith.mulf %197, %201 : vector<2x32xf32>
    %cst_57 = arith.constant dense<0.000000e+00> : vector<2x128xf32>
    %203 = tpu.matmul %13, %16, %cst_57 {dimension_numbers = #tpu.dot_dimension_numbers<[1], [0], [0], [1], [0, 0, 1, 1], [], []>} : vector<2x16xf32>, vector<16x128xf32>, vector<2x128xf32> -> vector<2x128xf32>
    %cst_58 = arith.constant dense<0.000000e+00> : vector<2x128xf32>
    %204 = tpu.matmul %202, %17, %cst_58 {dimension_numbers = #tpu.dot_dimension_numbers<[1], [0], [0], [1], [0, 0, 1, 1], [], []>} : vector<2x32xf32>, vector<32x128xf32>, vector<2x128xf32> -> vector<2x128xf32>
    %205 = arith.addf %203, %204 : vector<2x128xf32>
    %206 = vector.broadcast %18 : vector<1x128xf32> to vector<2x128xf32>
    %207 = arith.addf %205, %206 : vector<2x128xf32>
    %208 = vector.extract_strided_slice %207 {offsets = [0, 0], sizes = [2, 32], strides = [1, 1]} : vector<2x128xf32> to vector<2x32xf32>
    %209 = arith.negf %208 : vector<2x32xf32>
    %210 = math.exp %209 : vector<2x32xf32>
    %cst_59 = arith.constant 1.000000e+00 : f32
    %211 = vector.broadcast %cst_59 : f32 to vector<2x32xf32>
    %212 = arith.addf %211, %210 : vector<2x32xf32>
    %213 = arith.divf %211, %212 : vector<2x32xf32>
    %214 = vector.extract_strided_slice %207 {offsets = [0, 32], sizes = [2, 32], strides = [1, 1]} : vector<2x128xf32> to vector<2x32xf32>
    %215 = arith.negf %214 : vector<2x32xf32>
    %216 = math.exp %215 : vector<2x32xf32>
    %cst_60 = arith.constant 1.000000e+00 : f32
    %217 = vector.broadcast %cst_60 : f32 to vector<2x32xf32>
    %218 = arith.addf %217, %216 : vector<2x32xf32>
    %219 = arith.divf %217, %218 : vector<2x32xf32>
    %220 = vector.extract_strided_slice %207 {offsets = [0, 64], sizes = [2, 32], strides = [1, 1]} : vector<2x128xf32> to vector<2x32xf32>
    %221 = math.tanh %220 : vector<2x32xf32>
    %222 = vector.extract_strided_slice %207 {offsets = [0, 96], sizes = [2, 32], strides = [1, 1]} : vector<2x128xf32> to vector<2x32xf32>
    %223 = arith.negf %222 : vector<2x32xf32>
    %224 = math.exp %223 : vector<2x32xf32>
    %cst_61 = arith.constant 1.000000e+00 : f32
    %225 = vector.broadcast %cst_61 : f32 to vector<2x32xf32>
    %226 = arith.addf %225, %224 : vector<2x32xf32>
    %227 = arith.divf %225, %226 : vector<2x32xf32>
    %228 = arith.mulf %219, %200 : vector<2x32xf32>
    %229 = arith.mulf %213, %221 : vector<2x32xf32>
    %230 = arith.addf %228, %229 : vector<2x32xf32>
    %231 = math.tanh %230 : vector<2x32xf32>
    %232 = arith.mulf %227, %231 : vector<2x32xf32>
    %cst_62 = arith.constant dense<0.000000e+00> : vector<2x128xf32>
    %233 = tpu.matmul %15, %16, %cst_62 {dimension_numbers = #tpu.dot_dimension_numbers<[1], [0], [0], [1], [0, 0, 1, 1], [], []>} : vector<2x16xf32>, vector<16x128xf32>, vector<2x128xf32> -> vector<2x128xf32>
    %cst_63 = arith.constant dense<0.000000e+00> : vector<2x128xf32>
    %234 = tpu.matmul %232, %17, %cst_63 {dimension_numbers = #tpu.dot_dimension_numbers<[1], [0], [0], [1], [0, 0, 1, 1], [], []>} : vector<2x32xf32>, vector<32x128xf32>, vector<2x128xf32> -> vector<2x128xf32>
    %235 = arith.addf %233, %234 : vector<2x128xf32>
    %236 = vector.broadcast %18 : vector<1x128xf32> to vector<2x128xf32>
    %237 = arith.addf %235, %236 : vector<2x128xf32>
    %238 = vector.extract_strided_slice %237 {offsets = [0, 0], sizes = [2, 32], strides = [1, 1]} : vector<2x128xf32> to vector<2x32xf32>
    %239 = arith.negf %238 : vector<2x32xf32>
    %240 = math.exp %239 : vector<2x32xf32>
    %cst_64 = arith.constant 1.000000e+00 : f32
    %241 = vector.broadcast %cst_64 : f32 to vector<2x32xf32>
    %242 = arith.addf %241, %240 : vector<2x32xf32>
    %243 = arith.divf %241, %242 : vector<2x32xf32>
    %244 = vector.extract_strided_slice %237 {offsets = [0, 32], sizes = [2, 32], strides = [1, 1]} : vector<2x128xf32> to vector<2x32xf32>
    %245 = arith.negf %244 : vector<2x32xf32>
    %246 = math.exp %245 : vector<2x32xf32>
    %cst_65 = arith.constant 1.000000e+00 : f32
    %247 = vector.broadcast %cst_65 : f32 to vector<2x32xf32>
    %248 = arith.addf %247, %246 : vector<2x32xf32>
    %249 = arith.divf %247, %248 : vector<2x32xf32>
    %250 = vector.extract_strided_slice %237 {offsets = [0, 64], sizes = [2, 32], strides = [1, 1]} : vector<2x128xf32> to vector<2x32xf32>
    %251 = math.tanh %250 : vector<2x32xf32>
    %252 = vector.extract_strided_slice %237 {offsets = [0, 96], sizes = [2, 32], strides = [1, 1]} : vector<2x128xf32> to vector<2x32xf32>
    %253 = arith.negf %252 : vector<2x32xf32>
    %254 = math.exp %253 : vector<2x32xf32>
    %cst_66 = arith.constant 1.000000e+00 : f32
    %255 = vector.broadcast %cst_66 : f32 to vector<2x32xf32>
    %256 = arith.addf %255, %254 : vector<2x32xf32>
    %257 = arith.divf %255, %256 : vector<2x32xf32>
    %258 = arith.mulf %249, %230 : vector<2x32xf32>
    %259 = arith.mulf %243, %251 : vector<2x32xf32>
    %260 = arith.addf %258, %259 : vector<2x32xf32>
    %261 = math.tanh %260 : vector<2x32xf32>
    %262 = arith.mulf %257, %261 : vector<2x32xf32>
    %c0_67 = arith.constant 0 : index
    %c0_68 = arith.constant 0 : index
    %263 = vector.load %arg6[%c0_67, %c0_68] : memref<32x128xf32, #tpu.memory_space<vmem>>, vector<32x128xf32>
    %c0_69 = arith.constant 0 : index
    %c0_70 = arith.constant 0 : index
    %264 = vector.load %arg7[%c0_69, %c0_70] : memref<32x128xf32, #tpu.memory_space<vmem>>, vector<32x128xf32>
    %c0_71 = arith.constant 0 : index
    %c0_72 = arith.constant 0 : index
    %265 = vector.load %arg8[%c0_71, %c0_72] : memref<1x128xf32, #tpu.memory_space<vmem>>, vector<1x128xf32>
    %c1_73 = arith.constant 1 : index
    %c0_74 = arith.constant 0 : index
    %c0_75 = arith.constant 0 : index
    %266 = vector.load %arg1[%c1_73, %c0_74, %c0_75] : memref<2x2x32xf32, #tpu.memory_space<vmem>>, vector<1x2x32xf32>
    %267 = vector.shape_cast %266 : vector<1x2x32xf32> to vector<2x32xf32>
    %c1_76 = arith.constant 1 : index
    %c0_77 = arith.constant 0 : index
    %c0_78 = arith.constant 0 : index
    %268 = vector.load %arg2[%c1_76, %c0_77, %c0_78] : memref<2x2x32xf32, #tpu.memory_space<vmem>>, vector<1x2x32xf32>
    %269 = vector.shape_cast %268 : vector<1x2x32xf32> to vector<2x32xf32>
    %cst_79 = arith.constant dense<0.000000e+00> : vector<2x128xf32>
    %270 = tpu.matmul %52, %263, %cst_79 {dimension_numbers = #tpu.dot_dimension_numbers<[1], [0], [0], [1], [0, 0, 1, 1], [], []>} : vector<2x32xf32>, vector<32x128xf32>, vector<2x128xf32> -> vector<2x128xf32>
    %cst_80 = arith.constant dense<0.000000e+00> : vector<2x128xf32>
    %271 = tpu.matmul %267, %264, %cst_80 {dimension_numbers = #tpu.dot_dimension_numbers<[1], [0], [0], [1], [0, 0, 1, 1], [], []>} : vector<2x32xf32>, vector<32x128xf32>, vector<2x128xf32> -> vector<2x128xf32>
    %272 = arith.addf %270, %271 : vector<2x128xf32>
    %273 = vector.broadcast %265 : vector<1x128xf32> to vector<2x128xf32>
    %274 = arith.addf %272, %273 : vector<2x128xf32>
    %275 = vector.extract_strided_slice %274 {offsets = [0, 0], sizes = [2, 32], strides = [1, 1]} : vector<2x128xf32> to vector<2x32xf32>
    %276 = arith.negf %275 : vector<2x32xf32>
    %277 = math.exp %276 : vector<2x32xf32>
    %cst_81 = arith.constant 1.000000e+00 : f32
    %278 = vector.broadcast %cst_81 : f32 to vector<2x32xf32>
    %279 = arith.addf %278, %277 : vector<2x32xf32>
    %280 = arith.divf %278, %279 : vector<2x32xf32>
    %281 = vector.extract_strided_slice %274 {offsets = [0, 32], sizes = [2, 32], strides = [1, 1]} : vector<2x128xf32> to vector<2x32xf32>
    %282 = arith.negf %281 : vector<2x32xf32>
    %283 = math.exp %282 : vector<2x32xf32>
    %cst_82 = arith.constant 1.000000e+00 : f32
    %284 = vector.broadcast %cst_82 : f32 to vector<2x32xf32>
    %285 = arith.addf %284, %283 : vector<2x32xf32>
    %286 = arith.divf %284, %285 : vector<2x32xf32>
    %287 = vector.extract_strided_slice %274 {offsets = [0, 64], sizes = [2, 32], strides = [1, 1]} : vector<2x128xf32> to vector<2x32xf32>
    %288 = math.tanh %287 : vector<2x32xf32>
    %289 = vector.extract_strided_slice %274 {offsets = [0, 96], sizes = [2, 32], strides = [1, 1]} : vector<2x128xf32> to vector<2x32xf32>
    %290 = arith.negf %289 : vector<2x32xf32>
    %291 = math.exp %290 : vector<2x32xf32>
    %cst_83 = arith.constant 1.000000e+00 : f32
    %292 = vector.broadcast %cst_83 : f32 to vector<2x32xf32>
    %293 = arith.addf %292, %291 : vector<2x32xf32>
    %294 = arith.divf %292, %293 : vector<2x32xf32>
    %295 = arith.mulf %286, %269 : vector<2x32xf32>
    %296 = arith.mulf %280, %288 : vector<2x32xf32>
    %297 = arith.addf %295, %296 : vector<2x32xf32>
    %298 = math.tanh %297 : vector<2x32xf32>
    %299 = arith.mulf %294, %298 : vector<2x32xf32>
    %cst_84 = arith.constant dense<0.000000e+00> : vector<2x128xf32>
    %300 = tpu.matmul %82, %263, %cst_84 {dimension_numbers = #tpu.dot_dimension_numbers<[1], [0], [0], [1], [0, 0, 1, 1], [], []>} : vector<2x32xf32>, vector<32x128xf32>, vector<2x128xf32> -> vector<2x128xf32>
    %cst_85 = arith.constant dense<0.000000e+00> : vector<2x128xf32>
    %301 = tpu.matmul %299, %264, %cst_85 {dimension_numbers = #tpu.dot_dimension_numbers<[1], [0], [0], [1], [0, 0, 1, 1], [], []>} : vector<2x32xf32>, vector<32x128xf32>, vector<2x128xf32> -> vector<2x128xf32>
    %302 = arith.addf %300, %301 : vector<2x128xf32>
    %303 = vector.broadcast %265 : vector<1x128xf32> to vector<2x128xf32>
    %304 = arith.addf %302, %303 : vector<2x128xf32>
    %305 = vector.extract_strided_slice %304 {offsets = [0, 0], sizes = [2, 32], strides = [1, 1]} : vector<2x128xf32> to vector<2x32xf32>
    %306 = arith.negf %305 : vector<2x32xf32>
    %307 = math.exp %306 : vector<2x32xf32>
    %cst_86 = arith.constant 1.000000e+00 : f32
    %308 = vector.broadcast %cst_86 : f32 to vector<2x32xf32>
    %309 = arith.addf %308, %307 : vector<2x32xf32>
    %310 = arith.divf %308, %309 : vector<2x32xf32>
    %311 = vector.extract_strided_slice %304 {offsets = [0, 32], sizes = [2, 32], strides = [1, 1]} : vector<2x128xf32> to vector<2x32xf32>
    %312 = arith.negf %311 : vector<2x32xf32>
    %313 = math.exp %312 : vector<2x32xf32>
    %cst_87 = arith.constant 1.000000e+00 : f32
    %314 = vector.broadcast %cst_87 : f32 to vector<2x32xf32>
    %315 = arith.addf %314, %313 : vector<2x32xf32>
    %316 = arith.divf %314, %315 : vector<2x32xf32>
    %317 = vector.extract_strided_slice %304 {offsets = [0, 64], sizes = [2, 32], strides = [1, 1]} : vector<2x128xf32> to vector<2x32xf32>
    %318 = math.tanh %317 : vector<2x32xf32>
    %319 = vector.extract_strided_slice %304 {offsets = [0, 96], sizes = [2, 32], strides = [1, 1]} : vector<2x128xf32> to vector<2x32xf32>
    %320 = arith.negf %319 : vector<2x32xf32>
    %321 = math.exp %320 : vector<2x32xf32>
    %cst_88 = arith.constant 1.000000e+00 : f32
    %322 = vector.broadcast %cst_88 : f32 to vector<2x32xf32>
    %323 = arith.addf %322, %321 : vector<2x32xf32>
    %324 = arith.divf %322, %323 : vector<2x32xf32>
    %325 = arith.mulf %316, %297 : vector<2x32xf32>
    %326 = arith.mulf %310, %318 : vector<2x32xf32>
    %327 = arith.addf %325, %326 : vector<2x32xf32>
    %328 = math.tanh %327 : vector<2x32xf32>
    %329 = arith.mulf %324, %328 : vector<2x32xf32>
    %cst_89 = arith.constant dense<0.000000e+00> : vector<2x128xf32>
    %330 = tpu.matmul %112, %263, %cst_89 {dimension_numbers = #tpu.dot_dimension_numbers<[1], [0], [0], [1], [0, 0, 1, 1], [], []>} : vector<2x32xf32>, vector<32x128xf32>, vector<2x128xf32> -> vector<2x128xf32>
    %cst_90 = arith.constant dense<0.000000e+00> : vector<2x128xf32>
    %331 = tpu.matmul %329, %264, %cst_90 {dimension_numbers = #tpu.dot_dimension_numbers<[1], [0], [0], [1], [0, 0, 1, 1], [], []>} : vector<2x32xf32>, vector<32x128xf32>, vector<2x128xf32> -> vector<2x128xf32>
    %332 = arith.addf %330, %331 : vector<2x128xf32>
    %333 = vector.broadcast %265 : vector<1x128xf32> to vector<2x128xf32>
    %334 = arith.addf %332, %333 : vector<2x128xf32>
    %335 = vector.extract_strided_slice %334 {offsets = [0, 0], sizes = [2, 32], strides = [1, 1]} : vector<2x128xf32> to vector<2x32xf32>
    %336 = arith.negf %335 : vector<2x32xf32>
    %337 = math.exp %336 : vector<2x32xf32>
    %cst_91 = arith.constant 1.000000e+00 : f32
    %338 = vector.broadcast %cst_91 : f32 to vector<2x32xf32>
    %339 = arith.addf %338, %337 : vector<2x32xf32>
    %340 = arith.divf %338, %339 : vector<2x32xf32>
    %341 = vector.extract_strided_slice %334 {offsets = [0, 32], sizes = [2, 32], strides = [1, 1]} : vector<2x128xf32> to vector<2x32xf32>
    %342 = arith.negf %341 : vector<2x32xf32>
    %343 = math.exp %342 : vector<2x32xf32>
    %cst_92 = arith.constant 1.000000e+00 : f32
    %344 = vector.broadcast %cst_92 : f32 to vector<2x32xf32>
    %345 = arith.addf %344, %343 : vector<2x32xf32>
    %346 = arith.divf %344, %345 : vector<2x32xf32>
    %347 = vector.extract_strided_slice %334 {offsets = [0, 64], sizes = [2, 32], strides = [1, 1]} : vector<2x128xf32> to vector<2x32xf32>
    %348 = math.tanh %347 : vector<2x32xf32>
    %349 = vector.extract_strided_slice %334 {offsets = [0, 96], sizes = [2, 32], strides = [1, 1]} : vector<2x128xf32> to vector<2x32xf32>
    %350 = arith.negf %349 : vector<2x32xf32>
    %351 = math.exp %350 : vector<2x32xf32>
    %cst_93 = arith.constant 1.000000e+00 : f32
    %352 = vector.broadcast %cst_93 : f32 to vector<2x32xf32>
    %353 = arith.addf %352, %351 : vector<2x32xf32>
    %354 = arith.divf %352, %353 : vector<2x32xf32>
    %355 = arith.mulf %346, %327 : vector<2x32xf32>
    %356 = arith.mulf %340, %348 : vector<2x32xf32>
    %357 = arith.addf %355, %356 : vector<2x32xf32>
    %358 = math.tanh %357 : vector<2x32xf32>
    %359 = arith.mulf %354, %358 : vector<2x32xf32>
    %cst_94 = arith.constant dense<0.000000e+00> : vector<2x128xf32>
    %360 = tpu.matmul %142, %263, %cst_94 {dimension_numbers = #tpu.dot_dimension_numbers<[1], [0], [0], [1], [0, 0, 1, 1], [], []>} : vector<2x32xf32>, vector<32x128xf32>, vector<2x128xf32> -> vector<2x128xf32>
    %cst_95 = arith.constant dense<0.000000e+00> : vector<2x128xf32>
    %361 = tpu.matmul %359, %264, %cst_95 {dimension_numbers = #tpu.dot_dimension_numbers<[1], [0], [0], [1], [0, 0, 1, 1], [], []>} : vector<2x32xf32>, vector<32x128xf32>, vector<2x128xf32> -> vector<2x128xf32>
    %362 = arith.addf %360, %361 : vector<2x128xf32>
    %363 = vector.broadcast %265 : vector<1x128xf32> to vector<2x128xf32>
    %364 = arith.addf %362, %363 : vector<2x128xf32>
    %365 = vector.extract_strided_slice %364 {offsets = [0, 0], sizes = [2, 32], strides = [1, 1]} : vector<2x128xf32> to vector<2x32xf32>
    %366 = arith.negf %365 : vector<2x32xf32>
    %367 = math.exp %366 : vector<2x32xf32>
    %cst_96 = arith.constant 1.000000e+00 : f32
    %368 = vector.broadcast %cst_96 : f32 to vector<2x32xf32>
    %369 = arith.addf %368, %367 : vector<2x32xf32>
    %370 = arith.divf %368, %369 : vector<2x32xf32>
    %371 = vector.extract_strided_slice %364 {offsets = [0, 32], sizes = [2, 32], strides = [1, 1]} : vector<2x128xf32> to vector<2x32xf32>
    %372 = arith.negf %371 : vector<2x32xf32>
    %373 = math.exp %372 : vector<2x32xf32>
    %cst_97 = arith.constant 1.000000e+00 : f32
    %374 = vector.broadcast %cst_97 : f32 to vector<2x32xf32>
    %375 = arith.addf %374, %373 : vector<2x32xf32>
    %376 = arith.divf %374, %375 : vector<2x32xf32>
    %377 = vector.extract_strided_slice %364 {offsets = [0, 64], sizes = [2, 32], strides = [1, 1]} : vector<2x128xf32> to vector<2x32xf32>
    %378 = math.tanh %377 : vector<2x32xf32>
    %379 = vector.extract_strided_slice %364 {offsets = [0, 96], sizes = [2, 32], strides = [1, 1]} : vector<2x128xf32> to vector<2x32xf32>
    %380 = arith.negf %379 : vector<2x32xf32>
    %381 = math.exp %380 : vector<2x32xf32>
    %cst_98 = arith.constant 1.000000e+00 : f32
    %382 = vector.broadcast %cst_98 : f32 to vector<2x32xf32>
    %383 = arith.addf %382, %381 : vector<2x32xf32>
    %384 = arith.divf %382, %383 : vector<2x32xf32>
    %385 = arith.mulf %376, %357 : vector<2x32xf32>
    %386 = arith.mulf %370, %378 : vector<2x32xf32>
    %387 = arith.addf %385, %386 : vector<2x32xf32>
    %388 = math.tanh %387 : vector<2x32xf32>
    %389 = arith.mulf %384, %388 : vector<2x32xf32>
    %cst_99 = arith.constant dense<0.000000e+00> : vector<2x128xf32>
    %390 = tpu.matmul %172, %263, %cst_99 {dimension_numbers = #tpu.dot_dimension_numbers<[1], [0], [0], [1], [0, 0, 1, 1], [], []>} : vector<2x32xf32>, vector<32x128xf32>, vector<2x128xf32> -> vector<2x128xf32>
    %cst_100 = arith.constant dense<0.000000e+00> : vector<2x128xf32>
    %391 = tpu.matmul %389, %264, %cst_100 {dimension_numbers = #tpu.dot_dimension_numbers<[1], [0], [0], [1], [0, 0, 1, 1], [], []>} : vector<2x32xf32>, vector<32x128xf32>, vector<2x128xf32> -> vector<2x128xf32>
    %392 = arith.addf %390, %391 : vector<2x128xf32>
    %393 = vector.broadcast %265 : vector<1x128xf32> to vector<2x128xf32>
    %394 = arith.addf %392, %393 : vector<2x128xf32>
    %395 = vector.extract_strided_slice %394 {offsets = [0, 0], sizes = [2, 32], strides = [1, 1]} : vector<2x128xf32> to vector<2x32xf32>
    %396 = arith.negf %395 : vector<2x32xf32>
    %397 = math.exp %396 : vector<2x32xf32>
    %cst_101 = arith.constant 1.000000e+00 : f32
    %398 = vector.broadcast %cst_101 : f32 to vector<2x32xf32>
    %399 = arith.addf %398, %397 : vector<2x32xf32>
    %400 = arith.divf %398, %399 : vector<2x32xf32>
    %401 = vector.extract_strided_slice %394 {offsets = [0, 32], sizes = [2, 32], strides = [1, 1]} : vector<2x128xf32> to vector<2x32xf32>
    %402 = arith.negf %401 : vector<2x32xf32>
    %403 = math.exp %402 : vector<2x32xf32>
    %cst_102 = arith.constant 1.000000e+00 : f32
    %404 = vector.broadcast %cst_102 : f32 to vector<2x32xf32>
    %405 = arith.addf %404, %403 : vector<2x32xf32>
    %406 = arith.divf %404, %405 : vector<2x32xf32>
    %407 = vector.extract_strided_slice %394 {offsets = [0, 64], sizes = [2, 32], strides = [1, 1]} : vector<2x128xf32> to vector<2x32xf32>
    %408 = math.tanh %407 : vector<2x32xf32>
    %409 = vector.extract_strided_slice %394 {offsets = [0, 96], sizes = [2, 32], strides = [1, 1]} : vector<2x128xf32> to vector<2x32xf32>
    %410 = arith.negf %409 : vector<2x32xf32>
    %411 = math.exp %410 : vector<2x32xf32>
    %cst_103 = arith.constant 1.000000e+00 : f32
    %412 = vector.broadcast %cst_103 : f32 to vector<2x32xf32>
    %413 = arith.addf %412, %411 : vector<2x32xf32>
    %414 = arith.divf %412, %413 : vector<2x32xf32>
    %415 = arith.mulf %406, %387 : vector<2x32xf32>
    %416 = arith.mulf %400, %408 : vector<2x32xf32>
    %417 = arith.addf %415, %416 : vector<2x32xf32>
    %418 = math.tanh %417 : vector<2x32xf32>
    %419 = arith.mulf %414, %418 : vector<2x32xf32>
    %cst_104 = arith.constant dense<0.000000e+00> : vector<2x128xf32>
    %420 = tpu.matmul %202, %263, %cst_104 {dimension_numbers = #tpu.dot_dimension_numbers<[1], [0], [0], [1], [0, 0, 1, 1], [], []>} : vector<2x32xf32>, vector<32x128xf32>, vector<2x128xf32> -> vector<2x128xf32>
    %cst_105 = arith.constant dense<0.000000e+00> : vector<2x128xf32>
    %421 = tpu.matmul %419, %264, %cst_105 {dimension_numbers = #tpu.dot_dimension_numbers<[1], [0], [0], [1], [0, 0, 1, 1], [], []>} : vector<2x32xf32>, vector<32x128xf32>, vector<2x128xf32> -> vector<2x128xf32>
    %422 = arith.addf %420, %421 : vector<2x128xf32>
    %423 = vector.broadcast %265 : vector<1x128xf32> to vector<2x128xf32>
    %424 = arith.addf %422, %423 : vector<2x128xf32>
    %425 = vector.extract_strided_slice %424 {offsets = [0, 0], sizes = [2, 32], strides = [1, 1]} : vector<2x128xf32> to vector<2x32xf32>
    %426 = arith.negf %425 : vector<2x32xf32>
    %427 = math.exp %426 : vector<2x32xf32>
    %cst_106 = arith.constant 1.000000e+00 : f32
    %428 = vector.broadcast %cst_106 : f32 to vector<2x32xf32>
    %429 = arith.addf %428, %427 : vector<2x32xf32>
    %430 = arith.divf %428, %429 : vector<2x32xf32>
    %431 = vector.extract_strided_slice %424 {offsets = [0, 32], sizes = [2, 32], strides = [1, 1]} : vector<2x128xf32> to vector<2x32xf32>
    %432 = arith.negf %431 : vector<2x32xf32>
    %433 = math.exp %432 : vector<2x32xf32>
    %cst_107 = arith.constant 1.000000e+00 : f32
    %434 = vector.broadcast %cst_107 : f32 to vector<2x32xf32>
    %435 = arith.addf %434, %433 : vector<2x32xf32>
    %436 = arith.divf %434, %435 : vector<2x32xf32>
    %437 = vector.extract_strided_slice %424 {offsets = [0, 64], sizes = [2, 32], strides = [1, 1]} : vector<2x128xf32> to vector<2x32xf32>
    %438 = math.tanh %437 : vector<2x32xf32>
    %439 = vector.extract_strided_slice %424 {offsets = [0, 96], sizes = [2, 32], strides = [1, 1]} : vector<2x128xf32> to vector<2x32xf32>
    %440 = arith.negf %439 : vector<2x32xf32>
    %441 = math.exp %440 : vector<2x32xf32>
    %cst_108 = arith.constant 1.000000e+00 : f32
    %442 = vector.broadcast %cst_108 : f32 to vector<2x32xf32>
    %443 = arith.addf %442, %441 : vector<2x32xf32>
    %444 = arith.divf %442, %443 : vector<2x32xf32>
    %445 = arith.mulf %436, %417 : vector<2x32xf32>
    %446 = arith.mulf %430, %438 : vector<2x32xf32>
    %447 = arith.addf %445, %446 : vector<2x32xf32>
    %448 = math.tanh %447 : vector<2x32xf32>
    %449 = arith.mulf %444, %448 : vector<2x32xf32>
    %cst_109 = arith.constant dense<0.000000e+00> : vector<2x128xf32>
    %450 = tpu.matmul %232, %263, %cst_109 {dimension_numbers = #tpu.dot_dimension_numbers<[1], [0], [0], [1], [0, 0, 1, 1], [], []>} : vector<2x32xf32>, vector<32x128xf32>, vector<2x128xf32> -> vector<2x128xf32>
    %cst_110 = arith.constant dense<0.000000e+00> : vector<2x128xf32>
    %451 = tpu.matmul %449, %264, %cst_110 {dimension_numbers = #tpu.dot_dimension_numbers<[1], [0], [0], [1], [0, 0, 1, 1], [], []>} : vector<2x32xf32>, vector<32x128xf32>, vector<2x128xf32> -> vector<2x128xf32>
    %452 = arith.addf %450, %451 : vector<2x128xf32>
    %453 = vector.broadcast %265 : vector<1x128xf32> to vector<2x128xf32>
    %454 = arith.addf %452, %453 : vector<2x128xf32>
    %455 = vector.extract_strided_slice %454 {offsets = [0, 0], sizes = [2, 32], strides = [1, 1]} : vector<2x128xf32> to vector<2x32xf32>
    %456 = arith.negf %455 : vector<2x32xf32>
    %457 = math.exp %456 : vector<2x32xf32>
    %cst_111 = arith.constant 1.000000e+00 : f32
    %458 = vector.broadcast %cst_111 : f32 to vector<2x32xf32>
    %459 = arith.addf %458, %457 : vector<2x32xf32>
    %460 = arith.divf %458, %459 : vector<2x32xf32>
    %461 = vector.extract_strided_slice %454 {offsets = [0, 32], sizes = [2, 32], strides = [1, 1]} : vector<2x128xf32> to vector<2x32xf32>
    %462 = arith.negf %461 : vector<2x32xf32>
    %463 = math.exp %462 : vector<2x32xf32>
    %cst_112 = arith.constant 1.000000e+00 : f32
    %464 = vector.broadcast %cst_112 : f32 to vector<2x32xf32>
    %465 = arith.addf %464, %463 : vector<2x32xf32>
    %466 = arith.divf %464, %465 : vector<2x32xf32>
    %467 = vector.extract_strided_slice %454 {offsets = [0, 64], sizes = [2, 32], strides = [1, 1]} : vector<2x128xf32> to vector<2x32xf32>
    %468 = math.tanh %467 : vector<2x32xf32>
    %469 = vector.extract_strided_slice %454 {offsets = [0, 96], sizes = [2, 32], strides = [1, 1]} : vector<2x128xf32> to vector<2x32xf32>
    %470 = arith.negf %469 : vector<2x32xf32>
    %471 = math.exp %470 : vector<2x32xf32>
    %cst_113 = arith.constant 1.000000e+00 : f32
    %472 = vector.broadcast %cst_113 : f32 to vector<2x32xf32>
    %473 = arith.addf %472, %471 : vector<2x32xf32>
    %474 = arith.divf %472, %473 : vector<2x32xf32>
    %475 = arith.mulf %466, %447 : vector<2x32xf32>
    %476 = arith.mulf %460, %468 : vector<2x32xf32>
    %477 = arith.addf %475, %476 : vector<2x32xf32>
    %478 = math.tanh %477 : vector<2x32xf32>
    %479 = arith.mulf %474, %478 : vector<2x32xf32>
    %cst_114 = arith.constant dense<0.000000e+00> : vector<2x128xf32>
    %480 = tpu.matmul %262, %263, %cst_114 {dimension_numbers = #tpu.dot_dimension_numbers<[1], [0], [0], [1], [0, 0, 1, 1], [], []>} : vector<2x32xf32>, vector<32x128xf32>, vector<2x128xf32> -> vector<2x128xf32>
    %cst_115 = arith.constant dense<0.000000e+00> : vector<2x128xf32>
    %481 = tpu.matmul %479, %264, %cst_115 {dimension_numbers = #tpu.dot_dimension_numbers<[1], [0], [0], [1], [0, 0, 1, 1], [], []>} : vector<2x32xf32>, vector<32x128xf32>, vector<2x128xf32> -> vector<2x128xf32>
    %482 = arith.addf %480, %481 : vector<2x128xf32>
    %483 = vector.broadcast %265 : vector<1x128xf32> to vector<2x128xf32>
    %484 = arith.addf %482, %483 : vector<2x128xf32>
    %485 = vector.extract_strided_slice %484 {offsets = [0, 0], sizes = [2, 32], strides = [1, 1]} : vector<2x128xf32> to vector<2x32xf32>
    %486 = arith.negf %485 : vector<2x32xf32>
    %487 = math.exp %486 : vector<2x32xf32>
    %cst_116 = arith.constant 1.000000e+00 : f32
    %488 = vector.broadcast %cst_116 : f32 to vector<2x32xf32>
    %489 = arith.addf %488, %487 : vector<2x32xf32>
    %490 = arith.divf %488, %489 : vector<2x32xf32>
    %491 = vector.extract_strided_slice %484 {offsets = [0, 32], sizes = [2, 32], strides = [1, 1]} : vector<2x128xf32> to vector<2x32xf32>
    %492 = arith.negf %491 : vector<2x32xf32>
    %493 = math.exp %492 : vector<2x32xf32>
    %cst_117 = arith.constant 1.000000e+00 : f32
    %494 = vector.broadcast %cst_117 : f32 to vector<2x32xf32>
    %495 = arith.addf %494, %493 : vector<2x32xf32>
    %496 = arith.divf %494, %495 : vector<2x32xf32>
    %497 = vector.extract_strided_slice %484 {offsets = [0, 64], sizes = [2, 32], strides = [1, 1]} : vector<2x128xf32> to vector<2x32xf32>
    %498 = math.tanh %497 : vector<2x32xf32>
    %499 = vector.extract_strided_slice %484 {offsets = [0, 96], sizes = [2, 32], strides = [1, 1]} : vector<2x128xf32> to vector<2x32xf32>
    %500 = arith.negf %499 : vector<2x32xf32>
    %501 = math.exp %500 : vector<2x32xf32>
    %cst_118 = arith.constant 1.000000e+00 : f32
    %502 = vector.broadcast %cst_118 : f32 to vector<2x32xf32>
    %503 = arith.addf %502, %501 : vector<2x32xf32>
    %504 = arith.divf %502, %503 : vector<2x32xf32>
    %505 = arith.mulf %496, %477 : vector<2x32xf32>
    %506 = arith.mulf %490, %498 : vector<2x32xf32>
    %507 = arith.addf %505, %506 : vector<2x32xf32>
    %508 = math.tanh %507 : vector<2x32xf32>
    %509 = arith.mulf %504, %508 : vector<2x32xf32>
    %c0_119 = arith.constant 0 : index
    %c0_120 = arith.constant 0 : index
    %510 = vector.load %arg14[%c0_119, %c0_120] : memref<1x8xf32, #tpu.memory_space<vmem>>, vector<1x8xf32>
    %511 = vector.extract_strided_slice %299 {offsets = [0, 0], sizes = [1, 32], strides = [1, 1]} : vector<2x32xf32> to vector<1x32xf32>
    %512 = vector.extract_strided_slice %329 {offsets = [0, 0], sizes = [1, 32], strides = [1, 1]} : vector<2x32xf32> to vector<1x32xf32>
    %513 = vector.extract_strided_slice %359 {offsets = [0, 0], sizes = [1, 32], strides = [1, 1]} : vector<2x32xf32> to vector<1x32xf32>
    %514 = vector.extract_strided_slice %389 {offsets = [0, 0], sizes = [1, 32], strides = [1, 1]} : vector<2x32xf32> to vector<1x32xf32>
    %515 = vector.extract_strided_slice %419 {offsets = [0, 0], sizes = [1, 32], strides = [1, 1]} : vector<2x32xf32> to vector<1x32xf32>
    %516 = vector.extract_strided_slice %449 {offsets = [0, 0], sizes = [1, 32], strides = [1, 1]} : vector<2x32xf32> to vector<1x32xf32>
    %517 = vector.extract_strided_slice %479 {offsets = [0, 0], sizes = [1, 32], strides = [1, 1]} : vector<2x32xf32> to vector<1x32xf32>
    %518 = vector.extract_strided_slice %509 {offsets = [0, 0], sizes = [1, 32], strides = [1, 1]} : vector<2x32xf32> to vector<1x32xf32>
    %519 = tpu.concatenate %511, %512, %513, %514, %515, %516, %517, %518 in 0 : vector<1x32xf32>, vector<1x32xf32>, vector<1x32xf32>, vector<1x32xf32>, vector<1x32xf32>, vector<1x32xf32>, vector<1x32xf32>, vector<1x32xf32> -> vector<8x32xf32>
    %c0_121 = arith.constant 0 : index
    %c0_122 = arith.constant 0 : index
    %c0_123 = arith.constant 0 : index
    %520 = vector.load %arg1[%c0_121, %c0_122, %c0_123] : memref<2x2x32xf32, #tpu.memory_space<vmem>>, vector<1x2x32xf32>
    %521 = vector.shape_cast %520 : vector<1x2x32xf32> to vector<2x32xf32>
    %522 = vector.extract_strided_slice %521 {offsets = [0, 0], sizes = [1, 32], strides = [1, 1]} : vector<2x32xf32> to vector<1x32xf32>
    %c1_124 = arith.constant 1 : index
    %c0_125 = arith.constant 0 : index
    %c0_126 = arith.constant 0 : index
    %523 = vector.load %arg1[%c1_124, %c0_125, %c0_126] : memref<2x2x32xf32, #tpu.memory_space<vmem>>, vector<1x2x32xf32>
    %524 = vector.shape_cast %523 : vector<1x2x32xf32> to vector<2x32xf32>
    %525 = vector.extract_strided_slice %524 {offsets = [0, 0], sizes = [1, 32], strides = [1, 1]} : vector<2x32xf32> to vector<1x32xf32>
    %526 = tpu.concatenate %522, %525 in 0 : vector<1x32xf32>, vector<1x32xf32> -> vector<2x32xf32>
    %c0_127 = arith.constant 0 : index
    %c0_128 = arith.constant 0 : index
    %527 = vector.load %arg9[%c0_127, %c0_128] : memref<32x32xf32, #tpu.memory_space<vmem>>, vector<32x8xf32>
    %cst_129 = arith.constant dense<0.000000e+00> : vector<8x8xf32>
    %528 = tpu.matmul %519, %527, %cst_129 {dimension_numbers = #tpu.dot_dimension_numbers<[1], [0], [0], [1], [0, 0, 1, 1], [], []>} : vector<8x32xf32>, vector<32x8xf32>, vector<8x8xf32> -> vector<8x8xf32>
    %c0_130 = arith.constant 0 : index
    %c0_131 = arith.constant 0 : index
    %529 = vector.load %arg10[%c0_130, %c0_131] : memref<32x32xf32, #tpu.memory_space<vmem>>, vector<32x8xf32>
    %cst_132 = arith.constant dense<0.000000e+00> : vector<2x8xf32>
    %530 = tpu.matmul %526, %529, %cst_132 {dimension_numbers = #tpu.dot_dimension_numbers<[1], [0], [0], [1], [0, 0, 1, 1], [], []>} : vector<2x32xf32>, vector<32x8xf32>, vector<2x8xf32> -> vector<2x8xf32>
    %c0_133 = arith.constant 0 : index
    %c0_134 = arith.constant 0 : index
    %531 = vector.load %arg11[%c0_133, %c0_134] : memref<32x32xf32, #tpu.memory_space<vmem>>, vector<32x8xf32>
    %cst_135 = arith.constant dense<0.000000e+00> : vector<2x8xf32>
    %532 = tpu.matmul %526, %531, %cst_135 {dimension_numbers = #tpu.dot_dimension_numbers<[1], [0], [0], [1], [0, 0, 1, 1], [], []>} : vector<2x32xf32>, vector<32x8xf32>, vector<2x8xf32> -> vector<2x8xf32>
    %533 = tpu.transpose %530, [1, 0] : vector<2x8xf32> -> vector<8x2xf32>
    %cst_136 = arith.constant dense<0.000000e+00> : vector<8x2xf32>
    %534 = tpu.matmul %528, %533, %cst_136 {dimension_numbers = #tpu.dot_dimension_numbers<[1], [0], [0], [1], [0, 0, 1, 1], [], []>} : vector<8x8xf32>, vector<8x2xf32>, vector<8x2xf32> -> vector<8x2xf32>
    %cst_137 = arith.constant dense<0xFF800000> : vector<8xf32>
    %535 = vector.multi_reduction <maximumf>, %534, %cst_137 [1] : vector<8x2xf32> to vector<8xf32>
    %536 = vector.shape_cast %535 : vector<8xf32> to vector<8x1xf32>
    %537 = vector.broadcast %536 : vector<8x1xf32> to vector<8x2xf32>
    %538 = arith.subf %534, %537 : vector<8x2xf32>
    %539 = math.exp %538 : vector<8x2xf32>
    %cst_138 = arith.constant dense<0.000000e+00> : vector<8xf32>
    %540 = vector.multi_reduction <add>, %539, %cst_138 [1] : vector<8x2xf32> to vector<8xf32>
    %541 = vector.shape_cast %540 : vector<8xf32> to vector<8x1xf32>
    %542 = tpu.reciprocal %541 {approx = true} : vector<8x1xf32> -> vector<8x1xf32>
    %543 = vector.broadcast %542 : vector<8x1xf32> to vector<8x2xf32>
    %544 = arith.mulf %539, %543 : vector<8x2xf32>
    %c0_139 = arith.constant 0 : index
    %c0_140 = arith.constant 0 : index
    %c0_141 = arith.constant 0 : index
    %c0_142 = arith.constant 0 : index
    %545 = vector.load %arg16[%c0_139, %c0_140, %c0_141, %c0_142] : memref<2x4x8x2xf32, #tpu.memory_space<vmem>>, vector<1x1x8x2xf32>
    %546 = vector.shape_cast %545 : vector<1x1x8x2xf32> to vector<8x2xf32>
    %547 = vector.shape_cast %544 : vector<8x2xf32> to vector<1x1x8x2xf32>
    tpu.vector_store %arg16[%c0_139, %c0_140, %c0_141, %c0_142], %547 {strides = array<i32>} : memref<2x4x8x2xf32, #tpu.memory_space<vmem>>, vector<1x1x8x2xf32>,
    %cst_143 = arith.constant dense<0.000000e+00> : vector<8x8xf32>
    %548 = tpu.matmul %544, %532, %cst_143 {dimension_numbers = #tpu.dot_dimension_numbers<[1], [0], [0], [1], [0, 0, 1, 1], [], []>} : vector<8x2xf32>, vector<2x8xf32>, vector<8x8xf32> -> vector<8x8xf32>
    %c0_144 = arith.constant 0 : index
    %c8 = arith.constant 8 : index
    %549 = vector.load %arg9[%c0_144, %c8] : memref<32x32xf32, #tpu.memory_space<vmem>>, vector<32x8xf32>
    %cst_145 = arith.constant dense<0.000000e+00> : vector<8x8xf32>
    %550 = tpu.matmul %519, %549, %cst_145 {dimension_numbers = #tpu.dot_dimension_numbers<[1], [0], [0], [1], [0, 0, 1, 1], [], []>} : vector<8x32xf32>, vector<32x8xf32>, vector<8x8xf32> -> vector<8x8xf32>
    %c0_146 = arith.constant 0 : index
    %c8_147 = arith.constant 8 : index
    %551 = vector.load %arg10[%c0_146, %c8_147] : memref<32x32xf32, #tpu.memory_space<vmem>>, vector<32x8xf32>
    %cst_148 = arith.constant dense<0.000000e+00> : vector<2x8xf32>
    %552 = tpu.matmul %526, %551, %cst_148 {dimension_numbers = #tpu.dot_dimension_numbers<[1], [0], [0], [1], [0, 0, 1, 1], [], []>} : vector<2x32xf32>, vector<32x8xf32>, vector<2x8xf32> -> vector<2x8xf32>
    %c0_149 = arith.constant 0 : index
    %c8_150 = arith.constant 8 : index
    %553 = vector.load %arg11[%c0_149, %c8_150] : memref<32x32xf32, #tpu.memory_space<vmem>>, vector<32x8xf32>
    %cst_151 = arith.constant dense<0.000000e+00> : vector<2x8xf32>
    %554 = tpu.matmul %526, %553, %cst_151 {dimension_numbers = #tpu.dot_dimension_numbers<[1], [0], [0], [1], [0, 0, 1, 1], [], []>} : vector<2x32xf32>, vector<32x8xf32>, vector<2x8xf32> -> vector<2x8xf32>
    %555 = tpu.transpose %552, [1, 0] : vector<2x8xf32> -> vector<8x2xf32>
    %cst_152 = arith.constant dense<0.000000e+00> : vector<8x2xf32>
    %556 = tpu.matmul %550, %555, %cst_152 {dimension_numbers = #tpu.dot_dimension_numbers<[1], [0], [0], [1], [0, 0, 1, 1], [], []>} : vector<8x8xf32>, vector<8x2xf32>, vector<8x2xf32> -> vector<8x2xf32>
    %cst_153 = arith.constant dense<0xFF800000> : vector<8xf32>
    %557 = vector.multi_reduction <maximumf>, %556, %cst_153 [1] : vector<8x2xf32> to vector<8xf32>
    %558 = vector.shape_cast %557 : vector<8xf32> to vector<8x1xf32>
    %559 = vector.broadcast %558 : vector<8x1xf32> to vector<8x2xf32>
    %560 = arith.subf %556, %559 : vector<8x2xf32>
    %561 = math.exp %560 : vector<8x2xf32>
    %cst_154 = arith.constant dense<0.000000e+00> : vector<8xf32>
    %562 = vector.multi_reduction <add>, %561, %cst_154 [1] : vector<8x2xf32> to vector<8xf32>
    %563 = vector.shape_cast %562 : vector<8xf32> to vector<8x1xf32>
    %564 = tpu.reciprocal %563 {approx = true} : vector<8x1xf32> -> vector<8x1xf32>
    %565 = vector.broadcast %564 : vector<8x1xf32> to vector<8x2xf32>
    %566 = arith.mulf %561, %565 : vector<8x2xf32>
    %c0_155 = arith.constant 0 : index
    %c1_156 = arith.constant 1 : index
    %c0_157 = arith.constant 0 : index
    %c0_158 = arith.constant 0 : index
    %567 = vector.load %arg16[%c0_155, %c1_156, %c0_157, %c0_158] : memref<2x4x8x2xf32, #tpu.memory_space<vmem>>, vector<1x1x8x2xf32>
    %568 = vector.shape_cast %567 : vector<1x1x8x2xf32> to vector<8x2xf32>
    %569 = vector.shape_cast %566 : vector<8x2xf32> to vector<1x1x8x2xf32>
    tpu.vector_store %arg16[%c0_155, %c1_156, %c0_157, %c0_158], %569 {strides = array<i32>} : memref<2x4x8x2xf32, #tpu.memory_space<vmem>>, vector<1x1x8x2xf32>,
    %cst_159 = arith.constant dense<0.000000e+00> : vector<8x8xf32>
    %570 = tpu.matmul %566, %554, %cst_159 {dimension_numbers = #tpu.dot_dimension_numbers<[1], [0], [0], [1], [0, 0, 1, 1], [], []>} : vector<8x2xf32>, vector<2x8xf32>, vector<8x8xf32> -> vector<8x8xf32>
    %c0_160 = arith.constant 0 : index
    %c16 = arith.constant 16 : index
    %571 = vector.load %arg9[%c0_160, %c16] : memref<32x32xf32, #tpu.memory_space<vmem>>, vector<32x8xf32>
    %cst_161 = arith.constant dense<0.000000e+00> : vector<8x8xf32>
    %572 = tpu.matmul %519, %571, %cst_161 {dimension_numbers = #tpu.dot_dimension_numbers<[1], [0], [0], [1], [0, 0, 1, 1], [], []>} : vector<8x32xf32>, vector<32x8xf32>, vector<8x8xf32> -> vector<8x8xf32>
    %c0_162 = arith.constant 0 : index
    %c16_163 = arith.constant 16 : index
    %573 = vector.load %arg10[%c0_162, %c16_163] : memref<32x32xf32, #tpu.memory_space<vmem>>, vector<32x8xf32>
    %cst_164 = arith.constant dense<0.000000e+00> : vector<2x8xf32>
    %574 = tpu.matmul %526, %573, %cst_164 {dimension_numbers = #tpu.dot_dimension_numbers<[1], [0], [0], [1], [0, 0, 1, 1], [], []>} : vector<2x32xf32>, vector<32x8xf32>, vector<2x8xf32> -> vector<2x8xf32>
    %c0_165 = arith.constant 0 : index
    %c16_166 = arith.constant 16 : index
    %575 = vector.load %arg11[%c0_165, %c16_166] : memref<32x32xf32, #tpu.memory_space<vmem>>, vector<32x8xf32>
    %cst_167 = arith.constant dense<0.000000e+00> : vector<2x8xf32>
    %576 = tpu.matmul %526, %575, %cst_167 {dimension_numbers = #tpu.dot_dimension_numbers<[1], [0], [0], [1], [0, 0, 1, 1], [], []>} : vector<2x32xf32>, vector<32x8xf32>, vector<2x8xf32> -> vector<2x8xf32>
    %577 = tpu.transpose %574, [1, 0] : vector<2x8xf32> -> vector<8x2xf32>
    %cst_168 = arith.constant dense<0.000000e+00> : vector<8x2xf32>
    %578 = tpu.matmul %572, %577, %cst_168 {dimension_numbers = #tpu.dot_dimension_numbers<[1], [0], [0], [1], [0, 0, 1, 1], [], []>} : vector<8x8xf32>, vector<8x2xf32>, vector<8x2xf32> -> vector<8x2xf32>
    %cst_169 = arith.constant dense<0xFF800000> : vector<8xf32>
    %579 = vector.multi_reduction <maximumf>, %578, %cst_169 [1] : vector<8x2xf32> to vector<8xf32>
    %580 = vector.shape_cast %579 : vector<8xf32> to vector<8x1xf32>
    %581 = vector.broadcast %580 : vector<8x1xf32> to vector<8x2xf32>
    %582 = arith.subf %578, %581 : vector<8x2xf32>
    %583 = math.exp %582 : vector<8x2xf32>
    %cst_170 = arith.constant dense<0.000000e+00> : vector<8xf32>
    %584 = vector.multi_reduction <add>, %583, %cst_170 [1] : vector<8x2xf32> to vector<8xf32>
    %585 = vector.shape_cast %584 : vector<8xf32> to vector<8x1xf32>
    %586 = tpu.reciprocal %585 {approx = true} : vector<8x1xf32> -> vector<8x1xf32>
    %587 = vector.broadcast %586 : vector<8x1xf32> to vector<8x2xf32>
    %588 = arith.mulf %583, %587 : vector<8x2xf32>
    %c0_171 = arith.constant 0 : index
    %c2_172 = arith.constant 2 : index
    %c0_173 = arith.constant 0 : index
    %c0_174 = arith.constant 0 : index
    %589 = vector.load %arg16[%c0_171, %c2_172, %c0_173, %c0_174] : memref<2x4x8x2xf32, #tpu.memory_space<vmem>>, vector<1x1x8x2xf32>
    %590 = vector.shape_cast %589 : vector<1x1x8x2xf32> to vector<8x2xf32>
    %591 = vector.shape_cast %588 : vector<8x2xf32> to vector<1x1x8x2xf32>
    tpu.vector_store %arg16[%c0_171, %c2_172, %c0_173, %c0_174], %591 {strides = array<i32>} : memref<2x4x8x2xf32, #tpu.memory_space<vmem>>, vector<1x1x8x2xf32>,
    %cst_175 = arith.constant dense<0.000000e+00> : vector<8x8xf32>
    %592 = tpu.matmul %588, %576, %cst_175 {dimension_numbers = #tpu.dot_dimension_numbers<[1], [0], [0], [1], [0, 0, 1, 1], [], []>} : vector<8x2xf32>, vector<2x8xf32>, vector<8x8xf32> -> vector<8x8xf32>
    %c0_176 = arith.constant 0 : index
    %c24 = arith.constant 24 : index
    %593 = vector.load %arg9[%c0_176, %c24] : memref<32x32xf32, #tpu.memory_space<vmem>>, vector<32x8xf32>
    %cst_177 = arith.constant dense<0.000000e+00> : vector<8x8xf32>
    %594 = tpu.matmul %519, %593, %cst_177 {dimension_numbers = #tpu.dot_dimension_numbers<[1], [0], [0], [1], [0, 0, 1, 1], [], []>} : vector<8x32xf32>, vector<32x8xf32>, vector<8x8xf32> -> vector<8x8xf32>
    %c0_178 = arith.constant 0 : index
    %c24_179 = arith.constant 24 : index
    %595 = vector.load %arg10[%c0_178, %c24_179] : memref<32x32xf32, #tpu.memory_space<vmem>>, vector<32x8xf32>
    %cst_180 = arith.constant dense<0.000000e+00> : vector<2x8xf32>
    %596 = tpu.matmul %526, %595, %cst_180 {dimension_numbers = #tpu.dot_dimension_numbers<[1], [0], [0], [1], [0, 0, 1, 1], [], []>} : vector<2x32xf32>, vector<32x8xf32>, vector<2x8xf32> -> vector<2x8xf32>
    %c0_181 = arith.constant 0 : index
    %c24_182 = arith.constant 24 : index
    %597 = vector.load %arg11[%c0_181, %c24_182] : memref<32x32xf32, #tpu.memory_space<vmem>>, vector<32x8xf32>
    %cst_183 = arith.constant dense<0.000000e+00> : vector<2x8xf32>
    %598 = tpu.matmul %526, %597, %cst_183 {dimension_numbers = #tpu.dot_dimension_numbers<[1], [0], [0], [1], [0, 0, 1, 1], [], []>} : vector<2x32xf32>, vector<32x8xf32>, vector<2x8xf32> -> vector<2x8xf32>
    %599 = tpu.transpose %596, [1, 0] : vector<2x8xf32> -> vector<8x2xf32>
    %cst_184 = arith.constant dense<0.000000e+00> : vector<8x2xf32>
    %600 = tpu.matmul %594, %599, %cst_184 {dimension_numbers = #tpu.dot_dimension_numbers<[1], [0], [0], [1], [0, 0, 1, 1], [], []>} : vector<8x8xf32>, vector<8x2xf32>, vector<8x2xf32> -> vector<8x2xf32>
    %cst_185 = arith.constant dense<0xFF800000> : vector<8xf32>
    %601 = vector.multi_reduction <maximumf>, %600, %cst_185 [1] : vector<8x2xf32> to vector<8xf32>
    %602 = vector.shape_cast %601 : vector<8xf32> to vector<8x1xf32>
    %603 = vector.broadcast %602 : vector<8x1xf32> to vector<8x2xf32>
    %604 = arith.subf %600, %603 : vector<8x2xf32>
    %605 = math.exp %604 : vector<8x2xf32>
    %cst_186 = arith.constant dense<0.000000e+00> : vector<8xf32>
    %606 = vector.multi_reduction <add>, %605, %cst_186 [1] : vector<8x2xf32> to vector<8xf32>
    %607 = vector.shape_cast %606 : vector<8xf32> to vector<8x1xf32>
    %608 = tpu.reciprocal %607 {approx = true} : vector<8x1xf32> -> vector<8x1xf32>
    %609 = vector.broadcast %608 : vector<8x1xf32> to vector<8x2xf32>
    %610 = arith.mulf %605, %609 : vector<8x2xf32>
    %c0_187 = arith.constant 0 : index
    %c3_188 = arith.constant 3 : index
    %c0_189 = arith.constant 0 : index
    %c0_190 = arith.constant 0 : index
    %611 = vector.load %arg16[%c0_187, %c3_188, %c0_189, %c0_190] : memref<2x4x8x2xf32, #tpu.memory_space<vmem>>, vector<1x1x8x2xf32>
    %612 = vector.shape_cast %611 : vector<1x1x8x2xf32> to vector<8x2xf32>
    %613 = vector.shape_cast %610 : vector<8x2xf32> to vector<1x1x8x2xf32>
    tpu.vector_store %arg16[%c0_187, %c3_188, %c0_189, %c0_190], %613 {strides = array<i32>} : memref<2x4x8x2xf32, #tpu.memory_space<vmem>>, vector<1x1x8x2xf32>,
    %cst_191 = arith.constant dense<0.000000e+00> : vector<8x8xf32>
    %614 = tpu.matmul %610, %598, %cst_191 {dimension_numbers = #tpu.dot_dimension_numbers<[1], [0], [0], [1], [0, 0, 1, 1], [], []>} : vector<8x2xf32>, vector<2x8xf32>, vector<8x8xf32> -> vector<8x8xf32>
    %615 = tpu.concatenate %548, %570, %592, %614 in 1 : vector<8x8xf32>, vector<8x8xf32>, vector<8x8xf32>, vector<8x8xf32> -> vector<8x32xf32>
    %c0_192 = arith.constant 0 : index
    %c0_193 = arith.constant 0 : index
    %616 = vector.load %arg12[%c0_192, %c0_193] : memref<32x32xf32, #tpu.memory_space<vmem>>, vector<32x32xf32>
    %cst_194 = arith.constant dense<0.000000e+00> : vector<8x32xf32>
    %617 = tpu.matmul %615, %616, %cst_194 {dimension_numbers = #tpu.dot_dimension_numbers<[1], [0], [0], [1], [0, 0, 1, 1], [], []>} : vector<8x32xf32>, vector<32x32xf32>, vector<8x32xf32> -> vector<8x32xf32>
    %618 = vector.extract_strided_slice %617 {offsets = [0, 0], sizes = [1, 32], strides = [1, 1]} : vector<8x32xf32> to vector<1x32xf32>
    %cst_195 = arith.constant 0.000000e+00 : f32
    %619 = vector.broadcast %cst_195 : f32 to vector<1x32xf32>
    %620 = arith.maximumf %618, %619 : vector<1x32xf32>
    %621 = vector.extract_strided_slice %299 {offsets = [0, 0], sizes = [1, 32], strides = [1, 1]} : vector<2x32xf32> to vector<1x32xf32>
    %cst_196 = arith.constant 0.000000e+00 : f32
    %622 = vector.broadcast %cst_196 : f32 to vector<1x32xf32>
    %623 = arith.maximumf %621, %622 : vector<1x32xf32>
    %c0_197 = arith.constant 0 : index
    %c0_198 = arith.constant 0 : index
    %624 = vector.load %arg13[%c0_197, %c0_198] : memref<512x8xf32, #tpu.memory_space<vmem>>, vector<32x8xf32>
    %cst_199 = arith.constant dense<0.000000e+00> : vector<1x8xf32>
    %625 = tpu.matmul %620, %624, %cst_199 {dimension_numbers = #tpu.dot_dimension_numbers<[1], [0], [0], [1], [0, 0, 1, 1], [], []>} : vector<1x32xf32>, vector<32x8xf32>, vector<1x8xf32> -> vector<1x8xf32>
    %626 = arith.addf %510, %625 : vector<1x8xf32>
    %c32 = arith.constant 32 : index
    %c0_200 = arith.constant 0 : index
    %627 = vector.load %arg13[%c32, %c0_200] : memref<512x8xf32, #tpu.memory_space<vmem>>, vector<32x8xf32>
    %cst_201 = arith.constant dense<0.000000e+00> : vector<1x8xf32>
    %628 = tpu.matmul %623, %627, %cst_201 {dimension_numbers = #tpu.dot_dimension_numbers<[1], [0], [0], [1], [0, 0, 1, 1], [], []>} : vector<1x32xf32>, vector<32x8xf32>, vector<1x8xf32> -> vector<1x8xf32>
    %629 = arith.addf %626, %628 : vector<1x8xf32>
    %630 = vector.extract_strided_slice %617 {offsets = [1, 0], sizes = [1, 32], strides = [1, 1]} : vector<8x32xf32> to vector<1x32xf32>
    %cst_202 = arith.constant 0.000000e+00 : f32
    %631 = vector.broadcast %cst_202 : f32 to vector<1x32xf32>
    %632 = arith.maximumf %630, %631 : vector<1x32xf32>
    %633 = vector.extract_strided_slice %329 {offsets = [0, 0], sizes = [1, 32], strides = [1, 1]} : vector<2x32xf32> to vector<1x32xf32>
    %cst_203 = arith.constant 0.000000e+00 : f32
    %634 = vector.broadcast %cst_203 : f32 to vector<1x32xf32>
    %635 = arith.maximumf %633, %634 : vector<1x32xf32>
    %c64 = arith.constant 64 : index
    %c0_204 = arith.constant 0 : index
    %636 = vector.load %arg13[%c64, %c0_204] : memref<512x8xf32, #tpu.memory_space<vmem>>, vector<32x8xf32>
    %cst_205 = arith.constant dense<0.000000e+00> : vector<1x8xf32>
    %637 = tpu.matmul %632, %636, %cst_205 {dimension_numbers = #tpu.dot_dimension_numbers<[1], [0], [0], [1], [0, 0, 1, 1], [], []>} : vector<1x32xf32>, vector<32x8xf32>, vector<1x8xf32> -> vector<1x8xf32>
    %638 = arith.addf %629, %637 : vector<1x8xf32>
    %c96 = arith.constant 96 : index
    %c0_206 = arith.constant 0 : index
    %639 = vector.load %arg13[%c96, %c0_206] : memref<512x8xf32, #tpu.memory_space<vmem>>, vector<32x8xf32>
    %cst_207 = arith.constant dense<0.000000e+00> : vector<1x8xf32>
    %640 = tpu.matmul %635, %639, %cst_207 {dimension_numbers = #tpu.dot_dimension_numbers<[1], [0], [0], [1], [0, 0, 1, 1], [], []>} : vector<1x32xf32>, vector<32x8xf32>, vector<1x8xf32> -> vector<1x8xf32>
    %641 = arith.addf %638, %640 : vector<1x8xf32>
    %642 = vector.extract_strided_slice %617 {offsets = [2, 0], sizes = [1, 32], strides = [1, 1]} : vector<8x32xf32> to vector<1x32xf32>
    %cst_208 = arith.constant 0.000000e+00 : f32
    %643 = vector.broadcast %cst_208 : f32 to vector<1x32xf32>
    %644 = arith.maximumf %642, %643 : vector<1x32xf32>
    %645 = vector.extract_strided_slice %359 {offsets = [0, 0], sizes = [1, 32], strides = [1, 1]} : vector<2x32xf32> to vector<1x32xf32>
    %cst_209 = arith.constant 0.000000e+00 : f32
    %646 = vector.broadcast %cst_209 : f32 to vector<1x32xf32>
    %647 = arith.maximumf %645, %646 : vector<1x32xf32>
    %c128 = arith.constant 128 : index
    %c0_210 = arith.constant 0 : index
    %648 = vector.load %arg13[%c128, %c0_210] : memref<512x8xf32, #tpu.memory_space<vmem>>, vector<32x8xf32>
    %cst_211 = arith.constant dense<0.000000e+00> : vector<1x8xf32>
    %649 = tpu.matmul %644, %648, %cst_211 {dimension_numbers = #tpu.dot_dimension_numbers<[1], [0], [0], [1], [0, 0, 1, 1], [], []>} : vector<1x32xf32>, vector<32x8xf32>, vector<1x8xf32> -> vector<1x8xf32>
    %650 = arith.addf %641, %649 : vector<1x8xf32>
    %c160 = arith.constant 160 : index
    %c0_212 = arith.constant 0 : index
    %651 = vector.load %arg13[%c160, %c0_212] : memref<512x8xf32, #tpu.memory_space<vmem>>, vector<32x8xf32>
    %cst_213 = arith.constant dense<0.000000e+00> : vector<1x8xf32>
    %652 = tpu.matmul %647, %651, %cst_213 {dimension_numbers = #tpu.dot_dimension_numbers<[1], [0], [0], [1], [0, 0, 1, 1], [], []>} : vector<1x32xf32>, vector<32x8xf32>, vector<1x8xf32> -> vector<1x8xf32>
    %653 = arith.addf %650, %652 : vector<1x8xf32>
    %654 = vector.extract_strided_slice %617 {offsets = [3, 0], sizes = [1, 32], strides = [1, 1]} : vector<8x32xf32> to vector<1x32xf32>
    %cst_214 = arith.constant 0.000000e+00 : f32
    %655 = vector.broadcast %cst_214 : f32 to vector<1x32xf32>
    %656 = arith.maximumf %654, %655 : vector<1x32xf32>
    %657 = vector.extract_strided_slice %389 {offsets = [0, 0], sizes = [1, 32], strides = [1, 1]} : vector<2x32xf32> to vector<1x32xf32>
    %cst_215 = arith.constant 0.000000e+00 : f32
    %658 = vector.broadcast %cst_215 : f32 to vector<1x32xf32>
    %659 = arith.maximumf %657, %658 : vector<1x32xf32>
    %c192 = arith.constant 192 : index
    %c0_216 = arith.constant 0 : index
    %660 = vector.load %arg13[%c192, %c0_216] : memref<512x8xf32, #tpu.memory_space<vmem>>, vector<32x8xf32>
    %cst_217 = arith.constant dense<0.000000e+00> : vector<1x8xf32>
    %661 = tpu.matmul %656, %660, %cst_217 {dimension_numbers = #tpu.dot_dimension_numbers<[1], [0], [0], [1], [0, 0, 1, 1], [], []>} : vector<1x32xf32>, vector<32x8xf32>, vector<1x8xf32> -> vector<1x8xf32>
    %662 = arith.addf %653, %661 : vector<1x8xf32>
    %c224 = arith.constant 224 : index
    %c0_218 = arith.constant 0 : index
    %663 = vector.load %arg13[%c224, %c0_218] : memref<512x8xf32, #tpu.memory_space<vmem>>, vector<32x8xf32>
    %cst_219 = arith.constant dense<0.000000e+00> : vector<1x8xf32>
    %664 = tpu.matmul %659, %663, %cst_219 {dimension_numbers = #tpu.dot_dimension_numbers<[1], [0], [0], [1], [0, 0, 1, 1], [], []>} : vector<1x32xf32>, vector<32x8xf32>, vector<1x8xf32> -> vector<1x8xf32>
    %665 = arith.addf %662, %664 : vector<1x8xf32>
    %666 = vector.extract_strided_slice %617 {offsets = [4, 0], sizes = [1, 32], strides = [1, 1]} : vector<8x32xf32> to vector<1x32xf32>
    %cst_220 = arith.constant 0.000000e+00 : f32
    %667 = vector.broadcast %cst_220 : f32 to vector<1x32xf32>
    %668 = arith.maximumf %666, %667 : vector<1x32xf32>
    %669 = vector.extract_strided_slice %419 {offsets = [0, 0], sizes = [1, 32], strides = [1, 1]} : vector<2x32xf32> to vector<1x32xf32>
    %cst_221 = arith.constant 0.000000e+00 : f32
    %670 = vector.broadcast %cst_221 : f32 to vector<1x32xf32>
    %671 = arith.maximumf %669, %670 : vector<1x32xf32>
    %c256 = arith.constant 256 : index
    %c0_222 = arith.constant 0 : index
    %672 = vector.load %arg13[%c256, %c0_222] : memref<512x8xf32, #tpu.memory_space<vmem>>, vector<32x8xf32>
    %cst_223 = arith.constant dense<0.000000e+00> : vector<1x8xf32>
    %673 = tpu.matmul %668, %672, %cst_223 {dimension_numbers = #tpu.dot_dimension_numbers<[1], [0], [0], [1], [0, 0, 1, 1], [], []>} : vector<1x32xf32>, vector<32x8xf32>, vector<1x8xf32> -> vector<1x8xf32>
    %674 = arith.addf %665, %673 : vector<1x8xf32>
    %c288 = arith.constant 288 : index
    %c0_224 = arith.constant 0 : index
    %675 = vector.load %arg13[%c288, %c0_224] : memref<512x8xf32, #tpu.memory_space<vmem>>, vector<32x8xf32>
    %cst_225 = arith.constant dense<0.000000e+00> : vector<1x8xf32>
    %676 = tpu.matmul %671, %675, %cst_225 {dimension_numbers = #tpu.dot_dimension_numbers<[1], [0], [0], [1], [0, 0, 1, 1], [], []>} : vector<1x32xf32>, vector<32x8xf32>, vector<1x8xf32> -> vector<1x8xf32>
    %677 = arith.addf %674, %676 : vector<1x8xf32>
    %678 = vector.extract_strided_slice %617 {offsets = [5, 0], sizes = [1, 32], strides = [1, 1]} : vector<8x32xf32> to vector<1x32xf32>
    %cst_226 = arith.constant 0.000000e+00 : f32
    %679 = vector.broadcast %cst_226 : f32 to vector<1x32xf32>
    %680 = arith.maximumf %678, %679 : vector<1x32xf32>
    %681 = vector.extract_strided_slice %449 {offsets = [0, 0], sizes = [1, 32], strides = [1, 1]} : vector<2x32xf32> to vector<1x32xf32>
    %cst_227 = arith.constant 0.000000e+00 : f32
    %682 = vector.broadcast %cst_227 : f32 to vector<1x32xf32>
    %683 = arith.maximumf %681, %682 : vector<1x32xf32>
    %c320 = arith.constant 320 : index
    %c0_228 = arith.constant 0 : index
    %684 = vector.load %arg13[%c320, %c0_228] : memref<512x8xf32, #tpu.memory_space<vmem>>, vector<32x8xf32>
    %cst_229 = arith.constant dense<0.000000e+00> : vector<1x8xf32>
    %685 = tpu.matmul %680, %684, %cst_229 {dimension_numbers = #tpu.dot_dimension_numbers<[1], [0], [0], [1], [0, 0, 1, 1], [], []>} : vector<1x32xf32>, vector<32x8xf32>, vector<1x8xf32> -> vector<1x8xf32>
    %686 = arith.addf %677, %685 : vector<1x8xf32>
    %c352 = arith.constant 352 : index
    %c0_230 = arith.constant 0 : index
    %687 = vector.load %arg13[%c352, %c0_230] : memref<512x8xf32, #tpu.memory_space<vmem>>, vector<32x8xf32>
    %cst_231 = arith.constant dense<0.000000e+00> : vector<1x8xf32>
    %688 = tpu.matmul %683, %687, %cst_231 {dimension_numbers = #tpu.dot_dimension_numbers<[1], [0], [0], [1], [0, 0, 1, 1], [], []>} : vector<1x32xf32>, vector<32x8xf32>, vector<1x8xf32> -> vector<1x8xf32>
    %689 = arith.addf %686, %688 : vector<1x8xf32>
    %690 = vector.extract_strided_slice %617 {offsets = [6, 0], sizes = [1, 32], strides = [1, 1]} : vector<8x32xf32> to vector<1x32xf32>
    %cst_232 = arith.constant 0.000000e+00 : f32
    %691 = vector.broadcast %cst_232 : f32 to vector<1x32xf32>
    %692 = arith.maximumf %690, %691 : vector<1x32xf32>
    %693 = vector.extract_strided_slice %479 {offsets = [0, 0], sizes = [1, 32], strides = [1, 1]} : vector<2x32xf32> to vector<1x32xf32>
    %cst_233 = arith.constant 0.000000e+00 : f32
    %694 = vector.broadcast %cst_233 : f32 to vector<1x32xf32>
    %695 = arith.maximumf %693, %694 : vector<1x32xf32>
    %c384 = arith.constant 384 : index
    %c0_234 = arith.constant 0 : index
    %696 = vector.load %arg13[%c384, %c0_234] : memref<512x8xf32, #tpu.memory_space<vmem>>, vector<32x8xf32>
    %cst_235 = arith.constant dense<0.000000e+00> : vector<1x8xf32>
    %697 = tpu.matmul %692, %696, %cst_235 {dimension_numbers = #tpu.dot_dimension_numbers<[1], [0], [0], [1], [0, 0, 1, 1], [], []>} : vector<1x32xf32>, vector<32x8xf32>, vector<1x8xf32> -> vector<1x8xf32>
    %698 = arith.addf %689, %697 : vector<1x8xf32>
    %c416 = arith.constant 416 : index
    %c0_236 = arith.constant 0 : index
    %699 = vector.load %arg13[%c416, %c0_236] : memref<512x8xf32, #tpu.memory_space<vmem>>, vector<32x8xf32>
    %cst_237 = arith.constant dense<0.000000e+00> : vector<1x8xf32>
    %700 = tpu.matmul %695, %699, %cst_237 {dimension_numbers = #tpu.dot_dimension_numbers<[1], [0], [0], [1], [0, 0, 1, 1], [], []>} : vector<1x32xf32>, vector<32x8xf32>, vector<1x8xf32> -> vector<1x8xf32>
    %701 = arith.addf %698, %700 : vector<1x8xf32>
    %702 = vector.extract_strided_slice %617 {offsets = [7, 0], sizes = [1, 32], strides = [1, 1]} : vector<8x32xf32> to vector<1x32xf32>
    %cst_238 = arith.constant 0.000000e+00 : f32
    %703 = vector.broadcast %cst_238 : f32 to vector<1x32xf32>
    %704 = arith.maximumf %702, %703 : vector<1x32xf32>
    %705 = vector.extract_strided_slice %509 {offsets = [0, 0], sizes = [1, 32], strides = [1, 1]} : vector<2x32xf32> to vector<1x32xf32>
    %cst_239 = arith.constant 0.000000e+00 : f32
    %706 = vector.broadcast %cst_239 : f32 to vector<1x32xf32>
    %707 = arith.maximumf %705, %706 : vector<1x32xf32>
    %c448 = arith.constant 448 : index
    %c0_240 = arith.constant 0 : index
    %708 = vector.load %arg13[%c448, %c0_240] : memref<512x8xf32, #tpu.memory_space<vmem>>, vector<32x8xf32>
    %cst_241 = arith.constant dense<0.000000e+00> : vector<1x8xf32>
    %709 = tpu.matmul %704, %708, %cst_241 {dimension_numbers = #tpu.dot_dimension_numbers<[1], [0], [0], [1], [0, 0, 1, 1], [], []>} : vector<1x32xf32>, vector<32x8xf32>, vector<1x8xf32> -> vector<1x8xf32>
    %710 = arith.addf %701, %709 : vector<1x8xf32>
    %c480 = arith.constant 480 : index
    %c0_242 = arith.constant 0 : index
    %711 = vector.load %arg13[%c480, %c0_242] : memref<512x8xf32, #tpu.memory_space<vmem>>, vector<32x8xf32>
    %cst_243 = arith.constant dense<0.000000e+00> : vector<1x8xf32>
    %712 = tpu.matmul %707, %711, %cst_243 {dimension_numbers = #tpu.dot_dimension_numbers<[1], [0], [0], [1], [0, 0, 1, 1], [], []>} : vector<1x32xf32>, vector<32x8xf32>, vector<1x8xf32> -> vector<1x8xf32>
    %713 = arith.addf %710, %712 : vector<1x8xf32>
    %c0_244 = arith.constant 0 : index
    %c0_245 = arith.constant 0 : index
    %714 = vector.load %arg15[%c0_244, %c0_245] : memref<2x8xf32, #tpu.memory_space<vmem>>, vector<1x8xf32>
    tpu.vector_store %arg15[%c0_244, %c0_245], %713 {strides = array<i32>} : memref<2x8xf32, #tpu.memory_space<vmem>>, vector<1x8xf32>,
    %715 = vector.extract_strided_slice %299 {offsets = [1, 0], sizes = [1, 32], strides = [1, 1]} : vector<2x32xf32> to vector<1x32xf32>
    %716 = vector.extract_strided_slice %329 {offsets = [1, 0], sizes = [1, 32], strides = [1, 1]} : vector<2x32xf32> to vector<1x32xf32>
    %717 = vector.extract_strided_slice %359 {offsets = [1, 0], sizes = [1, 32], strides = [1, 1]} : vector<2x32xf32> to vector<1x32xf32>
    %718 = vector.extract_strided_slice %389 {offsets = [1, 0], sizes = [1, 32], strides = [1, 1]} : vector<2x32xf32> to vector<1x32xf32>
    %719 = vector.extract_strided_slice %419 {offsets = [1, 0], sizes = [1, 32], strides = [1, 1]} : vector<2x32xf32> to vector<1x32xf32>
    %720 = vector.extract_strided_slice %449 {offsets = [1, 0], sizes = [1, 32], strides = [1, 1]} : vector<2x32xf32> to vector<1x32xf32>
    %721 = vector.extract_strided_slice %479 {offsets = [1, 0], sizes = [1, 32], strides = [1, 1]} : vector<2x32xf32> to vector<1x32xf32>
    %722 = vector.extract_strided_slice %509 {offsets = [1, 0], sizes = [1, 32], strides = [1, 1]} : vector<2x32xf32> to vector<1x32xf32>
    %723 = tpu.concatenate %715, %716, %717, %718, %719, %720, %721, %722 in 0 : vector<1x32xf32>, vector<1x32xf32>, vector<1x32xf32>, vector<1x32xf32>, vector<1x32xf32>, vector<1x32xf32>, vector<1x32xf32>, vector<1x32xf32> -> vector<8x32xf32>
    %c0_246 = arith.constant 0 : index
    %c0_247 = arith.constant 0 : index
    %c0_248 = arith.constant 0 : index
    %724 = vector.load %arg1[%c0_246, %c0_247, %c0_248] : memref<2x2x32xf32, #tpu.memory_space<vmem>>, vector<1x2x32xf32>
    %725 = vector.shape_cast %724 : vector<1x2x32xf32> to vector<2x32xf32>
    %726 = vector.extract_strided_slice %725 {offsets = [1, 0], sizes = [1, 32], strides = [1, 1]} : vector<2x32xf32> to vector<1x32xf32>
    %c1_249 = arith.constant 1 : index
    %c0_250 = arith.constant 0 : index
    %c0_251 = arith.constant 0 : index
    %727 = vector.load %arg1[%c1_249, %c0_250, %c0_251] : memref<2x2x32xf32, #tpu.memory_space<vmem>>, vector<1x2x32xf32>
    %728 = vector.shape_cast %727 : vector<1x2x32xf32> to vector<2x32xf32>
    %729 = vector.extract_strided_slice %728 {offsets = [1, 0], sizes = [1, 32], strides = [1, 1]} : vector<2x32xf32> to vector<1x32xf32>
    %730 = tpu.concatenate %726, %729 in 0 : vector<1x32xf32>, vector<1x32xf32> -> vector<2x32xf32>
    %c0_252 = arith.constant 0 : index
    %c0_253 = arith.constant 0 : index
    %731 = vector.load %arg9[%c0_252, %c0_253] : memref<32x32xf32, #tpu.memory_space<vmem>>, vector<32x8xf32>
    %cst_254 = arith.constant dense<0.000000e+00> : vector<8x8xf32>
    %732 = tpu.matmul %723, %731, %cst_254 {dimension_numbers = #tpu.dot_dimension_numbers<[1], [0], [0], [1], [0, 0, 1, 1], [], []>} : vector<8x32xf32>, vector<32x8xf32>, vector<8x8xf32> -> vector<8x8xf32>
    %c0_255 = arith.constant 0 : index
    %c0_256 = arith.constant 0 : index
    %733 = vector.load %arg10[%c0_255, %c0_256] : memref<32x32xf32, #tpu.memory_space<vmem>>, vector<32x8xf32>
    %cst_257 = arith.constant dense<0.000000e+00> : vector<2x8xf32>
    %734 = tpu.matmul %730, %733, %cst_257 {dimension_numbers = #tpu.dot_dimension_numbers<[1], [0], [0], [1], [0, 0, 1, 1], [], []>} : vector<2x32xf32>, vector<32x8xf32>, vector<2x8xf32> -> vector<2x8xf32>
    %c0_258 = arith.constant 0 : index
    %c0_259 = arith.constant 0 : index
    %735 = vector.load %arg11[%c0_258, %c0_259] : memref<32x32xf32, #tpu.memory_space<vmem>>, vector<32x8xf32>
    %cst_260 = arith.constant dense<0.000000e+00> : vector<2x8xf32>
    %736 = tpu.matmul %730, %735, %cst_260 {dimension_numbers = #tpu.dot_dimension_numbers<[1], [0], [0], [1], [0, 0, 1, 1], [], []>} : vector<2x32xf32>, vector<32x8xf32>, vector<2x8xf32> -> vector<2x8xf32>
    %737 = tpu.transpose %734, [1, 0] : vector<2x8xf32> -> vector<8x2xf32>
    %cst_261 = arith.constant dense<0.000000e+00> : vector<8x2xf32>
    %738 = tpu.matmul %732, %737, %cst_261 {dimension_numbers = #tpu.dot_dimension_numbers<[1], [0], [0], [1], [0, 0, 1, 1], [], []>} : vector<8x8xf32>, vector<8x2xf32>, vector<8x2xf32> -> vector<8x2xf32>
    %cst_262 = arith.constant dense<0xFF800000> : vector<8xf32>
    %739 = vector.multi_reduction <maximumf>, %738, %cst_262 [1] : vector<8x2xf32> to vector<8xf32>
    %740 = vector.shape_cast %739 : vector<8xf32> to vector<8x1xf32>
    %741 = vector.broadcast %740 : vector<8x1xf32> to vector<8x2xf32>
    %742 = arith.subf %738, %741 : vector<8x2xf32>
    %743 = math.exp %742 : vector<8x2xf32>
    %cst_263 = arith.constant dense<0.000000e+00> : vector<8xf32>
    %744 = vector.multi_reduction <add>, %743, %cst_263 [1] : vector<8x2xf32> to vector<8xf32>
    %745 = vector.shape_cast %744 : vector<8xf32> to vector<8x1xf32>
    %746 = tpu.reciprocal %745 {approx = true} : vector<8x1xf32> -> vector<8x1xf32>
    %747 = vector.broadcast %746 : vector<8x1xf32> to vector<8x2xf32>
    %748 = arith.mulf %743, %747 : vector<8x2xf32>
    %c1_264 = arith.constant 1 : index
    %c0_265 = arith.constant 0 : index
    %c0_266 = arith.constant 0 : index
    %c0_267 = arith.constant 0 : index
    %749 = vector.load %arg16[%c1_264, %c0_265, %c0_266, %c0_267] : memref<2x4x8x2xf32, #tpu.memory_space<vmem>>, vector<1x1x8x2xf32>
    %750 = vector.shape_cast %749 : vector<1x1x8x2xf32> to vector<8x2xf32>
    %751 = vector.shape_cast %748 : vector<8x2xf32> to vector<1x1x8x2xf32>
    tpu.vector_store %arg16[%c1_264, %c0_265, %c0_266, %c0_267], %751 {strides = array<i32>} : memref<2x4x8x2xf32, #tpu.memory_space<vmem>>, vector<1x1x8x2xf32>,
    %cst_268 = arith.constant dense<0.000000e+00> : vector<8x8xf32>
    %752 = tpu.matmul %748, %736, %cst_268 {dimension_numbers = #tpu.dot_dimension_numbers<[1], [0], [0], [1], [0, 0, 1, 1], [], []>} : vector<8x2xf32>, vector<2x8xf32>, vector<8x8xf32> -> vector<8x8xf32>
    %c0_269 = arith.constant 0 : index
    %c8_270 = arith.constant 8 : index
    %753 = vector.load %arg9[%c0_269, %c8_270] : memref<32x32xf32, #tpu.memory_space<vmem>>, vector<32x8xf32>
    %cst_271 = arith.constant dense<0.000000e+00> : vector<8x8xf32>
    %754 = tpu.matmul %723, %753, %cst_271 {dimension_numbers = #tpu.dot_dimension_numbers<[1], [0], [0], [1], [0, 0, 1, 1], [], []>} : vector<8x32xf32>, vector<32x8xf32>, vector<8x8xf32> -> vector<8x8xf32>
    %c0_272 = arith.constant 0 : index
    %c8_273 = arith.constant 8 : index
    %755 = vector.load %arg10[%c0_272, %c8_273] : memref<32x32xf32, #tpu.memory_space<vmem>>, vector<32x8xf32>
    %cst_274 = arith.constant dense<0.000000e+00> : vector<2x8xf32>
    %756 = tpu.matmul %730, %755, %cst_274 {dimension_numbers = #tpu.dot_dimension_numbers<[1], [0], [0], [1], [0, 0, 1, 1], [], []>} : vector<2x32xf32>, vector<32x8xf32>, vector<2x8xf32> -> vector<2x8xf32>
    %c0_275 = arith.constant 0 : index
    %c8_276 = arith.constant 8 : index
    %757 = vector.load %arg11[%c0_275, %c8_276] : memref<32x32xf32, #tpu.memory_space<vmem>>, vector<32x8xf32>
    %cst_277 = arith.constant dense<0.000000e+00> : vector<2x8xf32>
    %758 = tpu.matmul %730, %757, %cst_277 {dimension_numbers = #tpu.dot_dimension_numbers<[1], [0], [0], [1], [0, 0, 1, 1], [], []>} : vector<2x32xf32>, vector<32x8xf32>, vector<2x8xf32> -> vector<2x8xf32>
    %759 = tpu.transpose %756, [1, 0] : vector<2x8xf32> -> vector<8x2xf32>
    %cst_278 = arith.constant dense<0.000000e+00> : vector<8x2xf32>
    %760 = tpu.matmul %754, %759, %cst_278 {dimension_numbers = #tpu.dot_dimension_numbers<[1], [0], [0], [1], [0, 0, 1, 1], [], []>} : vector<8x8xf32>, vector<8x2xf32>, vector<8x2xf32> -> vector<8x2xf32>
    %cst_279 = arith.constant dense<0xFF800000> : vector<8xf32>
    %761 = vector.multi_reduction <maximumf>, %760, %cst_279 [1] : vector<8x2xf32> to vector<8xf32>
    %762 = vector.shape_cast %761 : vector<8xf32> to vector<8x1xf32>
    %763 = vector.broadcast %762 : vector<8x1xf32> to vector<8x2xf32>
    %764 = arith.subf %760, %763 : vector<8x2xf32>
    %765 = math.exp %764 : vector<8x2xf32>
    %cst_280 = arith.constant dense<0.000000e+00> : vector<8xf32>
    %766 = vector.multi_reduction <add>, %765, %cst_280 [1] : vector<8x2xf32> to vector<8xf32>
    %767 = vector.shape_cast %766 : vector<8xf32> to vector<8x1xf32>
    %768 = tpu.reciprocal %767 {approx = true} : vector<8x1xf32> -> vector<8x1xf32>
    %769 = vector.broadcast %768 : vector<8x1xf32> to vector<8x2xf32>
    %770 = arith.mulf %765, %769 : vector<8x2xf32>
    %c1_281 = arith.constant 1 : index
    %c1_282 = arith.constant 1 : index
    %c0_283 = arith.constant 0 : index
    %c0_284 = arith.constant 0 : index
    %771 = vector.load %arg16[%c1_281, %c1_282, %c0_283, %c0_284] : memref<2x4x8x2xf32, #tpu.memory_space<vmem>>, vector<1x1x8x2xf32>
    %772 = vector.shape_cast %771 : vector<1x1x8x2xf32> to vector<8x2xf32>
    %773 = vector.shape_cast %770 : vector<8x2xf32> to vector<1x1x8x2xf32>
    tpu.vector_store %arg16[%c1_281, %c1_282, %c0_283, %c0_284], %773 {strides = array<i32>} : memref<2x4x8x2xf32, #tpu.memory_space<vmem>>, vector<1x1x8x2xf32>,
    %cst_285 = arith.constant dense<0.000000e+00> : vector<8x8xf32>
    %774 = tpu.matmul %770, %758, %cst_285 {dimension_numbers = #tpu.dot_dimension_numbers<[1], [0], [0], [1], [0, 0, 1, 1], [], []>} : vector<8x2xf32>, vector<2x8xf32>, vector<8x8xf32> -> vector<8x8xf32>
    %c0_286 = arith.constant 0 : index
    %c16_287 = arith.constant 16 : index
    %775 = vector.load %arg9[%c0_286, %c16_287] : memref<32x32xf32, #tpu.memory_space<vmem>>, vector<32x8xf32>
    %cst_288 = arith.constant dense<0.000000e+00> : vector<8x8xf32>
    %776 = tpu.matmul %723, %775, %cst_288 {dimension_numbers = #tpu.dot_dimension_numbers<[1], [0], [0], [1], [0, 0, 1, 1], [], []>} : vector<8x32xf32>, vector<32x8xf32>, vector<8x8xf32> -> vector<8x8xf32>
    %c0_289 = arith.constant 0 : index
    %c16_290 = arith.constant 16 : index
    %777 = vector.load %arg10[%c0_289, %c16_290] : memref<32x32xf32, #tpu.memory_space<vmem>>, vector<32x8xf32>
    %cst_291 = arith.constant dense<0.000000e+00> : vector<2x8xf32>
    %778 = tpu.matmul %730, %777, %cst_291 {dimension_numbers = #tpu.dot_dimension_numbers<[1], [0], [0], [1], [0, 0, 1, 1], [], []>} : vector<2x32xf32>, vector<32x8xf32>, vector<2x8xf32> -> vector<2x8xf32>
    %c0_292 = arith.constant 0 : index
    %c16_293 = arith.constant 16 : index
    %779 = vector.load %arg11[%c0_292, %c16_293] : memref<32x32xf32, #tpu.memory_space<vmem>>, vector<32x8xf32>
    %cst_294 = arith.constant dense<0.000000e+00> : vector<2x8xf32>
    %780 = tpu.matmul %730, %779, %cst_294 {dimension_numbers = #tpu.dot_dimension_numbers<[1], [0], [0], [1], [0, 0, 1, 1], [], []>} : vector<2x32xf32>, vector<32x8xf32>, vector<2x8xf32> -> vector<2x8xf32>
    %781 = tpu.transpose %778, [1, 0] : vector<2x8xf32> -> vector<8x2xf32>
    %cst_295 = arith.constant dense<0.000000e+00> : vector<8x2xf32>
    %782 = tpu.matmul %776, %781, %cst_295 {dimension_numbers = #tpu.dot_dimension_numbers<[1], [0], [0], [1], [0, 0, 1, 1], [], []>} : vector<8x8xf32>, vector<8x2xf32>, vector<8x2xf32> -> vector<8x2xf32>
    %cst_296 = arith.constant dense<0xFF800000> : vector<8xf32>
    %783 = vector.multi_reduction <maximumf>, %782, %cst_296 [1] : vector<8x2xf32> to vector<8xf32>
    %784 = vector.shape_cast %783 : vector<8xf32> to vector<8x1xf32>
    %785 = vector.broadcast %784 : vector<8x1xf32> to vector<8x2xf32>
    %786 = arith.subf %782, %785 : vector<8x2xf32>
    %787 = math.exp %786 : vector<8x2xf32>
    %cst_297 = arith.constant dense<0.000000e+00> : vector<8xf32>
    %788 = vector.multi_reduction <add>, %787, %cst_297 [1] : vector<8x2xf32> to vector<8xf32>
    %789 = vector.shape_cast %788 : vector<8xf32> to vector<8x1xf32>
    %790 = tpu.reciprocal %789 {approx = true} : vector<8x1xf32> -> vector<8x1xf32>
    %791 = vector.broadcast %790 : vector<8x1xf32> to vector<8x2xf32>
    %792 = arith.mulf %787, %791 : vector<8x2xf32>
    %c1_298 = arith.constant 1 : index
    %c2_299 = arith.constant 2 : index
    %c0_300 = arith.constant 0 : index
    %c0_301 = arith.constant 0 : index
    %793 = vector.load %arg16[%c1_298, %c2_299, %c0_300, %c0_301] : memref<2x4x8x2xf32, #tpu.memory_space<vmem>>, vector<1x1x8x2xf32>
    %794 = vector.shape_cast %793 : vector<1x1x8x2xf32> to vector<8x2xf32>
    %795 = vector.shape_cast %792 : vector<8x2xf32> to vector<1x1x8x2xf32>
    tpu.vector_store %arg16[%c1_298, %c2_299, %c0_300, %c0_301], %795 {strides = array<i32>} : memref<2x4x8x2xf32, #tpu.memory_space<vmem>>, vector<1x1x8x2xf32>,
    %cst_302 = arith.constant dense<0.000000e+00> : vector<8x8xf32>
    %796 = tpu.matmul %792, %780, %cst_302 {dimension_numbers = #tpu.dot_dimension_numbers<[1], [0], [0], [1], [0, 0, 1, 1], [], []>} : vector<8x2xf32>, vector<2x8xf32>, vector<8x8xf32> -> vector<8x8xf32>
    %c0_303 = arith.constant 0 : index
    %c24_304 = arith.constant 24 : index
    %797 = vector.load %arg9[%c0_303, %c24_304] : memref<32x32xf32, #tpu.memory_space<vmem>>, vector<32x8xf32>
    %cst_305 = arith.constant dense<0.000000e+00> : vector<8x8xf32>
    %798 = tpu.matmul %723, %797, %cst_305 {dimension_numbers = #tpu.dot_dimension_numbers<[1], [0], [0], [1], [0, 0, 1, 1], [], []>} : vector<8x32xf32>, vector<32x8xf32>, vector<8x8xf32> -> vector<8x8xf32>
    %c0_306 = arith.constant 0 : index
    %c24_307 = arith.constant 24 : index
    %799 = vector.load %arg10[%c0_306, %c24_307] : memref<32x32xf32, #tpu.memory_space<vmem>>, vector<32x8xf32>
    %cst_308 = arith.constant dense<0.000000e+00> : vector<2x8xf32>
    %800 = tpu.matmul %730, %799, %cst_308 {dimension_numbers = #tpu.dot_dimension_numbers<[1], [0], [0], [1], [0, 0, 1, 1], [], []>} : vector<2x32xf32>, vector<32x8xf32>, vector<2x8xf32> -> vector<2x8xf32>
    %c0_309 = arith.constant 0 : index
    %c24_310 = arith.constant 24 : index
    %801 = vector.load %arg11[%c0_309, %c24_310] : memref<32x32xf32, #tpu.memory_space<vmem>>, vector<32x8xf32>
    %cst_311 = arith.constant dense<0.000000e+00> : vector<2x8xf32>
    %802 = tpu.matmul %730, %801, %cst_311 {dimension_numbers = #tpu.dot_dimension_numbers<[1], [0], [0], [1], [0, 0, 1, 1], [], []>} : vector<2x32xf32>, vector<32x8xf32>, vector<2x8xf32> -> vector<2x8xf32>
    %803 = tpu.transpose %800, [1, 0] : vector<2x8xf32> -> vector<8x2xf32>
    %cst_312 = arith.constant dense<0.000000e+00> : vector<8x2xf32>
    %804 = tpu.matmul %798, %803, %cst_312 {dimension_numbers = #tpu.dot_dimension_numbers<[1], [0], [0], [1], [0, 0, 1, 1], [], []>} : vector<8x8xf32>, vector<8x2xf32>, vector<8x2xf32> -> vector<8x2xf32>
    %cst_313 = arith.constant dense<0xFF800000> : vector<8xf32>
    %805 = vector.multi_reduction <maximumf>, %804, %cst_313 [1] : vector<8x2xf32> to vector<8xf32>
    %806 = vector.shape_cast %805 : vector<8xf32> to vector<8x1xf32>
    %807 = vector.broadcast %806 : vector<8x1xf32> to vector<8x2xf32>
    %808 = arith.subf %804, %807 : vector<8x2xf32>
    %809 = math.exp %808 : vector<8x2xf32>
    %cst_314 = arith.constant dense<0.000000e+00> : vector<8xf32>
    %810 = vector.multi_reduction <add>, %809, %cst_314 [1] : vector<8x2xf32> to vector<8xf32>
    %811 = vector.shape_cast %810 : vector<8xf32> to vector<8x1xf32>
    %812 = tpu.reciprocal %811 {approx = true} : vector<8x1xf32> -> vector<8x1xf32>
    %813 = vector.broadcast %812 : vector<8x1xf32> to vector<8x2xf32>
    %814 = arith.mulf %809, %813 : vector<8x2xf32>
    %c1_315 = arith.constant 1 : index
    %c3_316 = arith.constant 3 : index
    %c0_317 = arith.constant 0 : index
    %c0_318 = arith.constant 0 : index
    %815 = vector.load %arg16[%c1_315, %c3_316, %c0_317, %c0_318] : memref<2x4x8x2xf32, #tpu.memory_space<vmem>>, vector<1x1x8x2xf32>
    %816 = vector.shape_cast %815 : vector<1x1x8x2xf32> to vector<8x2xf32>
    %817 = vector.shape_cast %814 : vector<8x2xf32> to vector<1x1x8x2xf32>
    tpu.vector_store %arg16[%c1_315, %c3_316, %c0_317, %c0_318], %817 {strides = array<i32>} : memref<2x4x8x2xf32, #tpu.memory_space<vmem>>, vector<1x1x8x2xf32>,
    %cst_319 = arith.constant dense<0.000000e+00> : vector<8x8xf32>
    %818 = tpu.matmul %814, %802, %cst_319 {dimension_numbers = #tpu.dot_dimension_numbers<[1], [0], [0], [1], [0, 0, 1, 1], [], []>} : vector<8x2xf32>, vector<2x8xf32>, vector<8x8xf32> -> vector<8x8xf32>
    %819 = tpu.concatenate %752, %774, %796, %818 in 1 : vector<8x8xf32>, vector<8x8xf32>, vector<8x8xf32>, vector<8x8xf32> -> vector<8x32xf32>
    %c0_320 = arith.constant 0 : index
    %c0_321 = arith.constant 0 : index
    %820 = vector.load %arg12[%c0_320, %c0_321] : memref<32x32xf32, #tpu.memory_space<vmem>>, vector<32x32xf32>
    %cst_322 = arith.constant dense<0.000000e+00> : vector<8x32xf32>
    %821 = tpu.matmul %819, %820, %cst_322 {dimension_numbers = #tpu.dot_dimension_numbers<[1], [0], [0], [1], [0, 0, 1, 1], [], []>} : vector<8x32xf32>, vector<32x32xf32>, vector<8x32xf32> -> vector<8x32xf32>
    %822 = vector.extract_strided_slice %821 {offsets = [0, 0], sizes = [1, 32], strides = [1, 1]} : vector<8x32xf32> to vector<1x32xf32>
    %cst_323 = arith.constant 0.000000e+00 : f32
    %823 = vector.broadcast %cst_323 : f32 to vector<1x32xf32>
    %824 = arith.maximumf %822, %823 : vector<1x32xf32>
    %825 = vector.extract_strided_slice %299 {offsets = [1, 0], sizes = [1, 32], strides = [1, 1]} : vector<2x32xf32> to vector<1x32xf32>
    %cst_324 = arith.constant 0.000000e+00 : f32
    %826 = vector.broadcast %cst_324 : f32 to vector<1x32xf32>
    %827 = arith.maximumf %825, %826 : vector<1x32xf32>
    %c0_325 = arith.constant 0 : index
    %c0_326 = arith.constant 0 : index
    %828 = vector.load %arg13[%c0_325, %c0_326] : memref<512x8xf32, #tpu.memory_space<vmem>>, vector<32x8xf32>
    %cst_327 = arith.constant dense<0.000000e+00> : vector<1x8xf32>
    %829 = tpu.matmul %824, %828, %cst_327 {dimension_numbers = #tpu.dot_dimension_numbers<[1], [0], [0], [1], [0, 0, 1, 1], [], []>} : vector<1x32xf32>, vector<32x8xf32>, vector<1x8xf32> -> vector<1x8xf32>
    %830 = arith.addf %510, %829 : vector<1x8xf32>
    %c32_328 = arith.constant 32 : index
    %c0_329 = arith.constant 0 : index
    %831 = vector.load %arg13[%c32_328, %c0_329] : memref<512x8xf32, #tpu.memory_space<vmem>>, vector<32x8xf32>
    %cst_330 = arith.constant dense<0.000000e+00> : vector<1x8xf32>
    %832 = tpu.matmul %827, %831, %cst_330 {dimension_numbers = #tpu.dot_dimension_numbers<[1], [0], [0], [1], [0, 0, 1, 1], [], []>} : vector<1x32xf32>, vector<32x8xf32>, vector<1x8xf32> -> vector<1x8xf32>
    %833 = arith.addf %830, %832 : vector<1x8xf32>
    %834 = vector.extract_strided_slice %821 {offsets = [1, 0], sizes = [1, 32], strides = [1, 1]} : vector<8x32xf32> to vector<1x32xf32>
    %cst_331 = arith.constant 0.000000e+00 : f32
    %835 = vector.broadcast %cst_331 : f32 to vector<1x32xf32>
    %836 = arith.maximumf %834, %835 : vector<1x32xf32>
    %837 = vector.extract_strided_slice %329 {offsets = [1, 0], sizes = [1, 32], strides = [1, 1]} : vector<2x32xf32> to vector<1x32xf32>
    %cst_332 = arith.constant 0.000000e+00 : f32
    %838 = vector.broadcast %cst_332 : f32 to vector<1x32xf32>
    %839 = arith.maximumf %837, %838 : vector<1x32xf32>
    %c64_333 = arith.constant 64 : index
    %c0_334 = arith.constant 0 : index
    %840 = vector.load %arg13[%c64_333, %c0_334] : memref<512x8xf32, #tpu.memory_space<vmem>>, vector<32x8xf32>
    %cst_335 = arith.constant dense<0.000000e+00> : vector<1x8xf32>
    %841 = tpu.matmul %836, %840, %cst_335 {dimension_numbers = #tpu.dot_dimension_numbers<[1], [0], [0], [1], [0, 0, 1, 1], [], []>} : vector<1x32xf32>, vector<32x8xf32>, vector<1x8xf32> -> vector<1x8xf32>
    %842 = arith.addf %833, %841 : vector<1x8xf32>
    %c96_336 = arith.constant 96 : index
    %c0_337 = arith.constant 0 : index
    %843 = vector.load %arg13[%c96_336, %c0_337] : memref<512x8xf32, #tpu.memory_space<vmem>>, vector<32x8xf32>
    %cst_338 = arith.constant dense<0.000000e+00> : vector<1x8xf32>
    %844 = tpu.matmul %839, %843, %cst_338 {dimension_numbers = #tpu.dot_dimension_numbers<[1], [0], [0], [1], [0, 0, 1, 1], [], []>} : vector<1x32xf32>, vector<32x8xf32>, vector<1x8xf32> -> vector<1x8xf32>
    %845 = arith.addf %842, %844 : vector<1x8xf32>
    %846 = vector.extract_strided_slice %821 {offsets = [2, 0], sizes = [1, 32], strides = [1, 1]} : vector<8x32xf32> to vector<1x32xf32>
    %cst_339 = arith.constant 0.000000e+00 : f32
    %847 = vector.broadcast %cst_339 : f32 to vector<1x32xf32>
    %848 = arith.maximumf %846, %847 : vector<1x32xf32>
    %849 = vector.extract_strided_slice %359 {offsets = [1, 0], sizes = [1, 32], strides = [1, 1]} : vector<2x32xf32> to vector<1x32xf32>
    %cst_340 = arith.constant 0.000000e+00 : f32
    %850 = vector.broadcast %cst_340 : f32 to vector<1x32xf32>
    %851 = arith.maximumf %849, %850 : vector<1x32xf32>
    %c128_341 = arith.constant 128 : index
    %c0_342 = arith.constant 0 : index
    %852 = vector.load %arg13[%c128_341, %c0_342] : memref<512x8xf32, #tpu.memory_space<vmem>>, vector<32x8xf32>
    %cst_343 = arith.constant dense<0.000000e+00> : vector<1x8xf32>
    %853 = tpu.matmul %848, %852, %cst_343 {dimension_numbers = #tpu.dot_dimension_numbers<[1], [0], [0], [1], [0, 0, 1, 1], [], []>} : vector<1x32xf32>, vector<32x8xf32>, vector<1x8xf32> -> vector<1x8xf32>
    %854 = arith.addf %845, %853 : vector<1x8xf32>
    %c160_344 = arith.constant 160 : index
    %c0_345 = arith.constant 0 : index
    %855 = vector.load %arg13[%c160_344, %c0_345] : memref<512x8xf32, #tpu.memory_space<vmem>>, vector<32x8xf32>
    %cst_346 = arith.constant dense<0.000000e+00> : vector<1x8xf32>
    %856 = tpu.matmul %851, %855, %cst_346 {dimension_numbers = #tpu.dot_dimension_numbers<[1], [0], [0], [1], [0, 0, 1, 1], [], []>} : vector<1x32xf32>, vector<32x8xf32>, vector<1x8xf32> -> vector<1x8xf32>
    %857 = arith.addf %854, %856 : vector<1x8xf32>
    %858 = vector.extract_strided_slice %821 {offsets = [3, 0], sizes = [1, 32], strides = [1, 1]} : vector<8x32xf32> to vector<1x32xf32>
    %cst_347 = arith.constant 0.000000e+00 : f32
    %859 = vector.broadcast %cst_347 : f32 to vector<1x32xf32>
    %860 = arith.maximumf %858, %859 : vector<1x32xf32>
    %861 = vector.extract_strided_slice %389 {offsets = [1, 0], sizes = [1, 32], strides = [1, 1]} : vector<2x32xf32> to vector<1x32xf32>
    %cst_348 = arith.constant 0.000000e+00 : f32
    %862 = vector.broadcast %cst_348 : f32 to vector<1x32xf32>
    %863 = arith.maximumf %861, %862 : vector<1x32xf32>
    %c192_349 = arith.constant 192 : index
    %c0_350 = arith.constant 0 : index
    %864 = vector.load %arg13[%c192_349, %c0_350] : memref<512x8xf32, #tpu.memory_space<vmem>>, vector<32x8xf32>
    %cst_351 = arith.constant dense<0.000000e+00> : vector<1x8xf32>
    %865 = tpu.matmul %860, %864, %cst_351 {dimension_numbers = #tpu.dot_dimension_numbers<[1], [0], [0], [1], [0, 0, 1, 1], [], []>} : vector<1x32xf32>, vector<32x8xf32>, vector<1x8xf32> -> vector<1x8xf32>
    %866 = arith.addf %857, %865 : vector<1x8xf32>
    %c224_352 = arith.constant 224 : index
    %c0_353 = arith.constant 0 : index
    %867 = vector.load %arg13[%c224_352, %c0_353] : memref<512x8xf32, #tpu.memory_space<vmem>>, vector<32x8xf32>
    %cst_354 = arith.constant dense<0.000000e+00> : vector<1x8xf32>
    %868 = tpu.matmul %863, %867, %cst_354 {dimension_numbers = #tpu.dot_dimension_numbers<[1], [0], [0], [1], [0, 0, 1, 1], [], []>} : vector<1x32xf32>, vector<32x8xf32>, vector<1x8xf32> -> vector<1x8xf32>
    %869 = arith.addf %866, %868 : vector<1x8xf32>
    %870 = vector.extract_strided_slice %821 {offsets = [4, 0], sizes = [1, 32], strides = [1, 1]} : vector<8x32xf32> to vector<1x32xf32>
    %cst_355 = arith.constant 0.000000e+00 : f32
    %871 = vector.broadcast %cst_355 : f32 to vector<1x32xf32>
    %872 = arith.maximumf %870, %871 : vector<1x32xf32>
    %873 = vector.extract_strided_slice %419 {offsets = [1, 0], sizes = [1, 32], strides = [1, 1]} : vector<2x32xf32> to vector<1x32xf32>
    %cst_356 = arith.constant 0.000000e+00 : f32
    %874 = vector.broadcast %cst_356 : f32 to vector<1x32xf32>
    %875 = arith.maximumf %873, %874 : vector<1x32xf32>
    %c256_357 = arith.constant 256 : index
    %c0_358 = arith.constant 0 : index
    %876 = vector.load %arg13[%c256_357, %c0_358] : memref<512x8xf32, #tpu.memory_space<vmem>>, vector<32x8xf32>
    %cst_359 = arith.constant dense<0.000000e+00> : vector<1x8xf32>
    %877 = tpu.matmul %872, %876, %cst_359 {dimension_numbers = #tpu.dot_dimension_numbers<[1], [0], [0], [1], [0, 0, 1, 1], [], []>} : vector<1x32xf32>, vector<32x8xf32>, vector<1x8xf32> -> vector<1x8xf32>
    %878 = arith.addf %869, %877 : vector<1x8xf32>
    %c288_360 = arith.constant 288 : index
    %c0_361 = arith.constant 0 : index
    %879 = vector.load %arg13[%c288_360, %c0_361] : memref<512x8xf32, #tpu.memory_space<vmem>>, vector<32x8xf32>
    %cst_362 = arith.constant dense<0.000000e+00> : vector<1x8xf32>
    %880 = tpu.matmul %875, %879, %cst_362 {dimension_numbers = #tpu.dot_dimension_numbers<[1], [0], [0], [1], [0, 0, 1, 1], [], []>} : vector<1x32xf32>, vector<32x8xf32>, vector<1x8xf32> -> vector<1x8xf32>
    %881 = arith.addf %878, %880 : vector<1x8xf32>
    %882 = vector.extract_strided_slice %821 {offsets = [5, 0], sizes = [1, 32], strides = [1, 1]} : vector<8x32xf32> to vector<1x32xf32>
    %cst_363 = arith.constant 0.000000e+00 : f32
    %883 = vector.broadcast %cst_363 : f32 to vector<1x32xf32>
    %884 = arith.maximumf %882, %883 : vector<1x32xf32>
    %885 = vector.extract_strided_slice %449 {offsets = [1, 0], sizes = [1, 32], strides = [1, 1]} : vector<2x32xf32> to vector<1x32xf32>
    %cst_364 = arith.constant 0.000000e+00 : f32
    %886 = vector.broadcast %cst_364 : f32 to vector<1x32xf32>
    %887 = arith.maximumf %885, %886 : vector<1x32xf32>
    %c320_365 = arith.constant 320 : index
    %c0_366 = arith.constant 0 : index
    %888 = vector.load %arg13[%c320_365, %c0_366] : memref<512x8xf32, #tpu.memory_space<vmem>>, vector<32x8xf32>
    %cst_367 = arith.constant dense<0.000000e+00> : vector<1x8xf32>
    %889 = tpu.matmul %884, %888, %cst_367 {dimension_numbers = #tpu.dot_dimension_numbers<[1], [0], [0], [1], [0, 0, 1, 1], [], []>} : vector<1x32xf32>, vector<32x8xf32>, vector<1x8xf32> -> vector<1x8xf32>
    %890 = arith.addf %881, %889 : vector<1x8xf32>
    %c352_368 = arith.constant 352 : index
    %c0_369 = arith.constant 0 : index
    %891 = vector.load %arg13[%c352_368, %c0_369] : memref<512x8xf32, #tpu.memory_space<vmem>>, vector<32x8xf32>
    %cst_370 = arith.constant dense<0.000000e+00> : vector<1x8xf32>
    %892 = tpu.matmul %887, %891, %cst_370 {dimension_numbers = #tpu.dot_dimension_numbers<[1], [0], [0], [1], [0, 0, 1, 1], [], []>} : vector<1x32xf32>, vector<32x8xf32>, vector<1x8xf32> -> vector<1x8xf32>
    %893 = arith.addf %890, %892 : vector<1x8xf32>
    %894 = vector.extract_strided_slice %821 {offsets = [6, 0], sizes = [1, 32], strides = [1, 1]} : vector<8x32xf32> to vector<1x32xf32>
    %cst_371 = arith.constant 0.000000e+00 : f32
    %895 = vector.broadcast %cst_371 : f32 to vector<1x32xf32>
    %896 = arith.maximumf %894, %895 : vector<1x32xf32>
    %897 = vector.extract_strided_slice %479 {offsets = [1, 0], sizes = [1, 32], strides = [1, 1]} : vector<2x32xf32> to vector<1x32xf32>
    %cst_372 = arith.constant 0.000000e+00 : f32
    %898 = vector.broadcast %cst_372 : f32 to vector<1x32xf32>
    %899 = arith.maximumf %897, %898 : vector<1x32xf32>
    %c384_373 = arith.constant 384 : index
    %c0_374 = arith.constant 0 : index
    %900 = vector.load %arg13[%c384_373, %c0_374] : memref<512x8xf32, #tpu.memory_space<vmem>>, vector<32x8xf32>
    %cst_375 = arith.constant dense<0.000000e+00> : vector<1x8xf32>
    %901 = tpu.matmul %896, %900, %cst_375 {dimension_numbers = #tpu.dot_dimension_numbers<[1], [0], [0], [1], [0, 0, 1, 1], [], []>} : vector<1x32xf32>, vector<32x8xf32>, vector<1x8xf32> -> vector<1x8xf32>
    %902 = arith.addf %893, %901 : vector<1x8xf32>
    %c416_376 = arith.constant 416 : index
    %c0_377 = arith.constant 0 : index
    %903 = vector.load %arg13[%c416_376, %c0_377] : memref<512x8xf32, #tpu.memory_space<vmem>>, vector<32x8xf32>
    %cst_378 = arith.constant dense<0.000000e+00> : vector<1x8xf32>
    %904 = tpu.matmul %899, %903, %cst_378 {dimension_numbers = #tpu.dot_dimension_numbers<[1], [0], [0], [1], [0, 0, 1, 1], [], []>} : vector<1x32xf32>, vector<32x8xf32>, vector<1x8xf32> -> vector<1x8xf32>
    %905 = arith.addf %902, %904 : vector<1x8xf32>
    %906 = vector.extract_strided_slice %821 {offsets = [7, 0], sizes = [1, 32], strides = [1, 1]} : vector<8x32xf32> to vector<1x32xf32>
    %cst_379 = arith.constant 0.000000e+00 : f32
    %907 = vector.broadcast %cst_379 : f32 to vector<1x32xf32>
    %908 = arith.maximumf %906, %907 : vector<1x32xf32>
    %909 = vector.extract_strided_slice %509 {offsets = [1, 0], sizes = [1, 32], strides = [1, 1]} : vector<2x32xf32> to vector<1x32xf32>
    %cst_380 = arith.constant 0.000000e+00 : f32
    %910 = vector.broadcast %cst_380 : f32 to vector<1x32xf32>
    %911 = arith.maximumf %909, %910 : vector<1x32xf32>
    %c448_381 = arith.constant 448 : index
    %c0_382 = arith.constant 0 : index
    %912 = vector.load %arg13[%c448_381, %c0_382] : memref<512x8xf32, #tpu.memory_space<vmem>>, vector<32x8xf32>
    %cst_383 = arith.constant dense<0.000000e+00> : vector<1x8xf32>
    %913 = tpu.matmul %908, %912, %cst_383 {dimension_numbers = #tpu.dot_dimension_numbers<[1], [0], [0], [1], [0, 0, 1, 1], [], []>} : vector<1x32xf32>, vector<32x8xf32>, vector<1x8xf32> -> vector<1x8xf32>
    %914 = arith.addf %905, %913 : vector<1x8xf32>
    %c480_384 = arith.constant 480 : index
    %c0_385 = arith.constant 0 : index
    %915 = vector.load %arg13[%c480_384, %c0_385] : memref<512x8xf32, #tpu.memory_space<vmem>>, vector<32x8xf32>
    %cst_386 = arith.constant dense<0.000000e+00> : vector<1x8xf32>
    %916 = tpu.matmul %911, %915, %cst_386 {dimension_numbers = #tpu.dot_dimension_numbers<[1], [0], [0], [1], [0, 0, 1, 1], [], []>} : vector<1x32xf32>, vector<32x8xf32>, vector<1x8xf32> -> vector<1x8xf32>
    %917 = arith.addf %914, %916 : vector<1x8xf32>
    %c1_387 = arith.constant 1 : index
    %c0_388 = arith.constant 0 : index
    %918 = vector.load %arg15[%c1_387, %c0_388] : memref<2x8xf32, #tpu.memory_space<vmem>>, vector<1x8xf32>
    tpu.vector_store %arg15[%c1_387, %c0_388], %917 {strides = array<i32>} : memref<2x8xf32, #tpu.memory_space<vmem>>, vector<1x8xf32>,
    return
  }
}

</mosaic_0001>

<llo_original>
// kernel: lstm_dec_forward.1
$region0: #{lstm_dec_forward.1}
  #allocation0 [shape = 'u32[]', space=smem, size = 0x4, offset = 0x4, fixed_abs, tag = 'smem constant byte address 0x4 - core index']
  #allocation1 [shape = 'u32[72,128]{1,0:T(1,128)}', space=vmem, size = 0x9000, scoped, tag = 'internal scratch']
  %s0 = inlined_call_operand.vmem [shape: f32[8,2,16], index: 0, kind: input, shape index: {}]
  %s1 = inlined_call_operand.vmem [shape: f32[2,2,32], index: 1, kind: input, shape index: {}]
  %s2 = inlined_call_operand.vmem [shape: f32[2,2,32], index: 2, kind: input, shape index: {}]
  %s3 = inlined_call_operand.vmem [shape: f32[16,128], index: 3, kind: input, shape index: {}]
  %s4 = inlined_call_operand.vmem [shape: f32[32,128], index: 4, kind: input, shape index: {}]
  %s5 = inlined_call_operand.vmem [shape: f32[1,128], index: 5, kind: input, shape index: {}]
  %s6 = inlined_call_operand.vmem [shape: f32[32,128], index: 6, kind: input, shape index: {}]
  %s7 = inlined_call_operand.vmem [shape: f32[32,128], index: 7, kind: input, shape index: {}]
  %s8 = inlined_call_operand.vmem [shape: f32[1,128], index: 8, kind: input, shape index: {}]
  %s9 = inlined_call_operand.vmem [shape: f32[32,32], index: 9, kind: input, shape index: {}]
  %s10 = inlined_call_operand.vmem [shape: f32[32,32], index: 10, kind: input, shape index: {}]
  %s11 = inlined_call_operand.vmem [shape: f32[32,32], index: 11, kind: input, shape index: {}]
  %s12 = inlined_call_operand.vmem [shape: f32[32,32], index: 12, kind: input, shape index: {}]
  %s13 = inlined_call_operand.vmem [shape: f32[512,8], index: 13, kind: input, shape index: {}]
  %s14 = inlined_call_operand.vmem [shape: f32[1,8], index: 14, kind: input, shape index: {}]
  %s15 = inlined_call_operand.hbm [shape: f32[2,8], index: 15, kind: output, shape index: {0}]
  %s16 = inlined_call_operand.vmem [shape: f32[2,4,8,2], index: 16, kind: output, shape index: {1}]
  %17 = xla_tuple %s15, %s16
  %s18 = sld [smem:[#allocation0]]
  $region78: #{lstm_dec_forward.1} parent=0
    _
  %s20 = ssub.s32 1, %s18
  %s21 = scalar_select 0, %s20, %s18
  $region1: #{lstm_dec_forward.1} parent=0
    #allocation2 [shape = 'u8[1024]{0}', space=vmem, size = 0x400, scoped, tag = 'output window, operand 0, single buffered']
    #allocation3 [shape = 's32[1]{0}', space=sflag, size = 0x4, scoped, tag = 'scoped memory for lstm_dec_forward.1']
    %22 = vsyncpa [#allocation3], 0
    // Predicated region
    $region2: #{lstm_dec_forward.1} parent=1 // pred_check
      _
    $region3: #{lstm_dec_forward.1} parent=1 // pred_check_branch
      %24 = sbr.rel (0) target = $region5
    $region4: #{lstm_dec_forward.1} parent=1 // pred_region
      _
    $region5: #{lstm_dec_forward.1} parent=1 // pred_fallthru
      _
    // Predicated region
    $region6: #{lstm_dec_forward.1} parent=1 // pred_check
      _
    $region7: #{lstm_dec_forward.1} parent=1 // pred_check_branch
      %26 = sbr.rel (0) target = $region9
    $region8: #{lstm_dec_forward.1} parent=1 // pred_region
      _
    $region9: #{lstm_dec_forward.1} parent=1 // pred_fallthru
      _
    // Predicated region
    $region10: #{lstm_dec_forward.1} parent=1 // pred_check
      _
    $region11: #{lstm_dec_forward.1} parent=1 // pred_check_branch
      %28 = sbr.rel (0) target = $region13
    $region12: #{lstm_dec_forward.1} parent=1 // pred_region
      _
    $region13: #{lstm_dec_forward.1} parent=1 // pred_fallthru
      _
    // Predicated region
    $region14: #{lstm_dec_forward.1} parent=1 // pred_check
      _
    $region15: #{lstm_dec_forward.1} parent=1 // pred_check_branch
      %30 = sbr.rel (0) target = $region17
    $region16: #{lstm_dec_forward.1} parent=1 // pred_region
      _
    $region17: #{lstm_dec_forward.1} parent=1 // pred_fallthru
      _
    // Predicated region
    $region18: #{lstm_dec_forward.1} parent=1 // pred_check
      _
    $region19: #{lstm_dec_forward.1} parent=1 // pred_check_branch
      %32 = sbr.rel (0) target = $region21
    $region20: #{lstm_dec_forward.1} parent=1 // pred_region
      _
    $region21: #{lstm_dec_forward.1} parent=1 // pred_fallthru
      _
    // Predicated region
    $region22: #{lstm_dec_forward.1} parent=1 // pred_check
      _
    $region23: #{lstm_dec_forward.1} parent=1 // pred_check_branch
      %34 = sbr.rel (0) target = $region25
    $region24: #{lstm_dec_forward.1} parent=1 // pred_region
      _
    $region25: #{lstm_dec_forward.1} parent=1 // pred_fallthru
      _
    // Predicated region
    $region26: #{lstm_dec_forward.1} parent=1 // pred_check
      _
    $region27: #{lstm_dec_forward.1} parent=1 // pred_check_branch
      %36 = sbr.rel (0) target = $region29
    $region28: #{lstm_dec_forward.1} parent=1 // pred_region
      _
    $region29: #{lstm_dec_forward.1} parent=1 // pred_fallthru
      _
    // Predicated region
    $region30: #{lstm_dec_forward.1} parent=1 // pred_check
      _
    $region31: #{lstm_dec_forward.1} parent=1 // pred_check_branch
      %38 = sbr.rel (0) target = $region33
    $region32: #{lstm_dec_forward.1} parent=1 // pred_region
      _
    $region33: #{lstm_dec_forward.1} parent=1 // pred_fallthru
      _
    // Predicated region
    $region34: #{lstm_dec_forward.1} parent=1 // pred_check
      _
    $region35: #{lstm_dec_forward.1} parent=1 // pred_check_branch
      %40 = sbr.rel (0) target = $region37
    $region36: #{lstm_dec_forward.1} parent=1 // pred_region
      _
    $region37: #{lstm_dec_forward.1} parent=1 // pred_fallthru
      _
    // Predicated region
    $region38: #{lstm_dec_forward.1} parent=1 // pred_check
      _
    $region39: #{lstm_dec_forward.1} parent=1 // pred_check_branch
      %42 = sbr.rel (0) target = $region41
    $region40: #{lstm_dec_forward.1} parent=1 // pred_region
      _
    $region41: #{lstm_dec_forward.1} parent=1 // pred_fallthru
      _
    // Predicated region
    $region42: #{lstm_dec_forward.1} parent=1 // pred_check
      _
    $region43: #{lstm_dec_forward.1} parent=1 // pred_check_branch
      %44 = sbr.rel (0) target = $region45
    $region44: #{lstm_dec_forward.1} parent=1 // pred_region
      _
    $region45: #{lstm_dec_forward.1} parent=1 // pred_fallthru
      _
    // Predicated region
    $region46: #{lstm_dec_forward.1} parent=1 // pred_check
      _
    $region47: #{lstm_dec_forward.1} parent=1 // pred_check_branch
      %46 = sbr.rel (0) target = $region49
    $region48: #{lstm_dec_forward.1} parent=1 // pred_region
      _
    $region49: #{lstm_dec_forward.1} parent=1 // pred_fallthru
      _
    // Predicated region
    $region50: #{lstm_dec_forward.1} parent=1 // pred_check
      _
    $region51: #{lstm_dec_forward.1} parent=1 // pred_check_branch
      %48 = sbr.rel (0) target = $region53
    $region52: #{lstm_dec_forward.1} parent=1 // pred_region
      _
    $region53: #{lstm_dec_forward.1} parent=1 // pred_fallthru
      _
    // Predicated region
    $region54: #{lstm_dec_forward.1} parent=1 // pred_check
      _
    $region55: #{lstm_dec_forward.1} parent=1 // pred_check_branch
      %50 = sbr.rel (0) target = $region57
    $region56: #{lstm_dec_forward.1} parent=1 // pred_region
      _
    $region57: #{lstm_dec_forward.1} parent=1 // pred_fallthru
      _
    // Predicated region
    $region58: #{lstm_dec_forward.1} parent=1 // pred_check
      _
    $region59: #{lstm_dec_forward.1} parent=1 // pred_check_branch
      %52 = sbr.rel (0) target = $region61
    $region60: #{lstm_dec_forward.1} parent=1 // pred_region
      _
    $region61: #{lstm_dec_forward.1} parent=1 // pred_fallthru
      _
    %v53 = vld [vmem:[%s0] sm:$0x3]
    %s54 = scalar_lea.vmem %s0, 2
    %v55 = vld [vmem:[%s54] sm:$0x3]
    %s56 = scalar_lea.vmem %s0, 4
    %v57 = vld [vmem:[%s56] sm:$0x3]
    %s58 = scalar_lea.vmem %s0, 6
    %v59 = vld [vmem:[%s58] sm:$0x3]
    %s60 = scalar_lea.vmem %s0, 8
    %v61 = vld [vmem:[%s60] sm:$0x3]
    %s62 = scalar_lea.vmem %s0, 10
    %v63 = vld [vmem:[%s62] sm:$0x3]
    %s64 = scalar_lea.vmem %s0, 12
    %v65 = vld [vmem:[%s64] sm:$0x3]
    %s66 = scalar_lea.vmem %s0, 14
    %v67 = vld [vmem:[%s66] sm:$0x3]
    %v68 = vld [vmem:[%s3] sm:$0xff]
    %v69 = vld [vmem:[%s3 + $0x8] sm:$0xff]
    %v70 = vld [vmem:[%s4] sm:$0xff]
    %v71 = vld [vmem:[%s4 + $0x8] sm:$0xff]
    %v72 = vld [vmem:[%s4 + $0x10] sm:$0xff]
    %v73 = vld [vmem:[%s4 + $0x18] sm:$0xff]
    %v74 = vld [vmem:[%s5] sm:$0x1]
    %v75 = vld [vmem:[%s1] sm:$0x3]
    %v76 = vld [vmem:[%s2] sm:$0x3]
    %vm77 = vcmask 261120
    %v79 = vsel %vm77, %v75, 0
    %81 = vmatpush.msra.mxu0 0.0
    %82 = vmatpush.msra.mxu0 0.0
    %83 = vmatpush.msra.mxu0 0.0
    %84 = vmatpush.msra.mxu0 0.0
    %85 = vmatpush.msra.mxu0 0.0
    %86 = vmatpush.msra.mxu0 0.0
    %87 = vmatpush.msra.mxu0 0.0
    %88 = vmatpush.msra.mxu0 0.0
    %89 = vmatpush.msra.mxu0 0.0
    %90 = vmatpush.msra.mxu0 0.0
    %91 = vmatpush.msra.mxu0 0.0
    %92 = vmatpush.msra.mxu0 0.0
    %93 = vmatpush.msra.mxu0 %v73
    %94 = vmatpush.msra.mxu0 %v72
    %95 = vmatpush.msra.mxu0 %v71
    %96 = vmatpush.msra.mxu0 %v70
    %97 = vmatmul.f32.gmra.mxu0 %v79
    %v98 = vpop.f32.mrf.mxu0
    %v99 = vadd.f32 0.0, %v98
    %100 = vdwg.mxu0
    %vm101 = vcmask 130048
    %v103 = vsel %vm101, %v53, 0
    %105 = vmatpush.msra.mxu0 0.0
    %106 = vmatpush.msra.mxu0 0.0
    %107 = vmatpush.msra.mxu0 0.0
    %108 = vmatpush.msra.mxu0 0.0
    %109 = vmatpush.msra.mxu0 0.0
    %110 = vmatpush.msra.mxu0 0.0
    %111 = vmatpush.msra.mxu0 0.0
    %112 = vmatpush.msra.mxu0 0.0
    %113 = vmatpush.msra.mxu0 0.0
    %114 = vmatpush.msra.mxu0 0.0
    %115 = vmatpush.msra.mxu0 0.0
    %116 = vmatpush.msra.mxu0 0.0
    %117 = vmatpush.msra.mxu0 0.0
    %118 = vmatpush.msra.mxu0 0.0
    %119 = vmatpush.msra.mxu0 %v69
    %120 = vmatpush.msra.mxu0 %v68
    %121 = vmatmul.f32.gmra.mxu0 %v103
    %v122 = vpop.f32.mrf.mxu0
    %v123 = vadd.f32 %v99, %v122
    %124 = vdwg.mxu0
    %v126 = vperm.slane %v74, 0
    %v128 = vadd.f32 %v123, %v126
    %v129 = vxor.u32 %v128, 2147483648
    %v130 = vmul.f32 %v129, 1.442695
    %v131 = vpow.pop %v130
    %v132 = vadd.f32 %v131, 1.0
    %v133 = vrcp.pop %v132
    %v134 = vmul.f32 %v132, %v133
    %v135 = vsub.f32 1.0, %v134
    %v136 = vmul.f32 %v133, %v135
    %v137 = vadd.f32 %v133, %v136
    %vm138 = vweird.f32 %v132
    %vm139 = vweird.f32 %v133
    %vm140 = vmor %vm138, %vm139
    %v141 = vsel %vm140, %v133, %v137
    %v142 = vand.u32 2147483647, %v132
    %vm143 = vcmp.eq.f32.partialorder %v142, 8.507059e+37
    %v144 = vand.u32 %v132, 2147483648
    %v145 = vor.u32 1.1754944e-38, %v144
    %v146 = vsel %vm143, %v145, %v141
    %v147 = vmul.f32 1.0, %v146
    %v148 = vtanh.pop %v128
    %150 = vrot.lane.b32.xlu0 %v76, 32
    %v151 = vpop.permute.xlu0 %150
    %v153 = vmul.f32 %v147, %v151
    %155 = vrot.lane.b32.xlu0 %v148, 64
    %v156 = vpop.permute.xlu0 %155
    %v158 = vmul.f32 %v147, %v156
    %160 = vrot.lane.b32.xlu0 %v158, 32
    %v161 = vpop.permute.xlu0 %160
    %v163 = vadd.f32 %v153, %v161
    %v164 = vtanh.pop %v163
    %166 = vrot.lane.b32.xlu0 %v164, 64
    %v167 = vpop.permute.xlu0 %166
    %v169 = vmul.f32 %v147, %v167
    %171 = vrot.lane.b32.xlu0 %v169, 32
    %v172 = vpop.permute.xlu0 %171
    %v173 = vsel %vm77, %v172, 0
    %175 = vmatpush.msra.mxu0 0.0
    %176 = vmatpush.msra.mxu0 0.0
    %177 = vmatpush.msra.mxu0 0.0
    %178 = vmatpush.msra.mxu0 0.0
    %179 = vmatpush.msra.mxu0 0.0
    %180 = vmatpush.msra.mxu0 0.0
    %181 = vmatpush.msra.mxu0 0.0
    %182 = vmatpush.msra.mxu0 0.0
    %183 = vmatpush.msra.mxu0 0.0
    %184 = vmatpush.msra.mxu0 0.0
    %185 = vmatpush.msra.mxu0 0.0
    %186 = vmatpush.msra.mxu0 0.0
    %187 = vmatpush.msra.mxu0 %v73
    %188 = vmatpush.msra.mxu0 %v72
    %189 = vmatpush.msra.mxu0 %v71
    %190 = vmatpush.msra.mxu0 %v70
    %191 = vmatmul.f32.gmra.mxu0 %v173
    %v192 = vpop.f32.mrf.mxu0
    %v193 = vadd.f32 0.0, %v192
    %194 = vdwg.mxu0
    %v196 = vsel %vm101, %v55, 0
    %198 = vmatpush.msra.mxu0 0.0
    %199 = vmatpush.msra.mxu0 0.0
    %200 = vmatpush.msra.mxu0 0.0
    %201 = vmatpush.msra.mxu0 0.0
    %202 = vmatpush.msra.mxu0 0.0
    %203 = vmatpush.msra.mxu0 0.0
    %204 = vmatpush.msra.mxu0 0.0
    %205 = vmatpush.msra.mxu0 0.0
    %206 = vmatpush.msra.mxu0 0.0
    %207 = vmatpush.msra.mxu0 0.0
    %208 = vmatpush.msra.mxu0 0.0
    %209 = vmatpush.msra.mxu0 0.0
    %210 = vmatpush.msra.mxu0 0.0
    %211 = vmatpush.msra.mxu0 0.0
    %212 = vmatpush.msra.mxu0 %v69
    %213 = vmatpush.msra.mxu0 %v68
    %214 = vmatmul.f32.gmra.mxu0 %v196
    %v215 = vpop.f32.mrf.mxu0
    %v216 = vadd.f32 %v193, %v215
    %217 = vdwg.mxu0
    %v218 = vadd.f32 %v216, %v126
    %v219 = vxor.u32 %v218, 2147483648
    %v220 = vmul.f32 %v219, 1.442695
    %v221 = vpow.pop %v220
    %v222 = vadd.f32 %v221, 1.0
    %v223 = vrcp.pop %v222
    %v224 = vmul.f32 %v222, %v223
    %v225 = vsub.f32 1.0, %v224
    %v226 = vmul.f32 %v223, %v225
    %v227 = vadd.f32 %v223, %v226
    %vm228 = vweird.f32 %v222
    %vm229 = vweird.f32 %v223
    %vm230 = vmor %vm228, %vm229
    %v231 = vsel %vm230, %v223, %v227
    %v232 = vand.u32 2147483647, %v222
    %vm233 = vcmp.eq.f32.partialorder %v232, 8.507059e+37
    %v234 = vand.u32 %v222, 2147483648
    %v235 = vor.u32 1.1754944e-38, %v234
    %v236 = vsel %vm233, %v235, %v231
    %v237 = vmul.f32 1.0, %v236
    %v238 = vtanh.pop %v218
    %v239 = vmul.f32 %v237, %v163
    %241 = vrot.lane.b32.xlu0 %v238, 64
    %v242 = vpop.permute.xlu0 %241
    %v244 = vmul.f32 %v237, %v242
    %246 = vrot.lane.b32.xlu0 %v244, 32
    %v247 = vpop.permute.xlu0 %246
    %v249 = vadd.f32 %v239, %v247
    %v250 = vtanh.pop %v249
    %252 = vrot.lane.b32.xlu0 %v250, 64
    %v253 = vpop.permute.xlu0 %252
    %v255 = vmul.f32 %v237, %v253
    %257 = vrot.lane.b32.xlu0 %v255, 32
    %v258 = vpop.permute.xlu0 %257
    %v259 = vsel %vm77, %v258, 0
    %261 = vmatpush.msra.mxu0 0.0
    %262 = vmatpush.msra.mxu0 0.0
    %263 = vmatpush.msra.mxu0 0.0
    %264 = vmatpush.msra.mxu0 0.0
    %265 = vmatpush.msra.mxu0 0.0
    %266 = vmatpush.msra.mxu0 0.0
    %267 = vmatpush.msra.mxu0 0.0
    %268 = vmatpush.msra.mxu0 0.0
    %269 = vmatpush.msra.mxu0 0.0
    %270 = vmatpush.msra.mxu0 0.0
    %271 = vmatpush.msra.mxu0 0.0
    %272 = vmatpush.msra.mxu0 0.0
    %273 = vmatpush.msra.mxu0 %v73
    %274 = vmatpush.msra.mxu0 %v72
    %275 = vmatpush.msra.mxu0 %v71
    %276 = vmatpush.msra.mxu0 %v70
    %277 = vmatmul.f32.gmra.mxu0 %v259
    %v278 = vpop.f32.mrf.mxu0
    %v279 = vadd.f32 0.0, %v278
    %280 = vdwg.mxu0
    %v282 = vsel %vm101, %v57, 0
    %284 = vmatpush.msra.mxu0 0.0
    %285 = vmatpush.msra.mxu0 0.0
    %286 = vmatpush.msra.mxu0 0.0
    %287 = vmatpush.msra.mxu0 0.0
    %288 = vmatpush.msra.mxu0 0.0
    %289 = vmatpush.msra.mxu0 0.0
    %290 = vmatpush.msra.mxu0 0.0
    %291 = vmatpush.msra.mxu0 0.0
    %292 = vmatpush.msra.mxu0 0.0
    %293 = vmatpush.msra.mxu0 0.0
    %294 = vmatpush.msra.mxu0 0.0
    %295 = vmatpush.msra.mxu0 0.0
    %296 = vmatpush.msra.mxu0 0.0
    %297 = vmatpush.msra.mxu0 0.0
    %298 = vmatpush.msra.mxu0 %v69
    %299 = vmatpush.msra.mxu0 %v68
    %300 = vmatmul.f32.gmra.mxu0 %v282
    %v301 = vpop.f32.mrf.mxu0
    %v302 = vadd.f32 %v279, %v301
    %303 = vdwg.mxu0
    %v304 = vadd.f32 %v302, %v126
    %v305 = vxor.u32 %v304, 2147483648
    %v306 = vmul.f32 %v305, 1.442695
    %v307 = vpow.pop %v306
    %v308 = vadd.f32 %v307, 1.0
    %v309 = vrcp.pop %v308
    %v310 = vmul.f32 %v308, %v309
    %v311 = vsub.f32 1.0, %v310
    %v312 = vmul.f32 %v309, %v311
    %v313 = vadd.f32 %v309, %v312
    %vm314 = vweird.f32 %v308
    %vm315 = vweird.f32 %v309
    %vm316 = vmor %vm314, %vm315
    %v317 = vsel %vm316, %v309, %v313
    %v318 = vand.u32 2147483647, %v308
    %vm319 = vcmp.eq.f32.partialorder %v318, 8.507059e+37
    %v320 = vand.u32 %v308, 2147483648
    %v321 = vor.u32 1.1754944e-38, %v320
    %v322 = vsel %vm319, %v321, %v317
    %v323 = vmul.f32 1.0, %v322
    %v324 = vtanh.pop %v304
    %v325 = vmul.f32 %v323, %v249
    %327 = vrot.lane.b32.xlu0 %v324, 64
    %v328 = vpop.permute.xlu0 %327
    %v330 = vmul.f32 %v323, %v328
    %332 = vrot.lane.b32.xlu0 %v330, 32
    %v333 = vpop.permute.xlu0 %332
    %v335 = vadd.f32 %v325, %v333
    %v336 = vtanh.pop %v335
    %338 = vrot.lane.b32.xlu0 %v336, 64
    %v339 = vpop.permute.xlu0 %338
    %v341 = vmul.f32 %v323, %v339
    %343 = vrot.lane.b32.xlu0 %v341, 32
    %v344 = vpop.permute.xlu0 %343
    %v345 = vsel %vm77, %v344, 0
    %347 = vmatpush.msra.mxu0 0.0
    %348 = vmatpush.msra.mxu0 0.0
    %349 = vmatpush.msra.mxu0 0.0
    %350 = vmatpush.msra.mxu0 0.0
    %351 = vmatpush.msra.mxu0 0.0
    %352 = vmatpush.msra.mxu0 0.0
    %353 = vmatpush.msra.mxu0 0.0
    %354 = vmatpush.msra.mxu0 0.0
    %355 = vmatpush.msra.mxu0 0.0
    %356 = vmatpush.msra.mxu0 0.0
    %357 = vmatpush.msra.mxu0 0.0
    %358 = vmatpush.msra.mxu0 0.0
    %359 = vmatpush.msra.mxu0 %v73
    %360 = vmatpush.msra.mxu0 %v72
    %361 = vmatpush.msra.mxu0 %v71
    %362 = vmatpush.msra.mxu0 %v70
    %363 = vmatmul.f32.gmra.mxu0 %v345
    %v364 = vpop.f32.mrf.mxu0
    %v365 = vadd.f32 0.0, %v364
    %366 = vdwg.mxu0
    %v368 = vsel %vm101, %v59, 0
    %370 = vmatpush.msra.mxu0 0.0
    %371 = vmatpush.msra.mxu0 0.0
    %372 = vmatpush.msra.mxu0 0.0
    %373 = vmatpush.msra.mxu0 0.0
    %374 = vmatpush.msra.mxu0 0.0
    %375 = vmatpush.msra.mxu0 0.0
    %376 = vmatpush.msra.mxu0 0.0
    %377 = vmatpush.msra.mxu0 0.0
    %378 = vmatpush.msra.mxu0 0.0
    %379 = vmatpush.msra.mxu0 0.0
    %380 = vmatpush.msra.mxu0 0.0
    %381 = vmatpush.msra.mxu0 0.0
    %382 = vmatpush.msra.mxu0 0.0
    %383 = vmatpush.msra.mxu0 0.0
    %384 = vmatpush.msra.mxu0 %v69
    %385 = vmatpush.msra.mxu0 %v68
    %386 = vmatmul.f32.gmra.mxu0 %v368
    %v387 = vpop.f32.mrf.mxu0
    %v388 = vadd.f32 %v365, %v387
    %389 = vdwg.mxu0
    %v390 = vadd.f32 %v388, %v126
    %v391 = vxor.u32 %v390, 2147483648
    %v392 = vmul.f32 %v391, 1.442695
    %v393 = vpow.pop %v392
    %v394 = vadd.f32 %v393, 1.0
    %v395 = vrcp.pop %v394
    %v396 = vmul.f32 %v394, %v395
    %v397 = vsub.f32 1.0, %v396
    %v398 = vmul.f32 %v395, %v397
    %v399 = vadd.f32 %v395, %v398
    %vm400 = vweird.f32 %v394
    %vm401 = vweird.f32 %v395
    %vm402 = vmor %vm400, %vm401
    %v403 = vsel %vm402, %v395, %v399
    %v404 = vand.u32 2147483647, %v394
    %vm405 = vcmp.eq.f32.partialorder %v404, 8.507059e+37
    %v406 = vand.u32 %v394, 2147483648
    %v407 = vor.u32 1.1754944e-38, %v406
    %v408 = vsel %vm405, %v407, %v403
    %v409 = vmul.f32 1.0, %v408
    %v410 = vtanh.pop %v390
    %v411 = vmul.f32 %v409, %v335
    %413 = vrot.lane.b32.xlu0 %v410, 64
    %v414 = vpop.permute.xlu0 %413
    %v416 = vmul.f32 %v409, %v414
    %418 = vrot.lane.b32.xlu0 %v416, 32
    %v419 = vpop.permute.xlu0 %418
    %v421 = vadd.f32 %v411, %v419
    %v422 = vtanh.pop %v421
    %424 = vrot.lane.b32.xlu0 %v422, 64
    %v425 = vpop.permute.xlu0 %424
    %v427 = vmul.f32 %v409, %v425
    %429 = vrot.lane.b32.xlu0 %v427, 32
    %v430 = vpop.permute.xlu0 %429
    %v431 = vsel %vm77, %v430, 0
    %433 = vmatpush.msra.mxu0 0.0
    %434 = vmatpush.msra.mxu0 0.0
    %435 = vmatpush.msra.mxu0 0.0
    %436 = vmatpush.msra.mxu0 0.0
    %437 = vmatpush.msra.mxu0 0.0
    %438 = vmatpush.msra.mxu0 0.0
    %439 = vmatpush.msra.mxu0 0.0
    %440 = vmatpush.msra.mxu0 0.0
    %441 = vmatpush.msra.mxu0 0.0
    %442 = vmatpush.msra.mxu0 0.0
    %443 = vmatpush.msra.mxu0 0.0
    %444 = vmatpush.msra.mxu0 0.0
    %445 = vmatpush.msra.mxu0 %v73
    %446 = vmatpush.msra.mxu0 %v72
    %447 = vmatpush.msra.mxu0 %v71
    %448 = vmatpush.msra.mxu0 %v70
    %449 = vmatmul.f32.gmra.mxu0 %v431
    %v450 = vpop.f32.mrf.mxu0
    %v451 = vadd.f32 0.0, %v450
    %452 = vdwg.mxu0
    %v454 = vsel %vm101, %v61, 0
    %456 = vmatpush.msra.mxu0 0.0
    %457 = vmatpush.msra.mxu0 0.0
    %458 = vmatpush.msra.mxu0 0.0
    %459 = vmatpush.msra.mxu0 0.0
    %460 = vmatpush.msra.mxu0 0.0
    %461 = vmatpush.msra.mxu0 0.0
    %462 = vmatpush.msra.mxu0 0.0
    %463 = vmatpush.msra.mxu0 0.0
    %464 = vmatpush.msra.mxu0 0.0
    %465 = vmatpush.msra.mxu0 0.0
    %466 = vmatpush.msra.mxu0 0.0
    %467 = vmatpush.msra.mxu0 0.0
    %468 = vmatpush.msra.mxu0 0.0
    %469 = vmatpush.msra.mxu0 0.0
    %470 = vmatpush.msra.mxu0 %v69
    %471 = vmatpush.msra.mxu0 %v68
    %472 = vmatmul.f32.gmra.mxu0 %v454
    %v473 = vpop.f32.mrf.mxu0
    %v474 = vadd.f32 %v451, %v473
    %475 = vdwg.mxu0
    %v476 = vadd.f32 %v474, %v126
    %v477 = vxor.u32 %v476, 2147483648
    %v478 = vmul.f32 %v477, 1.442695
    %v479 = vpow.pop %v478
    %v480 = vadd.f32 %v479, 1.0
    %v481 = vrcp.pop %v480
    %v482 = vmul.f32 %v480, %v481
    %v483 = vsub.f32 1.0, %v482
    %v484 = vmul.f32 %v481, %v483
    %v485 = vadd.f32 %v481, %v484
    %vm486 = vweird.f32 %v480
    %vm487 = vweird.f32 %v481
    %vm488 = vmor %vm486, %vm487
    %v489 = vsel %vm488, %v481, %v485
    %v490 = vand.u32 2147483647, %v480
    %vm491 = vcmp.eq.f32.partialorder %v490, 8.507059e+37
    %v492 = vand.u32 %v480, 2147483648
    %v493 = vor.u32 1.1754944e-38, %v492
    %v494 = vsel %vm491, %v493, %v489
    %v495 = vmul.f32 1.0, %v494
    %v496 = vtanh.pop %v476
    %v497 = vmul.f32 %v495, %v421
    %499 = vrot.lane.b32.xlu0 %v496, 64
    %v500 = vpop.permute.xlu0 %499
    %v502 = vmul.f32 %v495, %v500
    %504 = vrot.lane.b32.xlu0 %v502, 32
    %v505 = vpop.permute.xlu0 %504
    %v507 = vadd.f32 %v497, %v505
    %v508 = vtanh.pop %v507
    %510 = vrot.lane.b32.xlu0 %v508, 64
    %v511 = vpop.permute.xlu0 %510
    %v513 = vmul.f32 %v495, %v511
    %515 = vrot.lane.b32.xlu0 %v513, 32
    %v516 = vpop.permute.xlu0 %515
    %v517 = vsel %vm77, %v516, 0
    %519 = vmatpush.msra.mxu0 0.0
    %520 = vmatpush.msra.mxu0 0.0
    %521 = vmatpush.msra.mxu0 0.0
    %522 = vmatpush.msra.mxu0 0.0
    %523 = vmatpush.msra.mxu0 0.0
    %524 = vmatpush.msra.mxu0 0.0
    %525 = vmatpush.msra.mxu0 0.0
    %526 = vmatpush.msra.mxu0 0.0
    %527 = vmatpush.msra.mxu0 0.0
    %528 = vmatpush.msra.mxu0 0.0
    %529 = vmatpush.msra.mxu0 0.0
    %530 = vmatpush.msra.mxu0 0.0
    %531 = vmatpush.msra.mxu0 %v73
    %532 = vmatpush.msra.mxu0 %v72
    %533 = vmatpush.msra.mxu0 %v71
    %534 = vmatpush.msra.mxu0 %v70
    %535 = vmatmul.f32.gmra.mxu0 %v517
    %v536 = vpop.f32.mrf.mxu0
    %v537 = vadd.f32 0.0, %v536
    %538 = vdwg.mxu0
    %v540 = vsel %vm101, %v63, 0
    %542 = vmatpush.msra.mxu0 0.0
    %543 = vmatpush.msra.mxu0 0.0
    %544 = vmatpush.msra.mxu0 0.0
    %545 = vmatpush.msra.mxu0 0.0
    %546 = vmatpush.msra.mxu0 0.0
    %547 = vmatpush.msra.mxu0 0.0
    %548 = vmatpush.msra.mxu0 0.0
    %549 = vmatpush.msra.mxu0 0.0
    %550 = vmatpush.msra.mxu0 0.0
    %551 = vmatpush.msra.mxu0 0.0
    %552 = vmatpush.msra.mxu0 0.0
    %553 = vmatpush.msra.mxu0 0.0
    %554 = vmatpush.msra.mxu0 0.0
    %555 = vmatpush.msra.mxu0 0.0
    %556 = vmatpush.msra.mxu0 %v69
    %557 = vmatpush.msra.mxu0 %v68
    %558 = vmatmul.f32.gmra.mxu0 %v540
    %v559 = vpop.f32.mrf.mxu0
    %v560 = vadd.f32 %v537, %v559
    %561 = vdwg.mxu0
    %v562 = vadd.f32 %v560, %v126
    %v563 = vxor.u32 %v562, 2147483648
    %v564 = vmul.f32 %v563, 1.442695
    %v565 = vpow.pop %v564
    %v566 = vadd.f32 %v565, 1.0
    %v567 = vrcp.pop %v566
    %v568 = vmul.f32 %v566, %v567
    %v569 = vsub.f32 1.0, %v568
    %v570 = vmul.f32 %v567, %v569
    %v571 = vadd.f32 %v567, %v570
    %vm572 = vweird.f32 %v566
    %vm573 = vweird.f32 %v567
    %vm574 = vmor %vm572, %vm573
    %v575 = vsel %vm574, %v567, %v571
    %v576 = vand.u32 2147483647, %v566
    %vm577 = vcmp.eq.f32.partialorder %v576, 8.507059e+37
    %v578 = vand.u32 %v566, 2147483648
    %v579 = vor.u32 1.1754944e-38, %v578
    %v580 = vsel %vm577, %v579, %v575
    %v581 = vmul.f32 1.0, %v580
    %v582 = vtanh.pop %v562
    %v583 = vmul.f32 %v581, %v507
    %585 = vrot.lane.b32.xlu0 %v582, 64
    %v586 = vpop.permute.xlu0 %585
    %v588 = vmul.f32 %v581, %v586
    %590 = vrot.lane.b32.xlu0 %v588, 32
    %v591 = vpop.permute.xlu0 %590
    %v593 = vadd.f32 %v583, %v591
    %v594 = vtanh.pop %v593
    %596 = vrot.lane.b32.xlu0 %v594, 64
    %v597 = vpop.permute.xlu0 %596
    %v599 = vmul.f32 %v581, %v597
    %601 = vrot.lane.b32.xlu0 %v599, 32
    %v602 = vpop.permute.xlu0 %601
    %v603 = vsel %vm77, %v602, 0
    %605 = vmatpush.msra.mxu0 0.0
    %606 = vmatpush.msra.mxu0 0.0
    %607 = vmatpush.msra.mxu0 0.0
    %608 = vmatpush.msra.mxu0 0.0
    %609 = vmatpush.msra.mxu0 0.0
    %610 = vmatpush.msra.mxu0 0.0
    %611 = vmatpush.msra.mxu0 0.0
    %612 = vmatpush.msra.mxu0 0.0
    %613 = vmatpush.msra.mxu0 0.0
    %614 = vmatpush.msra.mxu0 0.0
    %615 = vmatpush.msra.mxu0 0.0
    %616 = vmatpush.msra.mxu0 0.0
    %617 = vmatpush.msra.mxu0 %v73
    %618 = vmatpush.msra.mxu0 %v72
    %619 = vmatpush.msra.mxu0 %v71
    %620 = vmatpush.msra.mxu0 %v70
    %621 = vmatmul.f32.gmra.mxu0 %v603
    %v622 = vpop.f32.mrf.mxu0
    %v623 = vadd.f32 0.0, %v622
    %624 = vdwg.mxu0
    %v626 = vsel %vm101, %v65, 0
    %628 = vmatpush.msra.mxu0 0.0
    %629 = vmatpush.msra.mxu0 0.0
    %630 = vmatpush.msra.mxu0 0.0
    %631 = vmatpush.msra.mxu0 0.0
    %632 = vmatpush.msra.mxu0 0.0
    %633 = vmatpush.msra.mxu0 0.0
    %634 = vmatpush.msra.mxu0 0.0
    %635 = vmatpush.msra.mxu0 0.0
    %636 = vmatpush.msra.mxu0 0.0
    %637 = vmatpush.msra.mxu0 0.0
    %638 = vmatpush.msra.mxu0 0.0
    %639 = vmatpush.msra.mxu0 0.0
    %640 = vmatpush.msra.mxu0 0.0
    %641 = vmatpush.msra.mxu0 0.0
    %642 = vmatpush.msra.mxu0 %v69
    %643 = vmatpush.msra.mxu0 %v68
    %644 = vmatmul.f32.gmra.mxu0 %v626
    %v645 = vpop.f32.mrf.mxu0
    %v646 = vadd.f32 %v623, %v645
    %647 = vdwg.mxu0
    %v648 = vadd.f32 %v646, %v126
    %v649 = vxor.u32 %v648, 2147483648
    %v650 = vmul.f32 %v649, 1.442695
    %v651 = vpow.pop %v650
    %v652 = vadd.f32 %v651, 1.0
    %v653 = vrcp.pop %v652
    %v654 = vmul.f32 %v652, %v653
    %v655 = vsub.f32 1.0, %v654
    %v656 = vmul.f32 %v653, %v655
    %v657 = vadd.f32 %v653, %v656
    %vm658 = vweird.f32 %v652
    %vm659 = vweird.f32 %v653
    %vm660 = vmor %vm658, %vm659
    %v661 = vsel %vm660, %v653, %v657
    %v662 = vand.u32 2147483647, %v652
    %vm663 = vcmp.eq.f32.partialorder %v662, 8.507059e+37
    %v664 = vand.u32 %v652, 2147483648
    %v665 = vor.u32 1.1754944e-38, %v664
    %v666 = vsel %vm663, %v665, %v661
    %v667 = vmul.f32 1.0, %v666
    %v668 = vtanh.pop %v648
    %v669 = vmul.f32 %v667, %v593
    %671 = vrot.lane.b32.xlu0 %v668, 64
    %v672 = vpop.permute.xlu0 %671
    %v674 = vmul.f32 %v667, %v672
    %676 = vrot.lane.b32.xlu0 %v674, 32
    %v677 = vpop.permute.xlu0 %676
    %v679 = vadd.f32 %v669, %v677
    %v680 = vtanh.pop %v679
    %682 = vrot.lane.b32.xlu0 %v680, 64
    %v683 = vpop.permute.xlu0 %682
    %v685 = vmul.f32 %v667, %v683
    %687 = vrot.lane.b32.xlu0 %v685, 32
    %v688 = vpop.permute.xlu0 %687
    %v689 = vsel %vm77, %v688, 0
    %691 = vmatpush.msra.mxu0 0.0
    %692 = vmatpush.msra.mxu0 0.0
    %693 = vmatpush.msra.mxu0 0.0
    %694 = vmatpush.msra.mxu0 0.0
    %695 = vmatpush.msra.mxu0 0.0
    %696 = vmatpush.msra.mxu0 0.0
    %697 = vmatpush.msra.mxu0 0.0
    %698 = vmatpush.msra.mxu0 0.0
    %699 = vmatpush.msra.mxu0 0.0
    %700 = vmatpush.msra.mxu0 0.0
    %701 = vmatpush.msra.mxu0 0.0
    %702 = vmatpush.msra.mxu0 0.0
    %703 = vmatpush.msra.mxu0 %v73
    %704 = vmatpush.msra.mxu0 %v72
    %705 = vmatpush.msra.mxu0 %v71
    %706 = vmatpush.msra.mxu0 %v70
    %707 = vmatmul.f32.gmra.mxu0 %v689
    %v708 = vpop.f32.mrf.mxu0
    %v709 = vadd.f32 0.0, %v708
    %710 = vdwg.mxu0
    %v712 = vsel %vm101, %v67, 0
    %714 = vmatpush.msra.mxu0 0.0
    %715 = vmatpush.msra.mxu0 0.0
    %716 = vmatpush.msra.mxu0 0.0
    %717 = vmatpush.msra.mxu0 0.0
    %718 = vmatpush.msra.mxu0 0.0
    %719 = vmatpush.msra.mxu0 0.0
    %720 = vmatpush.msra.mxu0 0.0
    %721 = vmatpush.msra.mxu0 0.0
    %722 = vmatpush.msra.mxu0 0.0
    %723 = vmatpush.msra.mxu0 0.0
    %724 = vmatpush.msra.mxu0 0.0
    %725 = vmatpush.msra.mxu0 0.0
    %726 = vmatpush.msra.mxu0 0.0
    %727 = vmatpush.msra.mxu0 0.0
    %728 = vmatpush.msra.mxu0 %v69
    %729 = vmatpush.msra.mxu0 %v68
    %730 = vmatmul.f32.gmra.mxu0 %v712
    %v731 = vpop.f32.mrf.mxu0
    %v732 = vadd.f32 %v709, %v731
    %733 = vdwg.mxu0
    %v734 = vadd.f32 %v732, %v126
    %v735 = vxor.u32 %v734, 2147483648
    %v736 = vmul.f32 %v735, 1.442695
    %v737 = vpow.pop %v736
    %v738 = vadd.f32 %v737, 1.0
    %v739 = vrcp.pop %v738
    %v740 = vmul.f32 %v738, %v739
    %v741 = vsub.f32 1.0, %v740
    %v742 = vmul.f32 %v739, %v741
    %v743 = vadd.f32 %v739, %v742
    %vm744 = vweird.f32 %v738
    %vm745 = vweird.f32 %v739
    %vm746 = vmor %vm744, %vm745
    %v747 = vsel %vm746, %v739, %v743
    %v748 = vand.u32 2147483647, %v738
    %vm749 = vcmp.eq.f32.partialorder %v748, 8.507059e+37
    %v750 = vand.u32 %v738, 2147483648
    %v751 = vor.u32 1.1754944e-38, %v750
    %v752 = vsel %vm749, %v751, %v747
    %v753 = vmul.f32 1.0, %v752
    %v754 = vtanh.pop %v734
    %v755 = vmul.f32 %v753, %v679
    %757 = vrot.lane.b32.xlu0 %v754, 64
    %v758 = vpop.permute.xlu0 %757
    %v760 = vmul.f32 %v753, %v758
    %762 = vrot.lane.b32.xlu0 %v760, 32
    %v763 = vpop.permute.xlu0 %762
    %v765 = vadd.f32 %v755, %v763
    %v766 = vtanh.pop %v765
    %768 = vrot.lane.b32.xlu0 %v766, 64
    %v769 = vpop.permute.xlu0 %768
    %v771 = vmul.f32 %v753, %v769
    %v772 = vld [vmem:[%s6] sm:$0xff]
    %v773 = vld [vmem:[%s6 + $0x8] sm:$0xff]
    %v774 = vld [vmem:[%s6 + $0x10] sm:$0xff]
    %v775 = vld [vmem:[%s6 + $0x18] sm:$0xff]
    %v776 = vld [vmem:[%s7] sm:$0xff]
    %v777 = vld [vmem:[%s7 + $0x8] sm:$0xff]
    %v778 = vld [vmem:[%s7 + $0x10] sm:$0xff]
    %v779 = vld [vmem:[%s7 + $0x18] sm:$0xff]
    %v780 = vld [vmem:[%s8] sm:$0x1]
    %s781 = scalar_lea.vmem %s1, 2
    %v782 = vld [vmem:[%s781] sm:$0x3]
    %s783 = scalar_lea.vmem %s2, 2
    %v784 = vld [vmem:[%s783] sm:$0x3]
    %v786 = vsel %vm77, %v782, 0
    %788 = vmatpush.msra.mxu0 0.0
    %789 = vmatpush.msra.mxu0 0.0
    %790 = vmatpush.msra.mxu0 0.0
    %791 = vmatpush.msra.mxu0 0.0
    %792 = vmatpush.msra.mxu0 0.0
    %793 = vmatpush.msra.mxu0 0.0
    %794 = vmatpush.msra.mxu0 0.0
    %795 = vmatpush.msra.mxu0 0.0
    %796 = vmatpush.msra.mxu0 0.0
    %797 = vmatpush.msra.mxu0 0.0
    %798 = vmatpush.msra.mxu0 0.0
    %799 = vmatpush.msra.mxu0 0.0
    %800 = vmatpush.msra.mxu0 %v779
    %801 = vmatpush.msra.mxu0 %v778
    %802 = vmatpush.msra.mxu0 %v777
    %803 = vmatpush.msra.mxu0 %v776
    %804 = vmatmul.f32.gmra.mxu0 %v786
    %v805 = vpop.f32.mrf.mxu0
    %v806 = vadd.f32 0.0, %v805
    %807 = vdwg.mxu0
    %808 = vmatpush.msra.mxu0 0.0
    %809 = vmatpush.msra.mxu0 0.0
    %810 = vmatpush.msra.mxu0 0.0
    %811 = vmatpush.msra.mxu0 0.0
    %812 = vmatpush.msra.mxu0 0.0
    %813 = vmatpush.msra.mxu0 0.0
    %814 = vmatpush.msra.mxu0 0.0
    %815 = vmatpush.msra.mxu0 0.0
    %816 = vmatpush.msra.mxu0 0.0
    %817 = vmatpush.msra.mxu0 0.0
    %818 = vmatpush.msra.mxu0 0.0
    %819 = vmatpush.msra.mxu0 0.0
    %820 = vmatpush.msra.mxu0 %v775
    %821 = vmatpush.msra.mxu0 %v774
    %822 = vmatpush.msra.mxu0 %v773
    %823 = vmatpush.msra.mxu0 %v772
    %824 = vmatmul.f32.gmra.mxu0 %v173
    %v825 = vpop.f32.mrf.mxu0
    %v826 = vadd.f32 %v806, %v825
    %827 = vdwg.mxu0
    %v829 = vperm.slane %v780, 0
    %v831 = vadd.f32 %v826, %v829
    %v832 = vxor.u32 %v831, 2147483648
    %v833 = vmul.f32 %v832, 1.442695
    %v834 = vpow.pop %v833
    %v835 = vadd.f32 %v834, 1.0
    %v836 = vrcp.pop %v835
    %v837 = vmul.f32 %v835, %v836
    %v838 = vsub.f32 1.0, %v837
    %v839 = vmul.f32 %v836, %v838
    %v840 = vadd.f32 %v836, %v839
    %vm841 = vweird.f32 %v835
    %vm842 = vweird.f32 %v836
    %vm843 = vmor %vm841, %vm842
    %v844 = vsel %vm843, %v836, %v840
    %v845 = vand.u32 2147483647, %v835
    %vm846 = vcmp.eq.f32.partialorder %v845, 8.507059e+37
    %v847 = vand.u32 %v835, 2147483648
    %v848 = vor.u32 1.1754944e-38, %v847
    %v849 = vsel %vm846, %v848, %v844
    %v850 = vmul.f32 1.0, %v849
    %v851 = vtanh.pop %v831
    %853 = vrot.lane.b32.xlu0 %v784, 32
    %v854 = vpop.permute.xlu0 %853
    %v856 = vmul.f32 %v850, %v854
    %858 = vrot.lane.b32.xlu0 %v851, 64
    %v859 = vpop.permute.xlu0 %858
    %v861 = vmul.f32 %v850, %v859
    %863 = vrot.lane.b32.xlu0 %v861, 32
    %v864 = vpop.permute.xlu0 %863
    %v866 = vadd.f32 %v856, %v864
    %v867 = vtanh.pop %v866
    %869 = vrot.lane.b32.xlu0 %v867, 64
    %v870 = vpop.permute.xlu0 %869
    %v872 = vmul.f32 %v850, %v870
    %874 = vrot.lane.b32.xlu0 %v872, 32
    %v875 = vpop.permute.xlu0 %874
    %v876 = vsel %vm77, %v875, 0
    %878 = vmatpush.msra.mxu0 0.0
    %879 = vmatpush.msra.mxu0 0.0
    %880 = vmatpush.msra.mxu0 0.0
    %881 = vmatpush.msra.mxu0 0.0
    %882 = vmatpush.msra.mxu0 0.0
    %883 = vmatpush.msra.mxu0 0.0
    %884 = vmatpush.msra.mxu0 0.0
    %885 = vmatpush.msra.mxu0 0.0
    %886 = vmatpush.msra.mxu0 0.0
    %887 = vmatpush.msra.mxu0 0.0
    %888 = vmatpush.msra.mxu0 0.0
    %889 = vmatpush.msra.mxu0 0.0
    %890 = vmatpush.msra.mxu0 %v779
    %891 = vmatpush.msra.mxu0 %v778
    %892 = vmatpush.msra.mxu0 %v777
    %893 = vmatpush.msra.mxu0 %v776
    %894 = vmatmul.f32.gmra.mxu0 %v876
    %v895 = vpop.f32.mrf.mxu0
    %v896 = vadd.f32 0.0, %v895
    %897 = vdwg.mxu0
    %898 = vmatpush.msra.mxu0 0.0
    %899 = vmatpush.msra.mxu0 0.0
    %900 = vmatpush.msra.mxu0 0.0
    %901 = vmatpush.msra.mxu0 0.0
    %902 = vmatpush.msra.mxu0 0.0
    %903 = vmatpush.msra.mxu0 0.0
    %904 = vmatpush.msra.mxu0 0.0
    %905 = vmatpush.msra.mxu0 0.0
    %906 = vmatpush.msra.mxu0 0.0
    %907 = vmatpush.msra.mxu0 0.0
    %908 = vmatpush.msra.mxu0 0.0
    %909 = vmatpush.msra.mxu0 0.0
    %910 = vmatpush.msra.mxu0 %v775
    %911 = vmatpush.msra.mxu0 %v774
    %912 = vmatpush.msra.mxu0 %v773
    %913 = vmatpush.msra.mxu0 %v772
    %914 = vmatmul.f32.gmra.mxu0 %v259
    %v915 = vpop.f32.mrf.mxu0
    %v916 = vadd.f32 %v896, %v915
    %917 = vdwg.mxu0
    %v918 = vadd.f32 %v916, %v829
    %v919 = vxor.u32 %v918, 2147483648
    %v920 = vmul.f32 %v919, 1.442695
    %v921 = vpow.pop %v920
    %v922 = vadd.f32 %v921, 1.0
    %v923 = vrcp.pop %v922
    %v924 = vmul.f32 %v922, %v923
    %v925 = vsub.f32 1.0, %v924
    %v926 = vmul.f32 %v923, %v925
    %v927 = vadd.f32 %v923, %v926
    %vm928 = vweird.f32 %v922
    %vm929 = vweird.f32 %v923
    %vm930 = vmor %vm928, %vm929
    %v931 = vsel %vm930, %v923, %v927
    %v932 = vand.u32 2147483647, %v922
    %vm933 = vcmp.eq.f32.partialorder %v932, 8.507059e+37
    %v934 = vand.u32 %v922, 2147483648
    %v935 = vor.u32 1.1754944e-38, %v934
    %v936 = vsel %vm933, %v935, %v931
    %v937 = vmul.f32 1.0, %v936
    %v938 = vtanh.pop %v918
    %v939 = vmul.f32 %v937, %v866
    %941 = vrot.lane.b32.xlu0 %v938, 64
    %v942 = vpop.permute.xlu0 %941
    %v944 = vmul.f32 %v937, %v942
    %946 = vrot.lane.b32.xlu0 %v944, 32
    %v947 = vpop.permute.xlu0 %946
    %v949 = vadd.f32 %v939, %v947
    %v950 = vtanh.pop %v949
    %952 = vrot.lane.b32.xlu0 %v950, 64
    %v953 = vpop.permute.xlu0 %952
    %v955 = vmul.f32 %v937, %v953
    %957 = vrot.lane.b32.xlu0 %v955, 32
    %v958 = vpop.permute.xlu0 %957
    %v959 = vsel %vm77, %v958, 0
    %961 = vmatpush.msra.mxu0 0.0
    %962 = vmatpush.msra.mxu0 0.0
    %963 = vmatpush.msra.mxu0 0.0
    %964 = vmatpush.msra.mxu0 0.0
    %965 = vmatpush.msra.mxu0 0.0
    %966 = vmatpush.msra.mxu0 0.0
    %967 = vmatpush.msra.mxu0 0.0
    %968 = vmatpush.msra.mxu0 0.0
    %969 = vmatpush.msra.mxu0 0.0
    %970 = vmatpush.msra.mxu0 0.0
    %971 = vmatpush.msra.mxu0 0.0
    %972 = vmatpush.msra.mxu0 0.0
    %973 = vmatpush.msra.mxu0 %v779
    %974 = vmatpush.msra.mxu0 %v778
    %975 = vmatpush.msra.mxu0 %v777
    %976 = vmatpush.msra.mxu0 %v776
    %977 = vmatmul.f32.gmra.mxu0 %v959
    %v978 = vpop.f32.mrf.mxu0
    %v979 = vadd.f32 0.0, %v978
    %980 = vdwg.mxu0
    %981 = vmatpush.msra.mxu0 0.0
    %982 = vmatpush.msra.mxu0 0.0
    %983 = vmatpush.msra.mxu0 0.0
    %984 = vmatpush.msra.mxu0 0.0
    %985 = vmatpush.msra.mxu0 0.0
    %986 = vmatpush.msra.mxu0 0.0
    %987 = vmatpush.msra.mxu0 0.0
    %988 = vmatpush.msra.mxu0 0.0
    %989 = vmatpush.msra.mxu0 0.0
    %990 = vmatpush.msra.mxu0 0.0
    %991 = vmatpush.msra.mxu0 0.0
    %992 = vmatpush.msra.mxu0 0.0
    %993 = vmatpush.msra.mxu0 %v775
    %994 = vmatpush.msra.mxu0 %v774
    %995 = vmatpush.msra.mxu0 %v773
    %996 = vmatpush.msra.mxu0 %v772
    %997 = vmatmul.f32.gmra.mxu0 %v345
    %v998 = vpop.f32.mrf.mxu0
    %v999 = vadd.f32 %v979, %v998
    %1000 = vdwg.mxu0
    %v1001 = vadd.f32 %v999, %v829
    %v1002 = vxor.u32 %v1001, 2147483648
    %v1003 = vmul.f32 %v1002, 1.442695
    %v1004 = vpow.pop %v1003
    %v1005 = vadd.f32 %v1004, 1.0
    %v1006 = vrcp.pop %v1005
    %v1007 = vmul.f32 %v1005, %v1006
    %v1008 = vsub.f32 1.0, %v1007
    %v1009 = vmul.f32 %v1006, %v1008
    %v1010 = vadd.f32 %v1006, %v1009
    %vm1011 = vweird.f32 %v1005
    %vm1012 = vweird.f32 %v1006
    %vm1013 = vmor %vm1011, %vm1012
    %v1014 = vsel %vm1013, %v1006, %v1010
    %v1015 = vand.u32 2147483647, %v1005
    %vm1016 = vcmp.eq.f32.partialorder %v1015, 8.507059e+37
    %v1017 = vand.u32 %v1005, 2147483648
    %v1018 = vor.u32 1.1754944e-38, %v1017
    %v1019 = vsel %vm1016, %v1018, %v1014
    %v1020 = vmul.f32 1.0, %v1019
    %v1021 = vtanh.pop %v1001
    %v1022 = vmul.f32 %v1020, %v949
    %1024 = vrot.lane.b32.xlu0 %v1021, 64
    %v1025 = vpop.permute.xlu0 %1024
    %v1027 = vmul.f32 %v1020, %v1025
    %1029 = vrot.lane.b32.xlu0 %v1027, 32
    %v1030 = vpop.permute.xlu0 %1029
    %v1032 = vadd.f32 %v1022, %v1030
    %v1033 = vtanh.pop %v1032
    %1035 = vrot.lane.b32.xlu0 %v1033, 64
    %v1036 = vpop.permute.xlu0 %1035
    %v1038 = vmul.f32 %v1020, %v1036
    %1040 = vrot.lane.b32.xlu0 %v1038, 32
    %v1041 = vpop.permute.xlu0 %1040
    %v1042 = vsel %vm77, %v1041, 0
    %1044 = vmatpush.msra.mxu0 0.0
    %1045 = vmatpush.msra.mxu0 0.0
    %1046 = vmatpush.msra.mxu0 0.0
    %1047 = vmatpush.msra.mxu0 0.0
    %1048 = vmatpush.msra.mxu0 0.0
    %1049 = vmatpush.msra.mxu0 0.0
    %1050 = vmatpush.msra.mxu0 0.0
    %1051 = vmatpush.msra.mxu0 0.0
    %1052 = vmatpush.msra.mxu0 0.0
    %1053 = vmatpush.msra.mxu0 0.0
    %1054 = vmatpush.msra.mxu0 0.0
    %1055 = vmatpush.msra.mxu0 0.0
    %1056 = vmatpush.msra.mxu0 %v779
    %1057 = vmatpush.msra.mxu0 %v778
    %1058 = vmatpush.msra.mxu0 %v777
    %1059 = vmatpush.msra.mxu0 %v776
    %1060 = vmatmul.f32.gmra.mxu0 %v1042
    %v1061 = vpop.f32.mrf.mxu0
    %v1062 = vadd.f32 0.0, %v1061
    %1063 = vdwg.mxu0
    %1064 = vmatpush.msra.mxu0 0.0
    %1065 = vmatpush.msra.mxu0 0.0
    %1066 = vmatpush.msra.mxu0 0.0
    %1067 = vmatpush.msra.mxu0 0.0
    %1068 = vmatpush.msra.mxu0 0.0
    %1069 = vmatpush.msra.mxu0 0.0
    %1070 = vmatpush.msra.mxu0 0.0
    %1071 = vmatpush.msra.mxu0 0.0
    %1072 = vmatpush.msra.mxu0 0.0
    %1073 = vmatpush.msra.mxu0 0.0
    %1074 = vmatpush.msra.mxu0 0.0
    %1075 = vmatpush.msra.mxu0 0.0
    %1076 = vmatpush.msra.mxu0 %v775
    %1077 = vmatpush.msra.mxu0 %v774
    %1078 = vmatpush.msra.mxu0 %v773
    %1079 = vmatpush.msra.mxu0 %v772
    %1080 = vmatmul.f32.gmra.mxu0 %v431
    %v1081 = vpop.f32.mrf.mxu0
    %v1082 = vadd.f32 %v1062, %v1081
    %1083 = vdwg.mxu0
    %v1084 = vadd.f32 %v1082, %v829
    %v1085 = vxor.u32 %v1084, 2147483648
    %v1086 = vmul.f32 %v1085, 1.442695
    %v1087 = vpow.pop %v1086
    %v1088 = vadd.f32 %v1087, 1.0
    %v1089 = vrcp.pop %v1088
    %v1090 = vmul.f32 %v1088, %v1089
    %v1091 = vsub.f32 1.0, %v1090
    %v1092 = vmul.f32 %v1089, %v1091
    %v1093 = vadd.f32 %v1089, %v1092
    %vm1094 = vweird.f32 %v1088
    %vm1095 = vweird.f32 %v1089
    %vm1096 = vmor %vm1094, %vm1095
    %v1097 = vsel %vm1096, %v1089, %v1093
    %v1098 = vand.u32 2147483647, %v1088
    %vm1099 = vcmp.eq.f32.partialorder %v1098, 8.507059e+37
    %v1100 = vand.u32 %v1088, 2147483648
    %v1101 = vor.u32 1.1754944e-38, %v1100
    %v1102 = vsel %vm1099, %v1101, %v1097
    %v1103 = vmul.f32 1.0, %v1102
    %v1104 = vtanh.pop %v1084
    %v1105 = vmul.f32 %v1103, %v1032
    %1107 = vrot.lane.b32.xlu0 %v1104, 64
    %v1108 = vpop.permute.xlu0 %1107
    %v1110 = vmul.f32 %v1103, %v1108
    %1112 = vrot.lane.b32.xlu0 %v1110, 32
    %v1113 = vpop.permute.xlu0 %1112
    %v1115 = vadd.f32 %v1105, %v1113
    %v1116 = vtanh.pop %v1115
    %1118 = vrot.lane.b32.xlu0 %v1116, 64
    %v1119 = vpop.permute.xlu0 %1118
    %v1121 = vmul.f32 %v1103, %v1119
    %1123 = vrot.lane.b32.xlu0 %v1121, 32
    %v1124 = vpop.permute.xlu0 %1123
    %v1125 = vsel %vm77, %v1124, 0
    %1127 = vmatpush.msra.mxu0 0.0
    %1128 = vmatpush.msra.mxu0 0.0
    %1129 = vmatpush.msra.mxu0 0.0
    %1130 = vmatpush.msra.mxu0 0.0
    %1131 = vmatpush.msra.mxu0 0.0
    %1132 = vmatpush.msra.mxu0 0.0
    %1133 = vmatpush.msra.mxu0 0.0
    %1134 = vmatpush.msra.mxu0 0.0
    %1135 = vmatpush.msra.mxu0 0.0
    %1136 = vmatpush.msra.mxu0 0.0
    %1137 = vmatpush.msra.mxu0 0.0
    %1138 = vmatpush.msra.mxu0 0.0
    %1139 = vmatpush.msra.mxu0 %v779
    %1140 = vmatpush.msra.mxu0 %v778
    %1141 = vmatpush.msra.mxu0 %v777
    %1142 = vmatpush.msra.mxu0 %v776
    %1143 = vmatmul.f32.gmra.mxu0 %v1125
    %v1144 = vpop.f32.mrf.mxu0
    %v1145 = vadd.f32 0.0, %v1144
    %1146 = vdwg.mxu0
    %1147 = vmatpush.msra.mxu0 0.0
    %1148 = vmatpush.msra.mxu0 0.0
    %1149 = vmatpush.msra.mxu0 0.0
    %1150 = vmatpush.msra.mxu0 0.0
    %1151 = vmatpush.msra.mxu0 0.0
    %1152 = vmatpush.msra.mxu0 0.0
    %1153 = vmatpush.msra.mxu0 0.0
    %1154 = vmatpush.msra.mxu0 0.0
    %1155 = vmatpush.msra.mxu0 0.0
    %1156 = vmatpush.msra.mxu0 0.0
    %1157 = vmatpush.msra.mxu0 0.0
    %1158 = vmatpush.msra.mxu0 0.0
    %1159 = vmatpush.msra.mxu0 %v775
    %1160 = vmatpush.msra.mxu0 %v774
    %1161 = vmatpush.msra.mxu0 %v773
    %1162 = vmatpush.msra.mxu0 %v772
    %1163 = vmatmul.f32.gmra.mxu0 %v517
    %v1164 = vpop.f32.mrf.mxu0
    %v1165 = vadd.f32 %v1145, %v1164
    %1166 = vdwg.mxu0
    %v1167 = vadd.f32 %v1165, %v829
    %v1168 = vxor.u32 %v1167, 2147483648
    %v1169 = vmul.f32 %v1168, 1.442695
    %v1170 = vpow.pop %v1169
    %v1171 = vadd.f32 %v1170, 1.0
    %v1172 = vrcp.pop %v1171
    %v1173 = vmul.f32 %v1171, %v1172
    %v1174 = vsub.f32 1.0, %v1173
    %v1175 = vmul.f32 %v1172, %v1174
    %v1176 = vadd.f32 %v1172, %v1175
    %vm1177 = vweird.f32 %v1171
    %vm1178 = vweird.f32 %v1172
    %vm1179 = vmor %vm1177, %vm1178
    %v1180 = vsel %vm1179, %v1172, %v1176
    %v1181 = vand.u32 2147483647, %v1171
    %vm1182 = vcmp.eq.f32.partialorder %v1181, 8.507059e+37
    %v1183 = vand.u32 %v1171, 2147483648
    %v1184 = vor.u32 1.1754944e-38, %v1183
    %v1185 = vsel %vm1182, %v1184, %v1180
    %v1186 = vmul.f32 1.0, %v1185
    %v1187 = vtanh.pop %v1167
    %v1188 = vmul.f32 %v1186, %v1115
    %1190 = vrot.lane.b32.xlu0 %v1187, 64
    %v1191 = vpop.permute.xlu0 %1190
    %v1193 = vmul.f32 %v1186, %v1191
    %1195 = vrot.lane.b32.xlu0 %v1193, 32
    %v1196 = vpop.permute.xlu0 %1195
    %v1198 = vadd.f32 %v1188, %v1196
    %v1199 = vtanh.pop %v1198
    %1201 = vrot.lane.b32.xlu0 %v1199, 64
    %v1202 = vpop.permute.xlu0 %1201
    %v1204 = vmul.f32 %v1186, %v1202
    %1206 = vrot.lane.b32.xlu0 %v1204, 32
    %v1207 = vpop.permute.xlu0 %1206
    %v1208 = vsel %vm77, %v1207, 0
    %1210 = vmatpush.msra.mxu0 0.0
    %1211 = vmatpush.msra.mxu0 0.0
    %1212 = vmatpush.msra.mxu0 0.0
    %1213 = vmatpush.msra.mxu0 0.0
    %1214 = vmatpush.msra.mxu0 0.0
    %1215 = vmatpush.msra.mxu0 0.0
    %1216 = vmatpush.msra.mxu0 0.0
    %1217 = vmatpush.msra.mxu0 0.0
    %1218 = vmatpush.msra.mxu0 0.0
    %1219 = vmatpush.msra.mxu0 0.0
    %1220 = vmatpush.msra.mxu0 0.0
    %1221 = vmatpush.msra.mxu0 0.0
    %1222 = vmatpush.msra.mxu0 %v779
    %1223 = vmatpush.msra.mxu0 %v778
    %1224 = vmatpush.msra.mxu0 %v777
    %1225 = vmatpush.msra.mxu0 %v776
    %1226 = vmatmul.f32.gmra.mxu0 %v1208
    %v1227 = vpop.f32.mrf.mxu0
    %v1228 = vadd.f32 0.0, %v1227
    %1229 = vdwg.mxu0
    %1230 = vmatpush.msra.mxu0 0.0
    %1231 = vmatpush.msra.mxu0 0.0
    %1232 = vmatpush.msra.mxu0 0.0
    %1233 = vmatpush.msra.mxu0 0.0
    %1234 = vmatpush.msra.mxu0 0.0
    %1235 = vmatpush.msra.mxu0 0.0
    %1236 = vmatpush.msra.mxu0 0.0
    %1237 = vmatpush.msra.mxu0 0.0
    %1238 = vmatpush.msra.mxu0 0.0
    %1239 = vmatpush.msra.mxu0 0.0
    %1240 = vmatpush.msra.mxu0 0.0
    %1241 = vmatpush.msra.mxu0 0.0
    %1242 = vmatpush.msra.mxu0 %v775
    %1243 = vmatpush.msra.mxu0 %v774
    %1244 = vmatpush.msra.mxu0 %v773
    %1245 = vmatpush.msra.mxu0 %v772
    %1246 = vmatmul.f32.gmra.mxu0 %v603
    %v1247 = vpop.f32.mrf.mxu0
    %v1248 = vadd.f32 %v1228, %v1247
    %1249 = vdwg.mxu0
    %v1250 = vadd.f32 %v1248, %v829
    %v1251 = vxor.u32 %v1250, 2147483648
    %v1252 = vmul.f32 %v1251, 1.442695
    %v1253 = vpow.pop %v1252
    %v1254 = vadd.f32 %v1253, 1.0
    %v1255 = vrcp.pop %v1254
    %v1256 = vmul.f32 %v1254, %v1255
    %v1257 = vsub.f32 1.0, %v1256
    %v1258 = vmul.f32 %v1255, %v1257
    %v1259 = vadd.f32 %v1255, %v1258
    %vm1260 = vweird.f32 %v1254
    %vm1261 = vweird.f32 %v1255
    %vm1262 = vmor %vm1260, %vm1261
    %v1263 = vsel %vm1262, %v1255, %v1259
    %v1264 = vand.u32 2147483647, %v1254
    %vm1265 = vcmp.eq.f32.partialorder %v1264, 8.507059e+37
    %v1266 = vand.u32 %v1254, 2147483648
    %v1267 = vor.u32 1.1754944e-38, %v1266
    %v1268 = vsel %vm1265, %v1267, %v1263
    %v1269 = vmul.f32 1.0, %v1268
    %v1270 = vtanh.pop %v1250
    %v1271 = vmul.f32 %v1269, %v1198
    %1273 = vrot.lane.b32.xlu0 %v1270, 64
    %v1274 = vpop.permute.xlu0 %1273
    %v1276 = vmul.f32 %v1269, %v1274
    %1278 = vrot.lane.b32.xlu0 %v1276, 32
    %v1279 = vpop.permute.xlu0 %1278
    %v1281 = vadd.f32 %v1271, %v1279
    %v1282 = vtanh.pop %v1281
    %1284 = vrot.lane.b32.xlu0 %v1282, 64
    %v1285 = vpop.permute.xlu0 %1284
    %v1287 = vmul.f32 %v1269, %v1285
    %1289 = vrot.lane.b32.xlu0 %v1287, 32
    %v1290 = vpop.permute.xlu0 %1289
    %v1291 = vsel %vm77, %v1290, 0
    %1293 = vmatpush.msra.mxu0 0.0
    %1294 = vmatpush.msra.mxu0 0.0
    %1295 = vmatpush.msra.mxu0 0.0
    %1296 = vmatpush.msra.mxu0 0.0
    %1297 = vmatpush.msra.mxu0 0.0
    %1298 = vmatpush.msra.mxu0 0.0
    %1299 = vmatpush.msra.mxu0 0.0
    %1300 = vmatpush.msra.mxu0 0.0
    %1301 = vmatpush.msra.mxu0 0.0
    %1302 = vmatpush.msra.mxu0 0.0
    %1303 = vmatpush.msra.mxu0 0.0
    %1304 = vmatpush.msra.mxu0 0.0
    %1305 = vmatpush.msra.mxu0 %v779
    %1306 = vmatpush.msra.mxu0 %v778
    %1307 = vmatpush.msra.mxu0 %v777
    %1308 = vmatpush.msra.mxu0 %v776
    %1309 = vmatmul.f32.gmra.mxu0 %v1291
    %v1310 = vpop.f32.mrf.mxu0
    %v1311 = vadd.f32 0.0, %v1310
    %1312 = vdwg.mxu0
    %1313 = vmatpush.msra.mxu0 0.0
    %1314 = vmatpush.msra.mxu0 0.0
    %1315 = vmatpush.msra.mxu0 0.0
    %1316 = vmatpush.msra.mxu0 0.0
    %1317 = vmatpush.msra.mxu0 0.0
    %1318 = vmatpush.msra.mxu0 0.0
    %1319 = vmatpush.msra.mxu0 0.0
    %1320 = vmatpush.msra.mxu0 0.0
    %1321 = vmatpush.msra.mxu0 0.0
    %1322 = vmatpush.msra.mxu0 0.0
    %1323 = vmatpush.msra.mxu0 0.0
    %1324 = vmatpush.msra.mxu0 0.0
    %1325 = vmatpush.msra.mxu0 %v775
    %1326 = vmatpush.msra.mxu0 %v774
    %1327 = vmatpush.msra.mxu0 %v773
    %1328 = vmatpush.msra.mxu0 %v772
    %1329 = vmatmul.f32.gmra.mxu0 %v689
    %v1330 = vpop.f32.mrf.mxu0
    %v1331 = vadd.f32 %v1311, %v1330
    %1332 = vdwg.mxu0
    %v1333 = vadd.f32 %v1331, %v829
    %v1334 = vxor.u32 %v1333, 2147483648
    %v1335 = vmul.f32 %v1334, 1.442695
    %v1336 = vpow.pop %v1335
    %v1337 = vadd.f32 %v1336, 1.0
    %v1338 = vrcp.pop %v1337
    %v1339 = vmul.f32 %v1337, %v1338
    %v1340 = vsub.f32 1.0, %v1339
    %v1341 = vmul.f32 %v1338, %v1340
    %v1342 = vadd.f32 %v1338, %v1341
    %vm1343 = vweird.f32 %v1337
    %vm1344 = vweird.f32 %v1338
    %vm1345 = vmor %vm1343, %vm1344
    %v1346 = vsel %vm1345, %v1338, %v1342
    %v1347 = vand.u32 2147483647, %v1337
    %vm1348 = vcmp.eq.f32.partialorder %v1347, 8.507059e+37
    %v1349 = vand.u32 %v1337, 2147483648
    %v1350 = vor.u32 1.1754944e-38, %v1349
    %v1351 = vsel %vm1348, %v1350, %v1346
    %v1352 = vmul.f32 1.0, %v1351
    %v1353 = vtanh.pop %v1333
    %v1354 = vmul.f32 %v1352, %v1281
    %1356 = vrot.lane.b32.xlu0 %v1353, 64
    %v1357 = vpop.permute.xlu0 %1356
    %v1359 = vmul.f32 %v1352, %v1357
    %1361 = vrot.lane.b32.xlu0 %v1359, 32
    %v1362 = vpop.permute.xlu0 %1361
    %v1364 = vadd.f32 %v1354, %v1362
    %v1365 = vtanh.pop %v1364
    %1367 = vrot.lane.b32.xlu0 %v1365, 64
    %v1368 = vpop.permute.xlu0 %1367
    %v1370 = vmul.f32 %v1352, %v1368
    %1372 = vrot.lane.b32.xlu0 %v1370, 32
    %v1373 = vpop.permute.xlu0 %1372
    %v1374 = vsel %vm77, %v1373, 0
    %1376 = vmatpush.msra.mxu0 0.0
    %1377 = vmatpush.msra.mxu0 0.0
    %1378 = vmatpush.msra.mxu0 0.0
    %1379 = vmatpush.msra.mxu0 0.0
    %1380 = vmatpush.msra.mxu0 0.0
    %1381 = vmatpush.msra.mxu0 0.0
    %1382 = vmatpush.msra.mxu0 0.0
    %1383 = vmatpush.msra.mxu0 0.0
    %1384 = vmatpush.msra.mxu0 0.0
    %1385 = vmatpush.msra.mxu0 0.0
    %1386 = vmatpush.msra.mxu0 0.0
    %1387 = vmatpush.msra.mxu0 0.0
    %1388 = vmatpush.msra.mxu0 %v779
    %1389 = vmatpush.msra.mxu0 %v778
    %1390 = vmatpush.msra.mxu0 %v777
    %1391 = vmatpush.msra.mxu0 %v776
    %1392 = vmatmul.f32.gmra.mxu0 %v1374
    %v1393 = vpop.f32.mrf.mxu0
    %v1394 = vadd.f32 0.0, %v1393
    %1395 = vdwg.mxu0
    %1397 = vrot.lane.b32.xlu0 %v771, 32
    %v1398 = vpop.permute.xlu0 %1397
    %v1399 = vsel %vm77, %v1398, 0
    %1401 = vmatpush.msra.mxu0 0.0
    %1402 = vmatpush.msra.mxu0 0.0
    %1403 = vmatpush.msra.mxu0 0.0
    %1404 = vmatpush.msra.mxu0 0.0
    %1405 = vmatpush.msra.mxu0 0.0
    %1406 = vmatpush.msra.mxu0 0.0
    %1407 = vmatpush.msra.mxu0 0.0
    %1408 = vmatpush.msra.mxu0 0.0
    %1409 = vmatpush.msra.mxu0 0.0
    %1410 = vmatpush.msra.mxu0 0.0
    %1411 = vmatpush.msra.mxu0 0.0
    %1412 = vmatpush.msra.mxu0 0.0
    %1413 = vmatpush.msra.mxu0 %v775
    %1414 = vmatpush.msra.mxu0 %v774
    %1415 = vmatpush.msra.mxu0 %v773
    %1416 = vmatpush.msra.mxu0 %v772
    %1417 = vmatmul.f32.gmra.mxu0 %v1399
    %v1418 = vpop.f32.mrf.mxu0
    %v1419 = vadd.f32 %v1394, %v1418
    %1420 = vdwg.mxu0
    %v1421 = vadd.f32 %v1419, %v829
    %v1422 = vxor.u32 %v1421, 2147483648
    %v1423 = vmul.f32 %v1422, 1.442695
    %v1424 = vpow.pop %v1423
    %v1425 = vadd.f32 %v1424, 1.0
    %v1426 = vrcp.pop %v1425
    %v1427 = vmul.f32 %v1425, %v1426
    %v1428 = vsub.f32 1.0, %v1427
    %v1429 = vmul.f32 %v1426, %v1428
    %v1430 = vadd.f32 %v1426, %v1429
    %vm1431 = vweird.f32 %v1425
    %vm1432 = vweird.f32 %v1426
    %vm1433 = vmor %vm1431, %vm1432
    %v1434 = vsel %vm1433, %v1426, %v1430
    %v1435 = vand.u32 2147483647, %v1425
    %vm1436 = vcmp.eq.f32.partialorder %v1435, 8.507059e+37
    %v1437 = vand.u32 %v1425, 2147483648
    %v1438 = vor.u32 1.1754944e-38, %v1437
    %v1439 = vsel %vm1436, %v1438, %v1434
    %v1440 = vmul.f32 1.0, %v1439
    %v1441 = vtanh.pop %v1421
    %v1442 = vmul.f32 %v1440, %v1364
    %1444 = vrot.lane.b32.xlu0 %v1441, 64
    %v1445 = vpop.permute.xlu0 %1444
    %v1447 = vmul.f32 %v1440, %v1445
    %1449 = vrot.lane.b32.xlu0 %v1447, 32
    %v1450 = vpop.permute.xlu0 %1449
    %v1452 = vadd.f32 %v1442, %v1450
    %v1453 = vtanh.pop %v1452
    %1455 = vrot.lane.b32.xlu0 %v1453, 64
    %v1456 = vpop.permute.xlu0 %1455
    %v1458 = vmul.f32 %v1440, %v1456
    %v1459 = vld [vmem:[%s14] sm:$0x1]
    %v1460 = vrot.slane %v955, 7
    %v1462 = vrot.slane %v1038, 6
    %v1464 = vrot.slane %v1121, 5
    %v1466 = vrot.slane %v1204, 4
    %v1468 = vrot.slane %v1287, 3
    %v1470 = vrot.slane %v1370, 2
    %v1473 = vrot.slane %v1458, 1
    %vm1475 = vcmask 1040384
    %v1476 = vsel %vm1475, %v872, %v1460
    %vm1477 = vcmask 1041408
    %v1478 = vsel %vm1477, %v1476, %v1462
    %vm1479 = vcmask 1042432
    %v1480 = vsel %vm1479, %v1478, %v1464
    %vm1481 = vcmask 1043456
    %v1482 = vsel %vm1481, %v1480, %v1466
    %vm1483 = vcmask 1044480
    %v1484 = vsel %vm1483, %v1482, %v1468
    %vm1485 = vcmask 1045504
    %v1486 = vsel %vm1485, %v1484, %v1470
    %vm1487 = vcmask 1046528
    %v1488 = vsel %vm1487, %v1486, %v1473
    %v1489 = vrot.slane %v782, 7
    %v1491 = vsel %vm1475, %v75, %v1489
    %v1492 = vld [vmem:[%s9] sm:$0xff]
    %v1493 = vld [vmem:[%s9 + $0x8] sm:$0xff]
    %v1494 = vld [vmem:[%s9 + $0x10] sm:$0xff]
    %v1495 = vld [vmem:[%s9 + $0x18] sm:$0xff]
    %1497 = vrot.lane.b32.xlu0 %v1488, 32
    %v1498 = vpop.permute.xlu0 %1497
    %v1499 = vsel %vm77, %v1498, 0
    %1501 = vmatpush.msra.mxu0 0.0
    %1502 = vmatpush.msra.mxu0 0.0
    %1503 = vmatpush.msra.mxu0 0.0
    %1504 = vmatpush.msra.mxu0 0.0
    %1505 = vmatpush.msra.mxu0 0.0
    %1506 = vmatpush.msra.mxu0 0.0
    %1507 = vmatpush.msra.mxu0 0.0
    %1508 = vmatpush.msra.mxu0 0.0
    %1509 = vmatpush.msra.mxu0 0.0
    %1510 = vmatpush.msra.mxu0 0.0
    %1511 = vmatpush.msra.mxu0 0.0
    %1512 = vmatpush.msra.mxu0 0.0
    %1513 = vmatpush.msra.mxu0 %v1495
    %1514 = vmatpush.msra.mxu0 %v1494
    %1515 = vmatpush.msra.mxu0 %v1493
    %1516 = vmatpush.msra.mxu0 %v1492
    %1517 = vmatmul.f32.gmra.mxu0 %v1499
    %v1518 = vpop.f32.mrf.mxu0
    %v1519 = vadd.f32 0.0, %v1518
    %1520 = vdwg.mxu0
    %v1521 = vld [vmem:[%s10] sm:$0xff]
    %v1522 = vld [vmem:[%s10 + $0x8] sm:$0xff]
    %v1523 = vld [vmem:[%s10 + $0x10] sm:$0xff]
    %v1524 = vld [vmem:[%s10 + $0x18] sm:$0xff]
    %v1526 = vsel %vm77, %v1491, 0
    %1528 = vmatpush.msra.mxu0 0.0
    %1529 = vmatpush.msra.mxu0 0.0
    %1530 = vmatpush.msra.mxu0 0.0
    %1531 = vmatpush.msra.mxu0 0.0
    %1532 = vmatpush.msra.mxu0 0.0
    %1533 = vmatpush.msra.mxu0 0.0
    %1534 = vmatpush.msra.mxu0 0.0
    %1535 = vmatpush.msra.mxu0 0.0
    %1536 = vmatpush.msra.mxu0 0.0
    %1537 = vmatpush.msra.mxu0 0.0
    %1538 = vmatpush.msra.mxu0 0.0
    %1539 = vmatpush.msra.mxu0 0.0
    %1540 = vmatpush.msra.mxu0 %v1524
    %1541 = vmatpush.msra.mxu0 %v1523
    %1542 = vmatpush.msra.mxu0 %v1522
    %1543 = vmatpush.msra.mxu0 %v1521
    %1544 = vmatmul.f32.gmra.mxu0 %v1526
    %v1545 = vpop.f32.mrf.mxu0
    %v1546 = vadd.f32 0.0, %v1545
    %1547 = vdwg.mxu0
    %v1548 = vld [vmem:[%s11] sm:$0xff]
    %v1549 = vld [vmem:[%s11 + $0x8] sm:$0xff]
    %v1550 = vld [vmem:[%s11 + $0x10] sm:$0xff]
    %v1551 = vld [vmem:[%s11 + $0x18] sm:$0xff]
    %1552 = vmatpush.msra.mxu0 0.0
    %1553 = vmatpush.msra.mxu0 0.0
    %1554 = vmatpush.msra.mxu0 0.0
    %1555 = vmatpush.msra.mxu0 0.0
    %1556 = vmatpush.msra.mxu0 0.0
    %1557 = vmatpush.msra.mxu0 0.0
    %1558 = vmatpush.msra.mxu0 0.0
    %1559 = vmatpush.msra.mxu0 0.0
    %1560 = vmatpush.msra.mxu0 0.0
    %1561 = vmatpush.msra.mxu0 0.0
    %1562 = vmatpush.msra.mxu0 0.0
    %1563 = vmatpush.msra.mxu0 0.0
    %1564 = vmatpush.msra.mxu0 %v1551
    %1565 = vmatpush.msra.mxu0 %v1550
    %1566 = vmatpush.msra.mxu0 %v1549
    %1567 = vmatpush.msra.mxu0 %v1548
    %1568 = vmatmul.f32.gmra.mxu0 %v1526
    %v1569 = vpop.f32.mrf.mxu0
    %v1570 = vadd.f32 0.0, %v1569
    %1571 = vdwg.mxu0
    %vm1572 = vcmask 64512
    %v1574 = vsel %vm1572, %v1519, 0
    %v1577 = vsel %vm1572, %v1546, 0
    %1579 = vmatpush.xpose.msra.mxu0 0.0
    %1580 = vmatpush.xpose.msra.mxu0 0.0
    %1581 = vmatpush.xpose.msra.mxu0 0.0
    %1582 = vmatpush.xpose.msra.mxu0 0.0
    %1583 = vmatpush.xpose.msra.mxu0 0.0
    %1584 = vmatpush.xpose.msra.mxu0 0.0
    %1585 = vmatpush.xpose.msra.mxu0 0.0
    %1586 = vmatpush.xpose.msra.mxu0 0.0
    %1587 = vmatpush.xpose.msra.mxu0 0.0
    %1588 = vmatpush.xpose.msra.mxu0 0.0
    %1589 = vmatpush.xpose.msra.mxu0 0.0
    %1590 = vmatpush.xpose.msra.mxu0 0.0
    %1591 = vmatpush.xpose.msra.mxu0 0.0
    %1592 = vmatpush.xpose.msra.mxu0 0.0
    %1593 = vmatpush.xpose.msra.mxu0 0.0
    %1594 = vmatpush.xpose.msra.mxu0 %v1577
    %1595 = vmatmul.f32.gmra.mxu0 %v1574
    %v1596 = vpop.f32.mrf.mxu0
    %v1597 = vadd.f32 0.0, %v1596
    %1598 = vdwg.mxu0
    %vm1599 = vcmask 15360
    %v1600 = vsel %vm1599, %v1597, -inf
    %1601 = vmax.xlane.f32.xlu0 %v1600
    %v1602 = vpop.xlane.xlu0 %1601
    %v1603 = vsub.f32 %v1597, %v1602
    %v1604 = vmul.f32 %v1603, 1.442695
    %v1605 = vpow.pop %v1604
    %v1606 = vsel %vm1599, %v1605, 0.0
    %1607 = vadd.xlane.f32.xlu0 %v1606
    %v1608 = vpop.xlane.xlu0 %1607
    %v1609 = vrcp.pop %v1608
    %v1610 = vmul.f32 %v1605, %v1609
    %1611 = vst.msk [vmem:[%s16] sm:$0xff] %vm1599, %v1610
    %v1613 = vsel %vm1599, %v1610, 0
    %v1616 = vsel %vm1477, %v1570, 0
    %1618 = vmatpush.msra.mxu0 0.0
    %1619 = vmatpush.msra.mxu0 0.0
    %1620 = vmatpush.msra.mxu0 0.0
    %1621 = vmatpush.msra.mxu0 0.0
    %1622 = vmatpush.msra.mxu0 0.0
    %1623 = vmatpush.msra.mxu0 0.0
    %1624 = vmatpush.msra.mxu0 0.0
    %1625 = vmatpush.msra.mxu0 0.0
    %1626 = vmatpush.msra.mxu0 0.0
    %1627 = vmatpush.msra.mxu0 0.0
    %1628 = vmatpush.msra.mxu0 0.0
    %1629 = vmatpush.msra.mxu0 0.0
    %1630 = vmatpush.msra.mxu0 0.0
    %1631 = vmatpush.msra.mxu0 0.0
    %1632 = vmatpush.msra.mxu0 0.0
    %1633 = vmatpush.msra.mxu0 %v1616
    %1634 = vmatmul.f32.gmra.mxu0 %v1613
    %v1635 = vpop.f32.mrf.mxu0
    %v1636 = vadd.f32 0.0, %v1635
    %1637 = vdwg.mxu0
    %v1638 = vld [vmem:[%s9] sm:$0xff]
    %v1639 = vld [vmem:[%s9 + $0x8] sm:$0xff]
    %v1640 = vld [vmem:[%s9 + $0x10] sm:$0xff]
    %v1641 = vld [vmem:[%s9 + $0x18] sm:$0xff]
    %1646 = vrot.lane.b32.xlu0 %v1638, 120
    %v1647 = vpop.permute.xlu0 %1646
    %1648 = vrot.lane.b32.xlu0 %v1639, 120
    %v1649 = vpop.permute.xlu0 %1648
    %1650 = vrot.lane.b32.xlu0 %v1640, 120
    %v1651 = vpop.permute.xlu0 %1650
    %1652 = vrot.lane.b32.xlu0 %v1641, 120
    %v1653 = vpop.permute.xlu0 %1652
    %1658 = vmatpush.msra.mxu0 0.0
    %1659 = vmatpush.msra.mxu0 0.0
    %1660 = vmatpush.msra.mxu0 0.0
    %1661 = vmatpush.msra.mxu0 0.0
    %1662 = vmatpush.msra.mxu0 0.0
    %1663 = vmatpush.msra.mxu0 0.0
    %1664 = vmatpush.msra.mxu0 0.0
    %1665 = vmatpush.msra.mxu0 0.0
    %1666 = vmatpush.msra.mxu0 0.0
    %1667 = vmatpush.msra.mxu0 0.0
    %1668 = vmatpush.msra.mxu0 0.0
    %1669 = vmatpush.msra.mxu0 0.0
    %1670 = vmatpush.msra.mxu0 %v1653
    %1671 = vmatpush.msra.mxu0 %v1651
    %1672 = vmatpush.msra.mxu0 %v1649
    %1673 = vmatpush.msra.mxu0 %v1647
    %1674 = vmatmul.f32.gmra.mxu0 %v1499
    %v1675 = vpop.f32.mrf.mxu0
    %v1676 = vadd.f32 0.0, %v1675
    %1677 = vdwg.mxu0
    %v1678 = vld [vmem:[%s10] sm:$0xff]
    %v1679 = vld [vmem:[%s10 + $0x8] sm:$0xff]
    %v1680 = vld [vmem:[%s10 + $0x10] sm:$0xff]
    %v1681 = vld [vmem:[%s10 + $0x18] sm:$0xff]
    %1686 = vrot.lane.b32.xlu0 %v1678, 120
    %v1687 = vpop.permute.xlu0 %1686
    %1688 = vrot.lane.b32.xlu0 %v1679, 120
    %v1689 = vpop.permute.xlu0 %1688
    %1690 = vrot.lane.b32.xlu0 %v1680, 120
    %v1691 = vpop.permute.xlu0 %1690
    %1692 = vrot.lane.b32.xlu0 %v1681, 120
    %v1693 = vpop.permute.xlu0 %1692
    %1698 = vmatpush.msra.mxu0 0.0
    %1699 = vmatpush.msra.mxu0 0.0
    %1700 = vmatpush.msra.mxu0 0.0
    %1701 = vmatpush.msra.mxu0 0.0
    %1702 = vmatpush.msra.mxu0 0.0
    %1703 = vmatpush.msra.mxu0 0.0
    %1704 = vmatpush.msra.mxu0 0.0
    %1705 = vmatpush.msra.mxu0 0.0
    %1706 = vmatpush.msra.mxu0 0.0
    %1707 = vmatpush.msra.mxu0 0.0
    %1708 = vmatpush.msra.mxu0 0.0
    %1709 = vmatpush.msra.mxu0 0.0
    %1710 = vmatpush.msra.mxu0 %v1693
    %1711 = vmatpush.msra.mxu0 %v1691
    %1712 = vmatpush.msra.mxu0 %v1689
    %1713 = vmatpush.msra.mxu0 %v1687
    %1714 = vmatmul.f32.gmra.mxu0 %v1526
    %v1715 = vpop.f32.mrf.mxu0
    %v1716 = vadd.f32 0.0, %v1715
    %1717 = vdwg.mxu0
    %v1718 = vld [vmem:[%s11] sm:$0xff]
    %v1719 = vld [vmem:[%s11 + $0x8] sm:$0xff]
    %v1720 = vld [vmem:[%s11 + $0x10] sm:$0xff]
    %v1721 = vld [vmem:[%s11 + $0x18] sm:$0xff]
    %1726 = vrot.lane.b32.xlu0 %v1718, 120
    %v1727 = vpop.permute.xlu0 %1726
    %1728 = vrot.lane.b32.xlu0 %v1719, 120
    %v1729 = vpop.permute.xlu0 %1728
    %1730 = vrot.lane.b32.xlu0 %v1720, 120
    %v1731 = vpop.permute.xlu0 %1730
    %1732 = vrot.lane.b32.xlu0 %v1721, 120
    %v1733 = vpop.permute.xlu0 %1732
    %1738 = vmatpush.msra.mxu0 0.0
    %1739 = vmatpush.msra.mxu0 0.0
    %1740 = vmatpush.msra.mxu0 0.0
    %1741 = vmatpush.msra.mxu0 0.0
    %1742 = vmatpush.msra.mxu0 0.0
    %1743 = vmatpush.msra.mxu0 0.0
    %1744 = vmatpush.msra.mxu0 0.0
    %1745 = vmatpush.msra.mxu0 0.0
    %1746 = vmatpush.msra.mxu0 0.0
    %1747 = vmatpush.msra.mxu0 0.0
    %1748 = vmatpush.msra.mxu0 0.0
    %1749 = vmatpush.msra.mxu0 0.0
    %1750 = vmatpush.msra.mxu0 %v1733
    %1751 = vmatpush.msra.mxu0 %v1731
    %1752 = vmatpush.msra.mxu0 %v1729
    %1753 = vmatpush.msra.mxu0 %v1727
    %1754 = vmatmul.f32.gmra.mxu0 %v1526
    %v1755 = vpop.f32.mrf.mxu0
    %v1756 = vadd.f32 0.0, %v1755
    %1757 = vdwg.mxu0
    %v1759 = vsel %vm1572, %v1676, 0
    %v1762 = vsel %vm1572, %v1716, 0
    %1764 = vmatpush.xpose.msra.mxu0 0.0
    %1765 = vmatpush.xpose.msra.mxu0 0.0
    %1766 = vmatpush.xpose.msra.mxu0 0.0
    %1767 = vmatpush.xpose.msra.mxu0 0.0
    %1768 = vmatpush.xpose.msra.mxu0 0.0
    %1769 = vmatpush.xpose.msra.mxu0 0.0
    %1770 = vmatpush.xpose.msra.mxu0 0.0
    %1771 = vmatpush.xpose.msra.mxu0 0.0
    %1772 = vmatpush.xpose.msra.mxu0 0.0
    %1773 = vmatpush.xpose.msra.mxu0 0.0
    %1774 = vmatpush.xpose.msra.mxu0 0.0
    %1775 = vmatpush.xpose.msra.mxu0 0.0
    %1776 = vmatpush.xpose.msra.mxu0 0.0
    %1777 = vmatpush.xpose.msra.mxu0 0.0
    %1778 = vmatpush.xpose.msra.mxu0 0.0
    %1779 = vmatpush.xpose.msra.mxu0 %v1762
    %1780 = vmatmul.f32.gmra.mxu0 %v1759
    %v1781 = vpop.f32.mrf.mxu0
    %v1782 = vadd.f32 0.0, %v1781
    %1783 = vdwg.mxu0
    %v1784 = vsel %vm1599, %v1782, -inf
    %1785 = vmax.xlane.f32.xlu0 %v1784
    %v1786 = vpop.xlane.xlu0 %1785
    %v1787 = vsub.f32 %v1782, %v1786
    %v1788 = vmul.f32 %v1787, 1.442695
    %v1789 = vpow.pop %v1788
    %v1790 = vsel %vm1599, %v1789, 0.0
    %1791 = vadd.xlane.f32.xlu0 %v1790
    %v1792 = vpop.xlane.xlu0 %1791
    %v1793 = vrcp.pop %v1792
    %v1794 = vmul.f32 %v1789, %v1793
    %s1795 = scalar_lea.vmem %s16, 8
    %1796 = vst.msk [vmem:[%s1795] sm:$0xff] %vm1599, %v1794
    %v1798 = vsel %vm1599, %v1794, 0
    %v1801 = vsel %vm1477, %v1756, 0
    %1803 = vmatpush.msra.mxu0 0.0
    %1804 = vmatpush.msra.mxu0 0.0
    %1805 = vmatpush.msra.mxu0 0.0
    %1806 = vmatpush.msra.mxu0 0.0
    %1807 = vmatpush.msra.mxu0 0.0
    %1808 = vmatpush.msra.mxu0 0.0
    %1809 = vmatpush.msra.mxu0 0.0
    %1810 = vmatpush.msra.mxu0 0.0
    %1811 = vmatpush.msra.mxu0 0.0
    %1812 = vmatpush.msra.mxu0 0.0
    %1813 = vmatpush.msra.mxu0 0.0
    %1814 = vmatpush.msra.mxu0 0.0
    %1815 = vmatpush.msra.mxu0 0.0
    %1816 = vmatpush.msra.mxu0 0.0
    %1817 = vmatpush.msra.mxu0 0.0
    %1818 = vmatpush.msra.mxu0 %v1801
    %1819 = vmatmul.f32.gmra.mxu0 %v1798
    %v1820 = vpop.f32.mrf.mxu0
    %v1821 = vadd.f32 0.0, %v1820
    %1822 = vdwg.mxu0
    %v1823 = vld [vmem:[%s9] sm:$0xff]
    %v1824 = vld [vmem:[%s9 + $0x8] sm:$0xff]
    %v1825 = vld [vmem:[%s9 + $0x10] sm:$0xff]
    %v1826 = vld [vmem:[%s9 + $0x18] sm:$0xff]
    %1831 = vrot.lane.b32.xlu0 %v1823, 112
    %v1832 = vpop.permute.xlu0 %1831
    %1833 = vrot.lane.b32.xlu0 %v1824, 112
    %v1834 = vpop.permute.xlu0 %1833
    %1835 = vrot.lane.b32.xlu0 %v1825, 112
    %v1836 = vpop.permute.xlu0 %1835
    %1837 = vrot.lane.b32.xlu0 %v1826, 112
    %v1838 = vpop.permute.xlu0 %1837
    %1843 = vmatpush.msra.mxu0 0.0
    %1844 = vmatpush.msra.mxu0 0.0
    %1845 = vmatpush.msra.mxu0 0.0
    %1846 = vmatpush.msra.mxu0 0.0
    %1847 = vmatpush.msra.mxu0 0.0
    %1848 = vmatpush.msra.mxu0 0.0
    %1849 = vmatpush.msra.mxu0 0.0
    %1850 = vmatpush.msra.mxu0 0.0
    %1851 = vmatpush.msra.mxu0 0.0
    %1852 = vmatpush.msra.mxu0 0.0
    %1853 = vmatpush.msra.mxu0 0.0
    %1854 = vmatpush.msra.mxu0 0.0
    %1855 = vmatpush.msra.mxu0 %v1838
    %1856 = vmatpush.msra.mxu0 %v1836
    %1857 = vmatpush.msra.mxu0 %v1834
    %1858 = vmatpush.msra.mxu0 %v1832
    %1859 = vmatmul.f32.gmra.mxu0 %v1499
    %v1860 = vpop.f32.mrf.mxu0
    %v1861 = vadd.f32 0.0, %v1860
    %1862 = vdwg.mxu0
    %v1863 = vld [vmem:[%s10] sm:$0xff]
    %v1864 = vld [vmem:[%s10 + $0x8] sm:$0xff]
    %v1865 = vld [vmem:[%s10 + $0x10] sm:$0xff]
    %v1866 = vld [vmem:[%s10 + $0x18] sm:$0xff]
    %1871 = vrot.lane.b32.xlu0 %v1863, 112
    %v1872 = vpop.permute.xlu0 %1871
    %1873 = vrot.lane.b32.xlu0 %v1864, 112
    %v1874 = vpop.permute.xlu0 %1873
    %1875 = vrot.lane.b32.xlu0 %v1865, 112
    %v1876 = vpop.permute.xlu0 %1875
    %1877 = vrot.lane.b32.xlu0 %v1866, 112
    %v1878 = vpop.permute.xlu0 %1877
    %1883 = vmatpush.msra.mxu0 0.0
    %1884 = vmatpush.msra.mxu0 0.0
    %1885 = vmatpush.msra.mxu0 0.0
    %1886 = vmatpush.msra.mxu0 0.0
    %1887 = vmatpush.msra.mxu0 0.0
    %1888 = vmatpush.msra.mxu0 0.0
    %1889 = vmatpush.msra.mxu0 0.0
    %1890 = vmatpush.msra.mxu0 0.0
    %1891 = vmatpush.msra.mxu0 0.0
    %1892 = vmatpush.msra.mxu0 0.0
    %1893 = vmatpush.msra.mxu0 0.0
    %1894 = vmatpush.msra.mxu0 0.0
    %1895 = vmatpush.msra.mxu0 %v1878
    %1896 = vmatpush.msra.mxu0 %v1876
    %1897 = vmatpush.msra.mxu0 %v1874
    %1898 = vmatpush.msra.mxu0 %v1872
    %1899 = vmatmul.f32.gmra.mxu0 %v1526
    %v1900 = vpop.f32.mrf.mxu0
    %v1901 = vadd.f32 0.0, %v1900
    %1902 = vdwg.mxu0
    %v1903 = vld [vmem:[%s11] sm:$0xff]
    %v1904 = vld [vmem:[%s11 + $0x8] sm:$0xff]
    %v1905 = vld [vmem:[%s11 + $0x10] sm:$0xff]
    %v1906 = vld [vmem:[%s11 + $0x18] sm:$0xff]
    %1911 = vrot.lane.b32.xlu0 %v1903, 112
    %v1912 = vpop.permute.xlu0 %1911
    %1913 = vrot.lane.b32.xlu0 %v1904, 112
    %v1914 = vpop.permute.xlu0 %1913
    %1915 = vrot.lane.b32.xlu0 %v1905, 112
    %v1916 = vpop.permute.xlu0 %1915
    %1917 = vrot.lane.b32.xlu0 %v1906, 112
    %v1918 = vpop.permute.xlu0 %1917
    %1923 = vmatpush.msra.mxu0 0.0
    %1924 = vmatpush.msra.mxu0 0.0
    %1925 = vmatpush.msra.mxu0 0.0
    %1926 = vmatpush.msra.mxu0 0.0
    %1927 = vmatpush.msra.mxu0 0.0
    %1928 = vmatpush.msra.mxu0 0.0
    %1929 = vmatpush.msra.mxu0 0.0
    %1930 = vmatpush.msra.mxu0 0.0
    %1931 = vmatpush.msra.mxu0 0.0
    %1932 = vmatpush.msra.mxu0 0.0
    %1933 = vmatpush.msra.mxu0 0.0
    %1934 = vmatpush.msra.mxu0 0.0
    %1935 = vmatpush.msra.mxu0 %v1918
    %1936 = vmatpush.msra.mxu0 %v1916
    %1937 = vmatpush.msra.mxu0 %v1914
    %1938 = vmatpush.msra.mxu0 %v1912
    %1939 = vmatmul.f32.gmra.mxu0 %v1526
    %v1940 = vpop.f32.mrf.mxu0
    %v1941 = vadd.f32 0.0, %v1940
    %1942 = vdwg.mxu0
    %v1944 = vsel %vm1572, %v1861, 0
    %v1947 = vsel %vm1572, %v1901, 0
    %1949 = vmatpush.xpose.msra.mxu0 0.0
    %1950 = vmatpush.xpose.msra.mxu0 0.0
    %1951 = vmatpush.xpose.msra.mxu0 0.0
    %1952 = vmatpush.xpose.msra.mxu0 0.0
    %1953 = vmatpush.xpose.msra.mxu0 0.0
    %1954 = vmatpush.xpose.msra.mxu0 0.0
    %1955 = vmatpush.xpose.msra.mxu0 0.0
    %1956 = vmatpush.xpose.msra.mxu0 0.0
    %1957 = vmatpush.xpose.msra.mxu0 0.0
    %1958 = vmatpush.xpose.msra.mxu0 0.0
    %1959 = vmatpush.xpose.msra.mxu0 0.0
    %1960 = vmatpush.xpose.msra.mxu0 0.0
    %1961 = vmatpush.xpose.msra.mxu0 0.0
    %1962 = vmatpush.xpose.msra.mxu0 0.0
    %1963 = vmatpush.xpose.msra.mxu0 0.0
    %1964 = vmatpush.xpose.msra.mxu0 %v1947
    %1965 = vmatmul.f32.gmra.mxu0 %v1944
    %v1966 = vpop.f32.mrf.mxu0
    %v1967 = vadd.f32 0.0, %v1966
    %1968 = vdwg.mxu0
    %v1969 = vsel %vm1599, %v1967, -inf
    %1970 = vmax.xlane.f32.xlu0 %v1969
    %v1971 = vpop.xlane.xlu0 %1970
    %v1972 = vsub.f32 %v1967, %v1971
    %v1973 = vmul.f32 %v1972, 1.442695
    %v1974 = vpow.pop %v1973
    %v1975 = vsel %vm1599, %v1974, 0.0
    %1976 = vadd.xlane.f32.xlu0 %v1975
    %v1977 = vpop.xlane.xlu0 %1976
    %v1978 = vrcp.pop %v1977
    %v1979 = vmul.f32 %v1974, %v1978
    %s1980 = scalar_lea.vmem %s16, 16
    %1981 = vst.msk [vmem:[%s1980] sm:$0xff] %vm1599, %v1979
    %v1983 = vsel %vm1599, %v1979, 0
    %v1986 = vsel %vm1477, %v1941, 0
    %1988 = vmatpush.msra.mxu0 0.0
    %1989 = vmatpush.msra.mxu0 0.0
    %1990 = vmatpush.msra.mxu0 0.0
    %1991 = vmatpush.msra.mxu0 0.0
    %1992 = vmatpush.msra.mxu0 0.0
    %1993 = vmatpush.msra.mxu0 0.0
    %1994 = vmatpush.msra.mxu0 0.0
    %1995 = vmatpush.msra.mxu0 0.0
    %1996 = vmatpush.msra.mxu0 0.0
    %1997 = vmatpush.msra.mxu0 0.0
    %1998 = vmatpush.msra.mxu0 0.0
    %1999 = vmatpush.msra.mxu0 0.0
    %2000 = vmatpush.msra.mxu0 0.0
    %2001 = vmatpush.msra.mxu0 0.0
    %2002 = vmatpush.msra.mxu0 0.0
    %2003 = vmatpush.msra.mxu0 %v1986
    %2004 = vmatmul.f32.gmra.mxu0 %v1983
    %v2005 = vpop.f32.mrf.mxu0
    %v2006 = vadd.f32 0.0, %v2005
    %2007 = vdwg.mxu0
    %v2008 = vld [vmem:[%s9] sm:$0xff]
    %v2009 = vld [vmem:[%s9 + $0x8] sm:$0xff]
    %v2010 = vld [vmem:[%s9 + $0x10] sm:$0xff]
    %v2011 = vld [vmem:[%s9 + $0x18] sm:$0xff]
    %2016 = vrot.lane.b32.xlu0 %v2008, 104
    %v2017 = vpop.permute.xlu0 %2016
    %2018 = vrot.lane.b32.xlu0 %v2009, 104
    %v2019 = vpop.permute.xlu0 %2018
    %2020 = vrot.lane.b32.xlu0 %v2010, 104
    %v2021 = vpop.permute.xlu0 %2020
    %2022 = vrot.lane.b32.xlu0 %v2011, 104
    %v2023 = vpop.permute.xlu0 %2022
    %2028 = vmatpush.msra.mxu0 0.0
    %2029 = vmatpush.msra.mxu0 0.0
    %2030 = vmatpush.msra.mxu0 0.0
    %2031 = vmatpush.msra.mxu0 0.0
    %2032 = vmatpush.msra.mxu0 0.0
    %2033 = vmatpush.msra.mxu0 0.0
    %2034 = vmatpush.msra.mxu0 0.0
    %2035 = vmatpush.msra.mxu0 0.0
    %2036 = vmatpush.msra.mxu0 0.0
    %2037 = vmatpush.msra.mxu0 0.0
    %2038 = vmatpush.msra.mxu0 0.0
    %2039 = vmatpush.msra.mxu0 0.0
    %2040 = vmatpush.msra.mxu0 %v2023
    %2041 = vmatpush.msra.mxu0 %v2021
    %2042 = vmatpush.msra.mxu0 %v2019
    %2043 = vmatpush.msra.mxu0 %v2017
    %2044 = vmatmul.f32.gmra.mxu0 %v1499
    %v2045 = vpop.f32.mrf.mxu0
    %v2046 = vadd.f32 0.0, %v2045
    %2047 = vdwg.mxu0
    %v2048 = vld [vmem:[%s10] sm:$0xff]
    %v2049 = vld [vmem:[%s10 + $0x8] sm:$0xff]
    %v2050 = vld [vmem:[%s10 + $0x10] sm:$0xff]
    %v2051 = vld [vmem:[%s10 + $0x18] sm:$0xff]
    %2056 = vrot.lane.b32.xlu0 %v2048, 104
    %v2057 = vpop.permute.xlu0 %2056
    %2058 = vrot.lane.b32.xlu0 %v2049, 104
    %v2059 = vpop.permute.xlu0 %2058
    %2060 = vrot.lane.b32.xlu0 %v2050, 104
    %v2061 = vpop.permute.xlu0 %2060
    %2062 = vrot.lane.b32.xlu0 %v2051, 104
    %v2063 = vpop.permute.xlu0 %2062
    %2068 = vmatpush.msra.mxu0 0.0
    %2069 = vmatpush.msra.mxu0 0.0
    %2070 = vmatpush.msra.mxu0 0.0
    %2071 = vmatpush.msra.mxu0 0.0
    %2072 = vmatpush.msra.mxu0 0.0
    %2073 = vmatpush.msra.mxu0 0.0
    %2074 = vmatpush.msra.mxu0 0.0
    %2075 = vmatpush.msra.mxu0 0.0
    %2076 = vmatpush.msra.mxu0 0.0
    %2077 = vmatpush.msra.mxu0 0.0
    %2078 = vmatpush.msra.mxu0 0.0
    %2079 = vmatpush.msra.mxu0 0.0
    %2080 = vmatpush.msra.mxu0 %v2063
    %2081 = vmatpush.msra.mxu0 %v2061
    %2082 = vmatpush.msra.mxu0 %v2059
    %2083 = vmatpush.msra.mxu0 %v2057
    %2084 = vmatmul.f32.gmra.mxu0 %v1526
    %v2085 = vpop.f32.mrf.mxu0
    %v2086 = vadd.f32 0.0, %v2085
    %2087 = vdwg.mxu0
    %v2088 = vld [vmem:[%s11] sm:$0xff]
    %v2089 = vld [vmem:[%s11 + $0x8] sm:$0xff]
    %v2090 = vld [vmem:[%s11 + $0x10] sm:$0xff]
    %v2091 = vld [vmem:[%s11 + $0x18] sm:$0xff]
    %2096 = vrot.lane.b32.xlu0 %v2088, 104
    %v2097 = vpop.permute.xlu0 %2096
    %2098 = vrot.lane.b32.xlu0 %v2089, 104
    %v2099 = vpop.permute.xlu0 %2098
    %2100 = vrot.lane.b32.xlu0 %v2090, 104
    %v2101 = vpop.permute.xlu0 %2100
    %2102 = vrot.lane.b32.xlu0 %v2091, 104
    %v2103 = vpop.permute.xlu0 %2102
    %2108 = vmatpush.msra.mxu0 0.0
    %2109 = vmatpush.msra.mxu0 0.0
    %2110 = vmatpush.msra.mxu0 0.0
    %2111 = vmatpush.msra.mxu0 0.0
    %2112 = vmatpush.msra.mxu0 0.0
    %2113 = vmatpush.msra.mxu0 0.0
    %2114 = vmatpush.msra.mxu0 0.0
    %2115 = vmatpush.msra.mxu0 0.0
    %2116 = vmatpush.msra.mxu0 0.0
    %2117 = vmatpush.msra.mxu0 0.0
    %2118 = vmatpush.msra.mxu0 0.0
    %2119 = vmatpush.msra.mxu0 0.0
    %2120 = vmatpush.msra.mxu0 %v2103
    %2121 = vmatpush.msra.mxu0 %v2101
    %2122 = vmatpush.msra.mxu0 %v2099
    %2123 = vmatpush.msra.mxu0 %v2097
    %2124 = vmatmul.f32.gmra.mxu0 %v1526
    %v2125 = vpop.f32.mrf.mxu0
    %v2126 = vadd.f32 0.0, %v2125
    %2127 = vdwg.mxu0
    %v2129 = vsel %vm1572, %v2046, 0
    %v2132 = vsel %vm1572, %v2086, 0
    %2134 = vmatpush.xpose.msra.mxu0 0.0
    %2135 = vmatpush.xpose.msra.mxu0 0.0
    %2136 = vmatpush.xpose.msra.mxu0 0.0
    %2137 = vmatpush.xpose.msra.mxu0 0.0
    %2138 = vmatpush.xpose.msra.mxu0 0.0
    %2139 = vmatpush.xpose.msra.mxu0 0.0
    %2140 = vmatpush.xpose.msra.mxu0 0.0
    %2141 = vmatpush.xpose.msra.mxu0 0.0
    %2142 = vmatpush.xpose.msra.mxu0 0.0
    %2143 = vmatpush.xpose.msra.mxu0 0.0
    %2144 = vmatpush.xpose.msra.mxu0 0.0
    %2145 = vmatpush.xpose.msra.mxu0 0.0
    %2146 = vmatpush.xpose.msra.mxu0 0.0
    %2147 = vmatpush.xpose.msra.mxu0 0.0
    %2148 = vmatpush.xpose.msra.mxu0 0.0
    %2149 = vmatpush.xpose.msra.mxu0 %v2132
    %2150 = vmatmul.f32.gmra.mxu0 %v2129
    %v2151 = vpop.f32.mrf.mxu0
    %v2152 = vadd.f32 0.0, %v2151
    %2153 = vdwg.mxu0
    %v2154 = vsel %vm1599, %v2152, -inf
    %2155 = vmax.xlane.f32.xlu0 %v2154
    %v2156 = vpop.xlane.xlu0 %2155
    %v2157 = vsub.f32 %v2152, %v2156
    %v2158 = vmul.f32 %v2157, 1.442695
    %v2159 = vpow.pop %v2158
    %v2160 = vsel %vm1599, %v2159, 0.0
    %2161 = vadd.xlane.f32.xlu0 %v2160
    %v2162 = vpop.xlane.xlu0 %2161
    %v2163 = vrcp.pop %v2162
    %v2164 = vmul.f32 %v2159, %v2163
    %s2165 = scalar_lea.vmem %s16, 24
    %2166 = vst.msk [vmem:[%s2165] sm:$0xff] %vm1599, %v2164
    %v2168 = vsel %vm1599, %v2164, 0
    %v2171 = vsel %vm1477, %v2126, 0
    %2173 = vmatpush.msra.mxu0 0.0
    %2174 = vmatpush.msra.mxu0 0.0
    %2175 = vmatpush.msra.mxu0 0.0
    %2176 = vmatpush.msra.mxu0 0.0
    %2177 = vmatpush.msra.mxu0 0.0
    %2178 = vmatpush.msra.mxu0 0.0
    %2179 = vmatpush.msra.mxu0 0.0
    %2180 = vmatpush.msra.mxu0 0.0
    %2181 = vmatpush.msra.mxu0 0.0
    %2182 = vmatpush.msra.mxu0 0.0
    %2183 = vmatpush.msra.mxu0 0.0
    %2184 = vmatpush.msra.mxu0 0.0
    %2185 = vmatpush.msra.mxu0 0.0
    %2186 = vmatpush.msra.mxu0 0.0
    %2187 = vmatpush.msra.mxu0 0.0
    %2188 = vmatpush.msra.mxu0 %v2171
    %2189 = vmatmul.f32.gmra.mxu0 %v2168
    %v2190 = vpop.f32.mrf.mxu0
    %v2191 = vadd.f32 0.0, %v2190
    %2192 = vdwg.mxu0
    %2194 = vrot.lane.b32.xlu0 %v1821, 8
    %v2195 = vpop.permute.xlu0 %2194
    %2198 = vrot.lane.b32.xlu0 %v2006, 16
    %v2199 = vpop.permute.xlu0 %2198
    %2202 = vrot.lane.b32.xlu0 %v2191, 24
    %v2203 = vpop.permute.xlu0 %2202
    %v2205 = vsel %vm1572, %v1636, %v2195
    %v2206 = vsel %vm101, %v2205, %v2199
    %vm2207 = vcmask 195584
    %v2208 = vsel %vm2207, %v2206, %v2203
    %v2209 = vld [vmem:[%s12] sm:$0xff]
    %v2210 = vld [vmem:[%s12 + $0x8] sm:$0xff]
    %v2211 = vld [vmem:[%s12 + $0x10] sm:$0xff]
    %v2212 = vld [vmem:[%s12 + $0x18] sm:$0xff]
    %v2214 = vsel %vm77, %v2208, 0
    %2216 = vmatpush.msra.mxu0 0.0
    %2217 = vmatpush.msra.mxu0 0.0
    %2218 = vmatpush.msra.mxu0 0.0
    %2219 = vmatpush.msra.mxu0 0.0
    %2220 = vmatpush.msra.mxu0 0.0
    %2221 = vmatpush.msra.mxu0 0.0
    %2222 = vmatpush.msra.mxu0 0.0
    %2223 = vmatpush.msra.mxu0 0.0
    %2224 = vmatpush.msra.mxu0 0.0
    %2225 = vmatpush.msra.mxu0 0.0
    %2226 = vmatpush.msra.mxu0 0.0
    %2227 = vmatpush.msra.mxu0 0.0
    %2228 = vmatpush.msra.mxu0 %v2212
    %2229 = vmatpush.msra.mxu0 %v2211
    %2230 = vmatpush.msra.mxu0 %v2210
    %2231 = vmatpush.msra.mxu0 %v2209
    %2232 = vmatmul.f32.gmra.mxu0 %v2214
    %v2233 = vpop.f32.mrf.mxu0
    %v2234 = vadd.f32 0.0, %v2233
    %2235 = vdwg.mxu0
    %v2236 = vmax.f32 %v2234, 0.0
    %v2237 = vmax.f32 %v872, 0.0
    %v2238 = vld [vmem:[%s13] sm:$0xff]
    %v2239 = vld [vmem:[%s13 + $0x8] sm:$0xff]
    %v2240 = vld [vmem:[%s13 + $0x10] sm:$0xff]
    %v2241 = vld [vmem:[%s13 + $0x18] sm:$0xff]
    %v2243 = vsel %vm77, %v2236, 0
    %2245 = vmatpush.msra.mxu0 0.0
    %2246 = vmatpush.msra.mxu0 0.0
    %2247 = vmatpush.msra.mxu0 0.0
    %2248 = vmatpush.msra.mxu0 0.0
    %2249 = vmatpush.msra.mxu0 0.0
    %2250 = vmatpush.msra.mxu0 0.0
    %2251 = vmatpush.msra.mxu0 0.0
    %2252 = vmatpush.msra.mxu0 0.0
    %2253 = vmatpush.msra.mxu0 0.0
    %2254 = vmatpush.msra.mxu0 0.0
    %2255 = vmatpush.msra.mxu0 0.0
    %2256 = vmatpush.msra.mxu0 0.0
    %2257 = vmatpush.msra.mxu0 %v2241
    %2258 = vmatpush.msra.mxu0 %v2240
    %2259 = vmatpush.msra.mxu0 %v2239
    %2260 = vmatpush.msra.mxu0 %v2238
    %2261 = vmatmul.f32.gmra.mxu0 %v2243
    %v2262 = vpop.f32.mrf.mxu0
    %v2263 = vadd.f32 0.0, %v2262
    %2264 = vdwg.mxu0
    %v2265 = vadd.f32 %v1459, %v2263
    %v2266 = vld [vmem:[%s13 + $0x20] sm:$0xff]
    %v2267 = vld [vmem:[%s13 + $0x28] sm:$0xff]
    %v2268 = vld [vmem:[%s13 + $0x30] sm:$0xff]
    %v2269 = vld [vmem:[%s13 + $0x38] sm:$0xff]
    %2271 = vrot.lane.b32.xlu0 %v2237, 32
    %v2272 = vpop.permute.xlu0 %2271
    %v2273 = vsel %vm77, %v2272, 0
    %2275 = vmatpush.msra.mxu0 0.0
    %2276 = vmatpush.msra.mxu0 0.0
    %2277 = vmatpush.msra.mxu0 0.0
    %2278 = vmatpush.msra.mxu0 0.0
    %2279 = vmatpush.msra.mxu0 0.0
    %2280 = vmatpush.msra.mxu0 0.0
    %2281 = vmatpush.msra.mxu0 0.0
    %2282 = vmatpush.msra.mxu0 0.0
    %2283 = vmatpush.msra.mxu0 0.0
    %2284 = vmatpush.msra.mxu0 0.0
    %2285 = vmatpush.msra.mxu0 0.0
    %2286 = vmatpush.msra.mxu0 0.0
    %2287 = vmatpush.msra.mxu0 %v2269
    %2288 = vmatpush.msra.mxu0 %v2268
    %2289 = vmatpush.msra.mxu0 %v2267
    %2290 = vmatpush.msra.mxu0 %v2266
    %2291 = vmatmul.f32.gmra.mxu0 %v2273
    %v2292 = vpop.f32.mrf.mxu0
    %v2293 = vadd.f32 0.0, %v2292
    %2294 = vdwg.mxu0
    %v2295 = vadd.f32 %v2265, %v2293
    %v2296 = vmax.f32 %v955, 0.0
    %v2297 = vld [vmem:[%s13 + $0x40] sm:$0xff]
    %v2298 = vld [vmem:[%s13 + $0x48] sm:$0xff]
    %v2299 = vld [vmem:[%s13 + $0x50] sm:$0xff]
    %v2300 = vld [vmem:[%s13 + $0x58] sm:$0xff]
    %v2301 = vrot.slane %v2236, 1
    %v2302 = vsel %vm77, %v2301, 0
    %2304 = vmatpush.msra.mxu0 0.0
    %2305 = vmatpush.msra.mxu0 0.0
    %2306 = vmatpush.msra.mxu0 0.0
    %2307 = vmatpush.msra.mxu0 0.0
    %2308 = vmatpush.msra.mxu0 0.0
    %2309 = vmatpush.msra.mxu0 0.0
    %2310 = vmatpush.msra.mxu0 0.0
    %2311 = vmatpush.msra.mxu0 0.0
    %2312 = vmatpush.msra.mxu0 0.0
    %2313 = vmatpush.msra.mxu0 0.0
    %2314 = vmatpush.msra.mxu0 0.0
    %2315 = vmatpush.msra.mxu0 0.0
    %2316 = vmatpush.msra.mxu0 %v2300
    %2317 = vmatpush.msra.mxu0 %v2299
    %2318 = vmatpush.msra.mxu0 %v2298
    %2319 = vmatpush.msra.mxu0 %v2297
    %2320 = vmatmul.f32.gmra.mxu0 %v2302
    %v2321 = vpop.f32.mrf.mxu0
    %v2322 = vadd.f32 0.0, %v2321
    %2323 = vdwg.mxu0
    %v2324 = vadd.f32 %v2295, %v2322
    %v2325 = vld [vmem:[%s13 + $0x60] sm:$0xff]
    %v2326 = vld [vmem:[%s13 + $0x68] sm:$0xff]
    %v2327 = vld [vmem:[%s13 + $0x70] sm:$0xff]
    %v2328 = vld [vmem:[%s13 + $0x78] sm:$0xff]
    %2330 = vrot.lane.b32.xlu0 %v2296, 32
    %v2331 = vpop.permute.xlu0 %2330
    %v2332 = vsel %vm77, %v2331, 0
    %2334 = vmatpush.msra.mxu0 0.0
    %2335 = vmatpush.msra.mxu0 0.0
    %2336 = vmatpush.msra.mxu0 0.0
    %2337 = vmatpush.msra.mxu0 0.0
    %2338 = vmatpush.msra.mxu0 0.0
    %2339 = vmatpush.msra.mxu0 0.0
    %2340 = vmatpush.msra.mxu0 0.0
    %2341 = vmatpush.msra.mxu0 0.0
    %2342 = vmatpush.msra.mxu0 0.0
    %2343 = vmatpush.msra.mxu0 0.0
    %2344 = vmatpush.msra.mxu0 0.0
    %2345 = vmatpush.msra.mxu0 0.0
    %2346 = vmatpush.msra.mxu0 %v2328
    %2347 = vmatpush.msra.mxu0 %v2327
    %2348 = vmatpush.msra.mxu0 %v2326
    %2349 = vmatpush.msra.mxu0 %v2325
    %2350 = vmatmul.f32.gmra.mxu0 %v2332
    %v2351 = vpop.f32.mrf.mxu0
    %v2352 = vadd.f32 0.0, %v2351
    %2353 = vdwg.mxu0
    %v2354 = vadd.f32 %v2324, %v2352
    %v2355 = vmax.f32 %v1038, 0.0
    %v2356 = vld [vmem:[%s13 + $0x80] sm:$0xff]
    %v2357 = vld [vmem:[%s13 + $0x88] sm:$0xff]
    %v2358 = vld [vmem:[%s13 + $0x90] sm:$0xff]
    %v2359 = vld [vmem:[%s13 + $0x98] sm:$0xff]
    %v2360 = vrot.slane %v2236, 2
    %v2361 = vsel %vm77, %v2360, 0
    %2363 = vmatpush.msra.mxu0 0.0
    %2364 = vmatpush.msra.mxu0 0.0
    %2365 = vmatpush.msra.mxu0 0.0
    %2366 = vmatpush.msra.mxu0 0.0
    %2367 = vmatpush.msra.mxu0 0.0
    %2368 = vmatpush.msra.mxu0 0.0
    %2369 = vmatpush.msra.mxu0 0.0
    %2370 = vmatpush.msra.mxu0 0.0
    %2371 = vmatpush.msra.mxu0 0.0
    %2372 = vmatpush.msra.mxu0 0.0
    %2373 = vmatpush.msra.mxu0 0.0
    %2374 = vmatpush.msra.mxu0 0.0
    %2375 = vmatpush.msra.mxu0 %v2359
    %2376 = vmatpush.msra.mxu0 %v2358
    %2377 = vmatpush.msra.mxu0 %v2357
    %2378 = vmatpush.msra.mxu0 %v2356
    %2379 = vmatmul.f32.gmra.mxu0 %v2361
    %v2380 = vpop.f32.mrf.mxu0
    %v2381 = vadd.f32 0.0, %v2380
    %2382 = vdwg.mxu0
    %v2383 = vadd.f32 %v2354, %v2381
    %v2384 = vld [vmem:[%s13 + $0xa0] sm:$0xff]
    %v2385 = vld [vmem:[%s13 + $0xa8] sm:$0xff]
    %v2386 = vld [vmem:[%s13 + $0xb0] sm:$0xff]
    %v2387 = vld [vmem:[%s13 + $0xb8] sm:$0xff]
    %2389 = vrot.lane.b32.xlu0 %v2355, 32
    %v2390 = vpop.permute.xlu0 %2389
    %v2391 = vsel %vm77, %v2390, 0
    %2393 = vmatpush.msra.mxu0 0.0
    %2394 = vmatpush.msra.mxu0 0.0
    %2395 = vmatpush.msra.mxu0 0.0
    %2396 = vmatpush.msra.mxu0 0.0
    %2397 = vmatpush.msra.mxu0 0.0
    %2398 = vmatpush.msra.mxu0 0.0
    %2399 = vmatpush.msra.mxu0 0.0
    %2400 = vmatpush.msra.mxu0 0.0
    %2401 = vmatpush.msra.mxu0 0.0
    %2402 = vmatpush.msra.mxu0 0.0
    %2403 = vmatpush.msra.mxu0 0.0
    %2404 = vmatpush.msra.mxu0 0.0
    %2405 = vmatpush.msra.mxu0 %v2387
    %2406 = vmatpush.msra.mxu0 %v2386
    %2407 = vmatpush.msra.mxu0 %v2385
    %2408 = vmatpush.msra.mxu0 %v2384
    %2409 = vmatmul.f32.gmra.mxu0 %v2391
    %v2410 = vpop.f32.mrf.mxu0
    %v2411 = vadd.f32 0.0, %v2410
    %2412 = vdwg.mxu0
    %v2413 = vadd.f32 %v2383, %v2411
    %v2414 = vmax.f32 %v1121, 0.0
    %v2415 = vld [vmem:[%s13 + $0xc0] sm:$0xff]
    %v2416 = vld [vmem:[%s13 + $0xc8] sm:$0xff]
    %v2417 = vld [vmem:[%s13 + $0xd0] sm:$0xff]
    %v2418 = vld [vmem:[%s13 + $0xd8] sm:$0xff]
    %v2419 = vrot.slane %v2236, 3
    %v2420 = vsel %vm77, %v2419, 0
    %2422 = vmatpush.msra.mxu0 0.0
    %2423 = vmatpush.msra.mxu0 0.0
    %2424 = vmatpush.msra.mxu0 0.0
    %2425 = vmatpush.msra.mxu0 0.0
    %2426 = vmatpush.msra.mxu0 0.0
    %2427 = vmatpush.msra.mxu0 0.0
    %2428 = vmatpush.msra.mxu0 0.0
    %2429 = vmatpush.msra.mxu0 0.0
    %2430 = vmatpush.msra.mxu0 0.0
    %2431 = vmatpush.msra.mxu0 0.0
    %2432 = vmatpush.msra.mxu0 0.0
    %2433 = vmatpush.msra.mxu0 0.0
    %2434 = vmatpush.msra.mxu0 %v2418
    %2435 = vmatpush.msra.mxu0 %v2417
    %2436 = vmatpush.msra.mxu0 %v2416
    %2437 = vmatpush.msra.mxu0 %v2415
    %2438 = vmatmul.f32.gmra.mxu0 %v2420
    %v2439 = vpop.f32.mrf.mxu0
    %v2440 = vadd.f32 0.0, %v2439
    %2441 = vdwg.mxu0
    %v2442 = vadd.f32 %v2413, %v2440
    %v2443 = vld [vmem:[%s13 + $0xe0] sm:$0xff]
    %v2444 = vld [vmem:[%s13 + $0xe8] sm:$0xff]
    %v2445 = vld [vmem:[%s13 + $0xf0] sm:$0xff]
    %v2446 = vld [vmem:[%s13 + $0xf8] sm:$0xff]
    %2448 = vrot.lane.b32.xlu0 %v2414, 32
    %v2449 = vpop.permute.xlu0 %2448
    %v2450 = vsel %vm77, %v2449, 0
    %2452 = vmatpush.msra.mxu0 0.0
    %2453 = vmatpush.msra.mxu0 0.0
    %2454 = vmatpush.msra.mxu0 0.0
    %2455 = vmatpush.msra.mxu0 0.0
    %2456 = vmatpush.msra.mxu0 0.0
    %2457 = vmatpush.msra.mxu0 0.0
    %2458 = vmatpush.msra.mxu0 0.0
    %2459 = vmatpush.msra.mxu0 0.0
    %2460 = vmatpush.msra.mxu0 0.0
    %2461 = vmatpush.msra.mxu0 0.0
    %2462 = vmatpush.msra.mxu0 0.0
    %2463 = vmatpush.msra.mxu0 0.0
    %2464 = vmatpush.msra.mxu0 %v2446
    %2465 = vmatpush.msra.mxu0 %v2445
    %2466 = vmatpush.msra.mxu0 %v2444
    %2467 = vmatpush.msra.mxu0 %v2443
    %2468 = vmatmul.f32.gmra.mxu0 %v2450
    %v2469 = vpop.f32.mrf.mxu0
    %v2470 = vadd.f32 0.0, %v2469
    %2471 = vdwg.mxu0
    %v2472 = vadd.f32 %v2442, %v2470
    %v2473 = vmax.f32 %v1204, 0.0
    %v2474 = vld [vmem:[%s13 + $0x100] sm:$0xff]
    %v2475 = vld [vmem:[%s13 + $0x108] sm:$0xff]
    %v2476 = vld [vmem:[%s13 + $0x110] sm:$0xff]
    %v2477 = vld [vmem:[%s13 + $0x118] sm:$0xff]
    %v2478 = vrot.slane %v2236, 4
    %v2479 = vsel %vm77, %v2478, 0
    %2481 = vmatpush.msra.mxu0 0.0
    %2482 = vmatpush.msra.mxu0 0.0
    %2483 = vmatpush.msra.mxu0 0.0
    %2484 = vmatpush.msra.mxu0 0.0
    %2485 = vmatpush.msra.mxu0 0.0
    %2486 = vmatpush.msra.mxu0 0.0
    %2487 = vmatpush.msra.mxu0 0.0
    %2488 = vmatpush.msra.mxu0 0.0
    %2489 = vmatpush.msra.mxu0 0.0
    %2490 = vmatpush.msra.mxu0 0.0
    %2491 = vmatpush.msra.mxu0 0.0
    %2492 = vmatpush.msra.mxu0 0.0
    %2493 = vmatpush.msra.mxu0 %v2477
    %2494 = vmatpush.msra.mxu0 %v2476
    %2495 = vmatpush.msra.mxu0 %v2475
    %2496 = vmatpush.msra.mxu0 %v2474
    %2497 = vmatmul.f32.gmra.mxu0 %v2479
    %v2498 = vpop.f32.mrf.mxu0
    %v2499 = vadd.f32 0.0, %v2498
    %2500 = vdwg.mxu0
    %v2501 = vadd.f32 %v2472, %v2499
    %v2502 = vld [vmem:[%s13 + $0x120] sm:$0xff]
    %v2503 = vld [vmem:[%s13 + $0x128] sm:$0xff]
    %v2504 = vld [vmem:[%s13 + $0x130] sm:$0xff]
    %v2505 = vld [vmem:[%s13 + $0x138] sm:$0xff]
    %2507 = vrot.lane.b32.xlu0 %v2473, 32
    %v2508 = vpop.permute.xlu0 %2507
    %v2509 = vsel %vm77, %v2508, 0
    %2511 = vmatpush.msra.mxu0 0.0
    %2512 = vmatpush.msra.mxu0 0.0
    %2513 = vmatpush.msra.mxu0 0.0
    %2514 = vmatpush.msra.mxu0 0.0
    %2515 = vmatpush.msra.mxu0 0.0
    %2516 = vmatpush.msra.mxu0 0.0
    %2517 = vmatpush.msra.mxu0 0.0
    %2518 = vmatpush.msra.mxu0 0.0
    %2519 = vmatpush.msra.mxu0 0.0
    %2520 = vmatpush.msra.mxu0 0.0
    %2521 = vmatpush.msra.mxu0 0.0
    %2522 = vmatpush.msra.mxu0 0.0
    %2523 = vmatpush.msra.mxu0 %v2505
    %2524 = vmatpush.msra.mxu0 %v2504
    %2525 = vmatpush.msra.mxu0 %v2503
    %2526 = vmatpush.msra.mxu0 %v2502
    %2527 = vmatmul.f32.gmra.mxu0 %v2509
    %v2528 = vpop.f32.mrf.mxu0
    %v2529 = vadd.f32 0.0, %v2528
    %2530 = vdwg.mxu0
    %v2531 = vadd.f32 %v2501, %v2529
    %v2532 = vmax.f32 %v1287, 0.0
    %v2533 = vld [vmem:[%s13 + $0x140] sm:$0xff]
    %v2534 = vld [vmem:[%s13 + $0x148] sm:$0xff]
    %v2535 = vld [vmem:[%s13 + $0x150] sm:$0xff]
    %v2536 = vld [vmem:[%s13 + $0x158] sm:$0xff]
    %v2537 = vrot.slane %v2236, 5
    %v2538 = vsel %vm77, %v2537, 0
    %2540 = vmatpush.msra.mxu0 0.0
    %2541 = vmatpush.msra.mxu0 0.0
    %2542 = vmatpush.msra.mxu0 0.0
    %2543 = vmatpush.msra.mxu0 0.0
    %2544 = vmatpush.msra.mxu0 0.0
    %2545 = vmatpush.msra.mxu0 0.0
    %2546 = vmatpush.msra.mxu0 0.0
    %2547 = vmatpush.msra.mxu0 0.0
    %2548 = vmatpush.msra.mxu0 0.0
    %2549 = vmatpush.msra.mxu0 0.0
    %2550 = vmatpush.msra.mxu0 0.0
    %2551 = vmatpush.msra.mxu0 0.0
    %2552 = vmatpush.msra.mxu0 %v2536
    %2553 = vmatpush.msra.mxu0 %v2535
    %2554 = vmatpush.msra.mxu0 %v2534
    %2555 = vmatpush.msra.mxu0 %v2533
    %2556 = vmatmul.f32.gmra.mxu0 %v2538
    %v2557 = vpop.f32.mrf.mxu0
    %v2558 = vadd.f32 0.0, %v2557
    %2559 = vdwg.mxu0
    %v2560 = vadd.f32 %v2531, %v2558
    %v2561 = vld [vmem:[%s13 + $0x160] sm:$0xff]
    %v2562 = vld [vmem:[%s13 + $0x168] sm:$0xff]
    %v2563 = vld [vmem:[%s13 + $0x170] sm:$0xff]
    %v2564 = vld [vmem:[%s13 + $0x178] sm:$0xff]
    %2566 = vrot.lane.b32.xlu0 %v2532, 32
    %v2567 = vpop.permute.xlu0 %2566
    %v2568 = vsel %vm77, %v2567, 0
    %2570 = vmatpush.msra.mxu0 0.0
    %2571 = vmatpush.msra.mxu0 0.0
    %2572 = vmatpush.msra.mxu0 0.0
    %2573 = vmatpush.msra.mxu0 0.0
    %2574 = vmatpush.msra.mxu0 0.0
    %2575 = vmatpush.msra.mxu0 0.0
    %2576 = vmatpush.msra.mxu0 0.0
    %2577 = vmatpush.msra.mxu0 0.0
    %2578 = vmatpush.msra.mxu0 0.0
    %2579 = vmatpush.msra.mxu0 0.0
    %2580 = vmatpush.msra.mxu0 0.0
    %2581 = vmatpush.msra.mxu0 0.0
    %2582 = vmatpush.msra.mxu0 %v2564
    %2583 = vmatpush.msra.mxu0 %v2563
    %2584 = vmatpush.msra.mxu0 %v2562
    %2585 = vmatpush.msra.mxu0 %v2561
    %2586 = vmatmul.f32.gmra.mxu0 %v2568
    %v2587 = vpop.f32.mrf.mxu0
    %v2588 = vadd.f32 0.0, %v2587
    %2589 = vdwg.mxu0
    %v2590 = vadd.f32 %v2560, %v2588
    %v2591 = vmax.f32 %v1370, 0.0
    %v2592 = vld [vmem:[%s13 + $0x180] sm:$0xff]
    %v2593 = vld [vmem:[%s13 + $0x188] sm:$0xff]
    %v2594 = vld [vmem:[%s13 + $0x190] sm:$0xff]
    %v2595 = vld [vmem:[%s13 + $0x198] sm:$0xff]
    %v2596 = vrot.slane %v2236, 6
    %v2597 = vsel %vm77, %v2596, 0
    %2599 = vmatpush.msra.mxu0 0.0
    %2600 = vmatpush.msra.mxu0 0.0
    %2601 = vmatpush.msra.mxu0 0.0
    %2602 = vmatpush.msra.mxu0 0.0
    %2603 = vmatpush.msra.mxu0 0.0
    %2604 = vmatpush.msra.mxu0 0.0
    %2605 = vmatpush.msra.mxu0 0.0
    %2606 = vmatpush.msra.mxu0 0.0
    %2607 = vmatpush.msra.mxu0 0.0
    %2608 = vmatpush.msra.mxu0 0.0
    %2609 = vmatpush.msra.mxu0 0.0
    %2610 = vmatpush.msra.mxu0 0.0
    %2611 = vmatpush.msra.mxu0 %v2595
    %2612 = vmatpush.msra.mxu0 %v2594
    %2613 = vmatpush.msra.mxu0 %v2593
    %2614 = vmatpush.msra.mxu0 %v2592
    %2615 = vmatmul.f32.gmra.mxu0 %v2597
    %v2616 = vpop.f32.mrf.mxu0
    %v2617 = vadd.f32 0.0, %v2616
    %2618 = vdwg.mxu0
    %v2619 = vadd.f32 %v2590, %v2617
    %v2620 = vld [vmem:[%s13 + $0x1a0] sm:$0xff]
    %v2621 = vld [vmem:[%s13 + $0x1a8] sm:$0xff]
    %v2622 = vld [vmem:[%s13 + $0x1b0] sm:$0xff]
    %v2623 = vld [vmem:[%s13 + $0x1b8] sm:$0xff]
    %2625 = vrot.lane.b32.xlu0 %v2591, 32
    %v2626 = vpop.permute.xlu0 %2625
    %v2627 = vsel %vm77, %v2626, 0
    %2629 = vmatpush.msra.mxu0 0.0
    %2630 = vmatpush.msra.mxu0 0.0
    %2631 = vmatpush.msra.mxu0 0.0
    %2632 = vmatpush.msra.mxu0 0.0
    %2633 = vmatpush.msra.mxu0 0.0
    %2634 = vmatpush.msra.mxu0 0.0
    %2635 = vmatpush.msra.mxu0 0.0
    %2636 = vmatpush.msra.mxu0 0.0
    %2637 = vmatpush.msra.mxu0 0.0
    %2638 = vmatpush.msra.mxu0 0.0
    %2639 = vmatpush.msra.mxu0 0.0
    %2640 = vmatpush.msra.mxu0 0.0
    %2641 = vmatpush.msra.mxu0 %v2623
    %2642 = vmatpush.msra.mxu0 %v2622
    %2643 = vmatpush.msra.mxu0 %v2621
    %2644 = vmatpush.msra.mxu0 %v2620
    %2645 = vmatmul.f32.gmra.mxu0 %v2627
    %v2646 = vpop.f32.mrf.mxu0
    %v2647 = vadd.f32 0.0, %v2646
    %2648 = vdwg.mxu0
    %v2649 = vadd.f32 %v2619, %v2647
    %v2650 = vmax.f32 %v1458, 0.0
    %v2651 = vld [vmem:[%s13 + $0x1c0] sm:$0xff]
    %v2652 = vld [vmem:[%s13 + $0x1c8] sm:$0xff]
    %v2653 = vld [vmem:[%s13 + $0x1d0] sm:$0xff]
    %v2654 = vld [vmem:[%s13 + $0x1d8] sm:$0xff]
    %v2655 = vrot.slane %v2236, 7
    %v2656 = vsel %vm77, %v2655, 0
    %2658 = vmatpush.msra.mxu0 0.0
    %2659 = vmatpush.msra.mxu0 0.0
    %2660 = vmatpush.msra.mxu0 0.0
    %2661 = vmatpush.msra.mxu0 0.0
    %2662 = vmatpush.msra.mxu0 0.0
    %2663 = vmatpush.msra.mxu0 0.0
    %2664 = vmatpush.msra.mxu0 0.0
    %2665 = vmatpush.msra.mxu0 0.0
    %2666 = vmatpush.msra.mxu0 0.0
    %2667 = vmatpush.msra.mxu0 0.0
    %2668 = vmatpush.msra.mxu0 0.0
    %2669 = vmatpush.msra.mxu0 0.0
    %2670 = vmatpush.msra.mxu0 %v2654
    %2671 = vmatpush.msra.mxu0 %v2653
    %2672 = vmatpush.msra.mxu0 %v2652
    %2673 = vmatpush.msra.mxu0 %v2651
    %2674 = vmatmul.f32.gmra.mxu0 %v2656
    %v2675 = vpop.f32.mrf.mxu0
    %v2676 = vadd.f32 0.0, %v2675
    %2677 = vdwg.mxu0
    %v2678 = vadd.f32 %v2649, %v2676
    %v2679 = vld [vmem:[%s13 + $0x1e0] sm:$0xff]
    %v2680 = vld [vmem:[%s13 + $0x1e8] sm:$0xff]
    %v2681 = vld [vmem:[%s13 + $0x1f0] sm:$0xff]
    %v2682 = vld [vmem:[%s13 + $0x1f8] sm:$0xff]
    %2684 = vrot.lane.b32.xlu0 %v2650, 32
    %v2685 = vpop.permute.xlu0 %2684
    %v2686 = vsel %vm77, %v2685, 0
    %2688 = vmatpush.msra.mxu0 0.0
    %2689 = vmatpush.msra.mxu0 0.0
    %2690 = vmatpush.msra.mxu0 0.0
    %2691 = vmatpush.msra.mxu0 0.0
    %2692 = vmatpush.msra.mxu0 0.0
    %2693 = vmatpush.msra.mxu0 0.0
    %2694 = vmatpush.msra.mxu0 0.0
    %2695 = vmatpush.msra.mxu0 0.0
    %2696 = vmatpush.msra.mxu0 0.0
    %2697 = vmatpush.msra.mxu0 0.0
    %2698 = vmatpush.msra.mxu0 0.0
    %2699 = vmatpush.msra.mxu0 0.0
    %2700 = vmatpush.msra.mxu0 %v2682
    %2701 = vmatpush.msra.mxu0 %v2681
    %2702 = vmatpush.msra.mxu0 %v2680
    %2703 = vmatpush.msra.mxu0 %v2679
    %2704 = vmatmul.f32.gmra.mxu0 %v2686
    %v2705 = vpop.f32.mrf.mxu0
    %v2706 = vadd.f32 0.0, %v2705
    %2707 = vdwg.mxu0
    %v2708 = vadd.f32 %v2678, %v2706
    %vm2709 = vcmask 57344
    %2710 = vst.msk [vmem:[#allocation2] sm:$0x1] %vm2709, %v2708
    %v2711 = vrot.slane %v872, 1
    %v2713 = vrot.slane %v1038, 7
    %v2715 = vrot.slane %v1121, 6
    %v2717 = vrot.slane %v1204, 5
    %v2719 = vrot.slane %v1287, 4
    %v2721 = vrot.slane %v1370, 3
    %v2723 = vrot.slane %v1458, 2
    %v2725 = vsel %vm1475, %v2711, %v955
    %v2726 = vsel %vm1477, %v2725, %v2713
    %v2727 = vsel %vm1479, %v2726, %v2715
    %v2728 = vsel %vm1481, %v2727, %v2717
    %v2729 = vsel %vm1483, %v2728, %v2719
    %v2730 = vsel %vm1485, %v2729, %v2721
    %v2731 = vsel %vm1487, %v2730, %v2723
    %v2732 = vld [vmem:[%s1] sm:$0x3]
    %v2733 = vld [vmem:[%s781] sm:$0x3]
    %v2735 = vrot.slane %v2732, 1
    %v2737 = vsel %vm1475, %v2735, %v2733
    %v2738 = vld [vmem:[%s9] sm:$0xff]
    %v2739 = vld [vmem:[%s9 + $0x8] sm:$0xff]
    %v2740 = vld [vmem:[%s9 + $0x10] sm:$0xff]
    %v2741 = vld [vmem:[%s9 + $0x18] sm:$0xff]
    %2743 = vrot.lane.b32.xlu0 %v2731, 32
    %v2744 = vpop.permute.xlu0 %2743
    %v2745 = vsel %vm77, %v2744, 0
    %2747 = vmatpush.msra.mxu0 0.0
    %2748 = vmatpush.msra.mxu0 0.0
    %2749 = vmatpush.msra.mxu0 0.0
    %2750 = vmatpush.msra.mxu0 0.0
    %2751 = vmatpush.msra.mxu0 0.0
    %2752 = vmatpush.msra.mxu0 0.0
    %2753 = vmatpush.msra.mxu0 0.0
    %2754 = vmatpush.msra.mxu0 0.0
    %2755 = vmatpush.msra.mxu0 0.0
    %2756 = vmatpush.msra.mxu0 0.0
    %2757 = vmatpush.msra.mxu0 0.0
    %2758 = vmatpush.msra.mxu0 0.0
    %2759 = vmatpush.msra.mxu0 %v2741
    %2760 = vmatpush.msra.mxu0 %v2740
    %2761 = vmatpush.msra.mxu0 %v2739
    %2762 = vmatpush.msra.mxu0 %v2738
    %2763 = vmatmul.f32.gmra.mxu0 %v2745
    %v2764 = vpop.f32.mrf.mxu0
    %v2765 = vadd.f32 0.0, %v2764
    %2766 = vdwg.mxu0
    %v2767 = vld [vmem:[%s10] sm:$0xff]
    %v2768 = vld [vmem:[%s10 + $0x8] sm:$0xff]
    %v2769 = vld [vmem:[%s10 + $0x10] sm:$0xff]
    %v2770 = vld [vmem:[%s10 + $0x18] sm:$0xff]
    %v2772 = vsel %vm77, %v2737, 0
    %2774 = vmatpush.msra.mxu0 0.0
    %2775 = vmatpush.msra.mxu0 0.0
    %2776 = vmatpush.msra.mxu0 0.0
    %2777 = vmatpush.msra.mxu0 0.0
    %2778 = vmatpush.msra.mxu0 0.0
    %2779 = vmatpush.msra.mxu0 0.0
    %2780 = vmatpush.msra.mxu0 0.0
    %2781 = vmatpush.msra.mxu0 0.0
    %2782 = vmatpush.msra.mxu0 0.0
    %2783 = vmatpush.msra.mxu0 0.0
    %2784 = vmatpush.msra.mxu0 0.0
    %2785 = vmatpush.msra.mxu0 0.0
    %2786 = vmatpush.msra.mxu0 %v2770
    %2787 = vmatpush.msra.mxu0 %v2769
    %2788 = vmatpush.msra.mxu0 %v2768
    %2789 = vmatpush.msra.mxu0 %v2767
    %2790 = vmatmul.f32.gmra.mxu0 %v2772
    %v2791 = vpop.f32.mrf.mxu0
    %v2792 = vadd.f32 0.0, %v2791
    %2793 = vdwg.mxu0
    %v2794 = vld [vmem:[%s11] sm:$0xff]
    %v2795 = vld [vmem:[%s11 + $0x8] sm:$0xff]
    %v2796 = vld [vmem:[%s11 + $0x10] sm:$0xff]
    %v2797 = vld [vmem:[%s11 + $0x18] sm:$0xff]
    %2798 = vmatpush.msra.mxu0 0.0
    %2799 = vmatpush.msra.mxu0 0.0
    %2800 = vmatpush.msra.mxu0 0.0
    %2801 = vmatpush.msra.mxu0 0.0
    %2802 = vmatpush.msra.mxu0 0.0
    %2803 = vmatpush.msra.mxu0 0.0
    %2804 = vmatpush.msra.mxu0 0.0
    %2805 = vmatpush.msra.mxu0 0.0
    %2806 = vmatpush.msra.mxu0 0.0
    %2807 = vmatpush.msra.mxu0 0.0
    %2808 = vmatpush.msra.mxu0 0.0
    %2809 = vmatpush.msra.mxu0 0.0
    %2810 = vmatpush.msra.mxu0 %v2797
    %2811 = vmatpush.msra.mxu0 %v2796
    %2812 = vmatpush.msra.mxu0 %v2795
    %2813 = vmatpush.msra.mxu0 %v2794
    %2814 = vmatmul.f32.gmra.mxu0 %v2772
    %v2815 = vpop.f32.mrf.mxu0
    %v2816 = vadd.f32 0.0, %v2815
    %2817 = vdwg.mxu0
    %v2819 = vsel %vm1572, %v2765, 0
    %v2822 = vsel %vm1572, %v2792, 0
    %2824 = vmatpush.xpose.msra.mxu0 0.0
    %2825 = vmatpush.xpose.msra.mxu0 0.0
    %2826 = vmatpush.xpose.msra.mxu0 0.0
    %2827 = vmatpush.xpose.msra.mxu0 0.0
    %2828 = vmatpush.xpose.msra.mxu0 0.0
    %2829 = vmatpush.xpose.msra.mxu0 0.0
    %2830 = vmatpush.xpose.msra.mxu0 0.0
    %2831 = vmatpush.xpose.msra.mxu0 0.0
    %2832 = vmatpush.xpose.msra.mxu0 0.0
    %2833 = vmatpush.xpose.msra.mxu0 0.0
    %2834 = vmatpush.xpose.msra.mxu0 0.0
    %2835 = vmatpush.xpose.msra.mxu0 0.0
    %2836 = vmatpush.xpose.msra.mxu0 0.0
    %2837 = vmatpush.xpose.msra.mxu0 0.0
    %2838 = vmatpush.xpose.msra.mxu0 0.0
    %2839 = vmatpush.xpose.msra.mxu0 %v2822
    %2840 = vmatmul.f32.gmra.mxu0 %v2819
    %v2841 = vpop.f32.mrf.mxu0
    %v2842 = vadd.f32 0.0, %v2841
    %2843 = vdwg.mxu0
    %v2844 = vsel %vm1599, %v2842, -inf
    %2845 = vmax.xlane.f32.xlu0 %v2844
    %v2846 = vpop.xlane.xlu0 %2845
    %v2847 = vsub.f32 %v2842, %v2846
    %v2848 = vmul.f32 %v2847, 1.442695
    %v2849 = vpow.pop %v2848
    %v2850 = vsel %vm1599, %v2849, 0.0
    %2851 = vadd.xlane.f32.xlu0 %v2850
    %v2852 = vpop.xlane.xlu0 %2851
    %v2853 = vrcp.pop %v2852
    %v2854 = vmul.f32 %v2849, %v2853
    %s2855 = scalar_lea.vmem %s16, 32
    %2856 = vst.msk [vmem:[%s2855] sm:$0xff] %vm1599, %v2854
    %v2858 = vsel %vm1599, %v2854, 0
    %v2861 = vsel %vm1477, %v2816, 0
    %2863 = vmatpush.msra.mxu0 0.0
    %2864 = vmatpush.msra.mxu0 0.0
    %2865 = vmatpush.msra.mxu0 0.0
    %2866 = vmatpush.msra.mxu0 0.0
    %2867 = vmatpush.msra.mxu0 0.0
    %2868 = vmatpush.msra.mxu0 0.0
    %2869 = vmatpush.msra.mxu0 0.0
    %2870 = vmatpush.msra.mxu0 0.0
    %2871 = vmatpush.msra.mxu0 0.0
    %2872 = vmatpush.msra.mxu0 0.0
    %2873 = vmatpush.msra.mxu0 0.0
    %2874 = vmatpush.msra.mxu0 0.0
    %2875 = vmatpush.msra.mxu0 0.0
    %2876 = vmatpush.msra.mxu0 0.0
    %2877 = vmatpush.msra.mxu0 0.0
    %2878 = vmatpush.msra.mxu0 %v2861
    %2879 = vmatmul.f32.gmra.mxu0 %v2858
    %v2880 = vpop.f32.mrf.mxu0
    %v2881 = vadd.f32 0.0, %v2880
    %2882 = vdwg.mxu0
    %v2883 = vld [vmem:[%s9] sm:$0xff]
    %v2884 = vld [vmem:[%s9 + $0x8] sm:$0xff]
    %v2885 = vld [vmem:[%s9 + $0x10] sm:$0xff]
    %v2886 = vld [vmem:[%s9 + $0x18] sm:$0xff]
    %2891 = vrot.lane.b32.xlu0 %v2883, 120
    %v2892 = vpop.permute.xlu0 %2891
    %2893 = vrot.lane.b32.xlu0 %v2884, 120
    %v2894 = vpop.permute.xlu0 %2893
    %2895 = vrot.lane.b32.xlu0 %v2885, 120
    %v2896 = vpop.permute.xlu0 %2895
    %2897 = vrot.lane.b32.xlu0 %v2886, 120
    %v2898 = vpop.permute.xlu0 %2897
    %2903 = vmatpush.msra.mxu0 0.0
    %2904 = vmatpush.msra.mxu0 0.0
    %2905 = vmatpush.msra.mxu0 0.0
    %2906 = vmatpush.msra.mxu0 0.0
    %2907 = vmatpush.msra.mxu0 0.0
    %2908 = vmatpush.msra.mxu0 0.0
    %2909 = vmatpush.msra.mxu0 0.0
    %2910 = vmatpush.msra.mxu0 0.0
    %2911 = vmatpush.msra.mxu0 0.0
    %2912 = vmatpush.msra.mxu0 0.0
    %2913 = vmatpush.msra.mxu0 0.0
    %2914 = vmatpush.msra.mxu0 0.0
    %2915 = vmatpush.msra.mxu0 %v2898
    %2916 = vmatpush.msra.mxu0 %v2896
    %2917 = vmatpush.msra.mxu0 %v2894
    %2918 = vmatpush.msra.mxu0 %v2892
    %2919 = vmatmul.f32.gmra.mxu0 %v2745
    %v2920 = vpop.f32.mrf.mxu0
    %v2921 = vadd.f32 0.0, %v2920
    %2922 = vdwg.mxu0
    %v2923 = vld [vmem:[%s10] sm:$0xff]
    %v2924 = vld [vmem:[%s10 + $0x8] sm:$0xff]
    %v2925 = vld [vmem:[%s10 + $0x10] sm:$0xff]
    %v2926 = vld [vmem:[%s10 + $0x18] sm:$0xff]
    %2931 = vrot.lane.b32.xlu0 %v2923, 120
    %v2932 = vpop.permute.xlu0 %2931
    %2933 = vrot.lane.b32.xlu0 %v2924, 120
    %v2934 = vpop.permute.xlu0 %2933
    %2935 = vrot.lane.b32.xlu0 %v2925, 120
    %v2936 = vpop.permute.xlu0 %2935
    %2937 = vrot.lane.b32.xlu0 %v2926, 120
    %v2938 = vpop.permute.xlu0 %2937
    %2943 = vmatpush.msra.mxu0 0.0
    %2944 = vmatpush.msra.mxu0 0.0
    %2945 = vmatpush.msra.mxu0 0.0
    %2946 = vmatpush.msra.mxu0 0.0
    %2947 = vmatpush.msra.mxu0 0.0
    %2948 = vmatpush.msra.mxu0 0.0
    %2949 = vmatpush.msra.mxu0 0.0
    %2950 = vmatpush.msra.mxu0 0.0
    %2951 = vmatpush.msra.mxu0 0.0
    %2952 = vmatpush.msra.mxu0 0.0
    %2953 = vmatpush.msra.mxu0 0.0
    %2954 = vmatpush.msra.mxu0 0.0
    %2955 = vmatpush.msra.mxu0 %v2938
    %2956 = vmatpush.msra.mxu0 %v2936
    %2957 = vmatpush.msra.mxu0 %v2934
    %2958 = vmatpush.msra.mxu0 %v2932
    %2959 = vmatmul.f32.gmra.mxu0 %v2772
    %v2960 = vpop.f32.mrf.mxu0
    %v2961 = vadd.f32 0.0, %v2960
    %2962 = vdwg.mxu0
    %v2963 = vld [vmem:[%s11] sm:$0xff]
    %v2964 = vld [vmem:[%s11 + $0x8] sm:$0xff]
    %v2965 = vld [vmem:[%s11 + $0x10] sm:$0xff]
    %v2966 = vld [vmem:[%s11 + $0x18] sm:$0xff]
    %2971 = vrot.lane.b32.xlu0 %v2963, 120
    %v2972 = vpop.permute.xlu0 %2971
    %2973 = vrot.lane.b32.xlu0 %v2964, 120
    %v2974 = vpop.permute.xlu0 %2973
    %2975 = vrot.lane.b32.xlu0 %v2965, 120
    %v2976 = vpop.permute.xlu0 %2975
    %2977 = vrot.lane.b32.xlu0 %v2966, 120
    %v2978 = vpop.permute.xlu0 %2977
    %2983 = vmatpush.msra.mxu0 0.0
    %2984 = vmatpush.msra.mxu0 0.0
    %2985 = vmatpush.msra.mxu0 0.0
    %2986 = vmatpush.msra.mxu0 0.0
    %2987 = vmatpush.msra.mxu0 0.0
    %2988 = vmatpush.msra.mxu0 0.0
    %2989 = vmatpush.msra.mxu0 0.0
    %2990 = vmatpush.msra.mxu0 0.0
    %2991 = vmatpush.msra.mxu0 0.0
    %2992 = vmatpush.msra.mxu0 0.0
    %2993 = vmatpush.msra.mxu0 0.0
    %2994 = vmatpush.msra.mxu0 0.0
    %2995 = vmatpush.msra.mxu0 %v2978
    %2996 = vmatpush.msra.mxu0 %v2976
    %2997 = vmatpush.msra.mxu0 %v2974
    %2998 = vmatpush.msra.mxu0 %v2972
    %2999 = vmatmul.f32.gmra.mxu0 %v2772
    %v3000 = vpop.f32.mrf.mxu0
    %v3001 = vadd.f32 0.0, %v3000
    %3002 = vdwg.mxu0
    %v3004 = vsel %vm1572, %v2921, 0
    %v3007 = vsel %vm1572, %v2961, 0
    %3009 = vmatpush.xpose.msra.mxu0 0.0
    %3010 = vmatpush.xpose.msra.mxu0 0.0
    %3011 = vmatpush.xpose.msra.mxu0 0.0
    %3012 = vmatpush.xpose.msra.mxu0 0.0
    %3013 = vmatpush.xpose.msra.mxu0 0.0
    %3014 = vmatpush.xpose.msra.mxu0 0.0
    %3015 = vmatpush.xpose.msra.mxu0 0.0
    %3016 = vmatpush.xpose.msra.mxu0 0.0
    %3017 = vmatpush.xpose.msra.mxu0 0.0
    %3018 = vmatpush.xpose.msra.mxu0 0.0
    %3019 = vmatpush.xpose.msra.mxu0 0.0
    %3020 = vmatpush.xpose.msra.mxu0 0.0
    %3021 = vmatpush.xpose.msra.mxu0 0.0
    %3022 = vmatpush.xpose.msra.mxu0 0.0
    %3023 = vmatpush.xpose.msra.mxu0 0.0
    %3024 = vmatpush.xpose.msra.mxu0 %v3007
    %3025 = vmatmul.f32.gmra.mxu0 %v3004
    %v3026 = vpop.f32.mrf.mxu0
    %v3027 = vadd.f32 0.0, %v3026
    %3028 = vdwg.mxu0
    %v3029 = vsel %vm1599, %v3027, -inf
    %3030 = vmax.xlane.f32.xlu0 %v3029
    %v3031 = vpop.xlane.xlu0 %3030
    %v3032 = vsub.f32 %v3027, %v3031
    %v3033 = vmul.f32 %v3032, 1.442695
    %v3034 = vpow.pop %v3033
    %v3035 = vsel %vm1599, %v3034, 0.0
    %3036 = vadd.xlane.f32.xlu0 %v3035
    %v3037 = vpop.xlane.xlu0 %3036
    %v3038 = vrcp.pop %v3037
    %v3039 = vmul.f32 %v3034, %v3038
    %s3040 = scalar_lea.vmem %s16, 40
    %3041 = vst.msk [vmem:[%s3040] sm:$0xff] %vm1599, %v3039
    %v3043 = vsel %vm1599, %v3039, 0
    %v3046 = vsel %vm1477, %v3001, 0
    %3048 = vmatpush.msra.mxu0 0.0
    %3049 = vmatpush.msra.mxu0 0.0
    %3050 = vmatpush.msra.mxu0 0.0
    %3051 = vmatpush.msra.mxu0 0.0
    %3052 = vmatpush.msra.mxu0 0.0
    %3053 = vmatpush.msra.mxu0 0.0
    %3054 = vmatpush.msra.mxu0 0.0
    %3055 = vmatpush.msra.mxu0 0.0
    %3056 = vmatpush.msra.mxu0 0.0
    %3057 = vmatpush.msra.mxu0 0.0
    %3058 = vmatpush.msra.mxu0 0.0
    %3059 = vmatpush.msra.mxu0 0.0
    %3060 = vmatpush.msra.mxu0 0.0
    %3061 = vmatpush.msra.mxu0 0.0
    %3062 = vmatpush.msra.mxu0 0.0
    %3063 = vmatpush.msra.mxu0 %v3046
    %3064 = vmatmul.f32.gmra.mxu0 %v3043
    %v3065 = vpop.f32.mrf.mxu0
    %v3066 = vadd.f32 0.0, %v3065
    %3067 = vdwg.mxu0
    %v3068 = vld [vmem:[%s9] sm:$0xff]
    %v3069 = vld [vmem:[%s9 + $0x8] sm:$0xff]
    %v3070 = vld [vmem:[%s9 + $0x10] sm:$0xff]
    %v3071 = vld [vmem:[%s9 + $0x18] sm:$0xff]
    %3076 = vrot.lane.b32.xlu0 %v3068, 112
    %v3077 = vpop.permute.xlu0 %3076
    %3078 = vrot.lane.b32.xlu0 %v3069, 112
    %v3079 = vpop.permute.xlu0 %3078
    %3080 = vrot.lane.b32.xlu0 %v3070, 112
    %v3081 = vpop.permute.xlu0 %3080
    %3082 = vrot.lane.b32.xlu0 %v3071, 112
    %v3083 = vpop.permute.xlu0 %3082
    %3088 = vmatpush.msra.mxu0 0.0
    %3089 = vmatpush.msra.mxu0 0.0
    %3090 = vmatpush.msra.mxu0 0.0
    %3091 = vmatpush.msra.mxu0 0.0
    %3092 = vmatpush.msra.mxu0 0.0
    %3093 = vmatpush.msra.mxu0 0.0
    %3094 = vmatpush.msra.mxu0 0.0
    %3095 = vmatpush.msra.mxu0 0.0
    %3096 = vmatpush.msra.mxu0 0.0
    %3097 = vmatpush.msra.mxu0 0.0
    %3098 = vmatpush.msra.mxu0 0.0
    %3099 = vmatpush.msra.mxu0 0.0
    %3100 = vmatpush.msra.mxu0 %v3083
    %3101 = vmatpush.msra.mxu0 %v3081
    %3102 = vmatpush.msra.mxu0 %v3079
    %3103 = vmatpush.msra.mxu0 %v3077
    %3104 = vmatmul.f32.gmra.mxu0 %v2745
    %v3105 = vpop.f32.mrf.mxu0
    %v3106 = vadd.f32 0.0, %v3105
    %3107 = vdwg.mxu0
    %v3108 = vld [vmem:[%s10] sm:$0xff]
    %v3109 = vld [vmem:[%s10 + $0x8] sm:$0xff]
    %v3110 = vld [vmem:[%s10 + $0x10] sm:$0xff]
    %v3111 = vld [vmem:[%s10 + $0x18] sm:$0xff]
    %3116 = vrot.lane.b32.xlu0 %v3108, 112
    %v3117 = vpop.permute.xlu0 %3116
    %3118 = vrot.lane.b32.xlu0 %v3109, 112
    %v3119 = vpop.permute.xlu0 %3118
    %3120 = vrot.lane.b32.xlu0 %v3110, 112
    %v3121 = vpop.permute.xlu0 %3120
    %3122 = vrot.lane.b32.xlu0 %v3111, 112
    %v3123 = vpop.permute.xlu0 %3122
    %3128 = vmatpush.msra.mxu0 0.0
    %3129 = vmatpush.msra.mxu0 0.0
    %3130 = vmatpush.msra.mxu0 0.0
    %3131 = vmatpush.msra.mxu0 0.0
    %3132 = vmatpush.msra.mxu0 0.0
    %3133 = vmatpush.msra.mxu0 0.0
    %3134 = vmatpush.msra.mxu0 0.0
    %3135 = vmatpush.msra.mxu0 0.0
    %3136 = vmatpush.msra.mxu0 0.0
    %3137 = vmatpush.msra.mxu0 0.0
    %3138 = vmatpush.msra.mxu0 0.0
    %3139 = vmatpush.msra.mxu0 0.0
    %3140 = vmatpush.msra.mxu0 %v3123
    %3141 = vmatpush.msra.mxu0 %v3121
    %3142 = vmatpush.msra.mxu0 %v3119
    %3143 = vmatpush.msra.mxu0 %v3117
    %3144 = vmatmul.f32.gmra.mxu0 %v2772
    %v3145 = vpop.f32.mrf.mxu0
    %v3146 = vadd.f32 0.0, %v3145
    %3147 = vdwg.mxu0
    %v3148 = vld [vmem:[%s11] sm:$0xff]
    %v3149 = vld [vmem:[%s11 + $0x8] sm:$0xff]
    %v3150 = vld [vmem:[%s11 + $0x10] sm:$0xff]
    %v3151 = vld [vmem:[%s11 + $0x18] sm:$0xff]
    %3156 = vrot.lane.b32.xlu0 %v3148, 112
    %v3157 = vpop.permute.xlu0 %3156
    %3158 = vrot.lane.b32.xlu0 %v3149, 112
    %v3159 = vpop.permute.xlu0 %3158
    %3160 = vrot.lane.b32.xlu0 %v3150, 112
    %v3161 = vpop.permute.xlu0 %3160
    %3162 = vrot.lane.b32.xlu0 %v3151, 112
    %v3163 = vpop.permute.xlu0 %3162
    %3168 = vmatpush.msra.mxu0 0.0
    %3169 = vmatpush.msra.mxu0 0.0
    %3170 = vmatpush.msra.mxu0 0.0
    %3171 = vmatpush.msra.mxu0 0.0
    %3172 = vmatpush.msra.mxu0 0.0
    %3173 = vmatpush.msra.mxu0 0.0
    %3174 = vmatpush.msra.mxu0 0.0
    %3175 = vmatpush.msra.mxu0 0.0
    %3176 = vmatpush.msra.mxu0 0.0
    %3177 = vmatpush.msra.mxu0 0.0
    %3178 = vmatpush.msra.mxu0 0.0
    %3179 = vmatpush.msra.mxu0 0.0
    %3180 = vmatpush.msra.mxu0 %v3163
    %3181 = vmatpush.msra.mxu0 %v3161
    %3182 = vmatpush.msra.mxu0 %v3159
    %3183 = vmatpush.msra.mxu0 %v3157
    %3184 = vmatmul.f32.gmra.mxu0 %v2772
    %v3185 = vpop.f32.mrf.mxu0
    %v3186 = vadd.f32 0.0, %v3185
    %3187 = vdwg.mxu0
    %v3189 = vsel %vm1572, %v3106, 0
    %v3192 = vsel %vm1572, %v3146, 0
    %3194 = vmatpush.xpose.msra.mxu0 0.0
    %3195 = vmatpush.xpose.msra.mxu0 0.0
    %3196 = vmatpush.xpose.msra.mxu0 0.0
    %3197 = vmatpush.xpose.msra.mxu0 0.0
    %3198 = vmatpush.xpose.msra.mxu0 0.0
    %3199 = vmatpush.xpose.msra.mxu0 0.0
    %3200 = vmatpush.xpose.msra.mxu0 0.0
    %3201 = vmatpush.xpose.msra.mxu0 0.0
    %3202 = vmatpush.xpose.msra.mxu0 0.0
    %3203 = vmatpush.xpose.msra.mxu0 0.0
    %3204 = vmatpush.xpose.msra.mxu0 0.0
    %3205 = vmatpush.xpose.msra.mxu0 0.0
    %3206 = vmatpush.xpose.msra.mxu0 0.0
    %3207 = vmatpush.xpose.msra.mxu0 0.0
    %3208 = vmatpush.xpose.msra.mxu0 0.0
    %3209 = vmatpush.xpose.msra.mxu0 %v3192
    %3210 = vmatmul.f32.gmra.mxu0 %v3189
    %v3211 = vpop.f32.mrf.mxu0
    %v3212 = vadd.f32 0.0, %v3211
    %3213 = vdwg.mxu0
    %v3214 = vsel %vm1599, %v3212, -inf
    %3215 = vmax.xlane.f32.xlu0 %v3214
    %v3216 = vpop.xlane.xlu0 %3215
    %v3217 = vsub.f32 %v3212, %v3216
    %v3218 = vmul.f32 %v3217, 1.442695
    %v3219 = vpow.pop %v3218
    %v3220 = vsel %vm1599, %v3219, 0.0
    %3221 = vadd.xlane.f32.xlu0 %v3220
    %v3222 = vpop.xlane.xlu0 %3221
    %v3223 = vrcp.pop %v3222
    %v3224 = vmul.f32 %v3219, %v3223
    %s3225 = scalar_lea.vmem %s16, 48
    %3226 = vst.msk [vmem:[%s3225] sm:$0xff] %vm1599, %v3224
    %v3228 = vsel %vm1599, %v3224, 0
    %v3231 = vsel %vm1477, %v3186, 0
    %3233 = vmatpush.msra.mxu0 0.0
    %3234 = vmatpush.msra.mxu0 0.0
    %3235 = vmatpush.msra.mxu0 0.0
    %3236 = vmatpush.msra.mxu0 0.0
    %3237 = vmatpush.msra.mxu0 0.0
    %3238 = vmatpush.msra.mxu0 0.0
    %3239 = vmatpush.msra.mxu0 0.0
    %3240 = vmatpush.msra.mxu0 0.0
    %3241 = vmatpush.msra.mxu0 0.0
    %3242 = vmatpush.msra.mxu0 0.0
    %3243 = vmatpush.msra.mxu0 0.0
    %3244 = vmatpush.msra.mxu0 0.0
    %3245 = vmatpush.msra.mxu0 0.0
    %3246 = vmatpush.msra.mxu0 0.0
    %3247 = vmatpush.msra.mxu0 0.0
    %3248 = vmatpush.msra.mxu0 %v3231
    %3249 = vmatmul.f32.gmra.mxu0 %v3228
    %v3250 = vpop.f32.mrf.mxu0
    %v3251 = vadd.f32 0.0, %v3250
    %3252 = vdwg.mxu0
    %v3253 = vld [vmem:[%s9] sm:$0xff]
    %v3254 = vld [vmem:[%s9 + $0x8] sm:$0xff]
    %v3255 = vld [vmem:[%s9 + $0x10] sm:$0xff]
    %v3256 = vld [vmem:[%s9 + $0x18] sm:$0xff]
    %3261 = vrot.lane.b32.xlu0 %v3253, 104
    %v3262 = vpop.permute.xlu0 %3261
    %3263 = vrot.lane.b32.xlu0 %v3254, 104
    %v3264 = vpop.permute.xlu0 %3263
    %3265 = vrot.lane.b32.xlu0 %v3255, 104
    %v3266 = vpop.permute.xlu0 %3265
    %3267 = vrot.lane.b32.xlu0 %v3256, 104
    %v3268 = vpop.permute.xlu0 %3267
    %3273 = vmatpush.msra.mxu0 0.0
    %3274 = vmatpush.msra.mxu0 0.0
    %3275 = vmatpush.msra.mxu0 0.0
    %3276 = vmatpush.msra.mxu0 0.0
    %3277 = vmatpush.msra.mxu0 0.0
    %3278 = vmatpush.msra.mxu0 0.0
    %3279 = vmatpush.msra.mxu0 0.0
    %3280 = vmatpush.msra.mxu0 0.0
    %3281 = vmatpush.msra.mxu0 0.0
    %3282 = vmatpush.msra.mxu0 0.0
    %3283 = vmatpush.msra.mxu0 0.0
    %3284 = vmatpush.msra.mxu0 0.0
    %3285 = vmatpush.msra.mxu0 %v3268
    %3286 = vmatpush.msra.mxu0 %v3266
    %3287 = vmatpush.msra.mxu0 %v3264
    %3288 = vmatpush.msra.mxu0 %v3262
    %3289 = vmatmul.f32.gmra.mxu0 %v2745
    %v3290 = vpop.f32.mrf.mxu0
    %v3291 = vadd.f32 0.0, %v3290
    %3292 = vdwg.mxu0
    %v3293 = vld [vmem:[%s10] sm:$0xff]
    %v3294 = vld [vmem:[%s10 + $0x8] sm:$0xff]
    %v3295 = vld [vmem:[%s10 + $0x10] sm:$0xff]
    %v3296 = vld [vmem:[%s10 + $0x18] sm:$0xff]
    %3301 = vrot.lane.b32.xlu0 %v3293, 104
    %v3302 = vpop.permute.xlu0 %3301
    %3303 = vrot.lane.b32.xlu0 %v3294, 104
    %v3304 = vpop.permute.xlu0 %3303
    %3305 = vrot.lane.b32.xlu0 %v3295, 104
    %v3306 = vpop.permute.xlu0 %3305
    %3307 = vrot.lane.b32.xlu0 %v3296, 104
    %v3308 = vpop.permute.xlu0 %3307
    %3313 = vmatpush.msra.mxu0 0.0
    %3314 = vmatpush.msra.mxu0 0.0
    %3315 = vmatpush.msra.mxu0 0.0
    %3316 = vmatpush.msra.mxu0 0.0
    %3317 = vmatpush.msra.mxu0 0.0
    %3318 = vmatpush.msra.mxu0 0.0
    %3319 = vmatpush.msra.mxu0 0.0
    %3320 = vmatpush.msra.mxu0 0.0
    %3321 = vmatpush.msra.mxu0 0.0
    %3322 = vmatpush.msra.mxu0 0.0
    %3323 = vmatpush.msra.mxu0 0.0
    %3324 = vmatpush.msra.mxu0 0.0
    %3325 = vmatpush.msra.mxu0 %v3308
    %3326 = vmatpush.msra.mxu0 %v3306
    %3327 = vmatpush.msra.mxu0 %v3304
    %3328 = vmatpush.msra.mxu0 %v3302
    %3329 = vmatmul.f32.gmra.mxu0 %v2772
    %v3330 = vpop.f32.mrf.mxu0
    %v3331 = vadd.f32 0.0, %v3330
    %3332 = vdwg.mxu0
    %v3333 = vld [vmem:[%s11] sm:$0xff]
    %v3334 = vld [vmem:[%s11 + $0x8] sm:$0xff]
    %v3335 = vld [vmem:[%s11 + $0x10] sm:$0xff]
    %v3336 = vld [vmem:[%s11 + $0x18] sm:$0xff]
    %3341 = vrot.lane.b32.xlu0 %v3333, 104
    %v3342 = vpop.permute.xlu0 %3341
    %3343 = vrot.lane.b32.xlu0 %v3334, 104
    %v3344 = vpop.permute.xlu0 %3343
    %3345 = vrot.lane.b32.xlu0 %v3335, 104
    %v3346 = vpop.permute.xlu0 %3345
    %3347 = vrot.lane.b32.xlu0 %v3336, 104
    %v3348 = vpop.permute.xlu0 %3347
    %3353 = vmatpush.msra.mxu0 0.0
    %3354 = vmatpush.msra.mxu0 0.0
    %3355 = vmatpush.msra.mxu0 0.0
    %3356 = vmatpush.msra.mxu0 0.0
    %3357 = vmatpush.msra.mxu0 0.0
    %3358 = vmatpush.msra.mxu0 0.0
    %3359 = vmatpush.msra.mxu0 0.0
    %3360 = vmatpush.msra.mxu0 0.0
    %3361 = vmatpush.msra.mxu0 0.0
    %3362 = vmatpush.msra.mxu0 0.0
    %3363 = vmatpush.msra.mxu0 0.0
    %3364 = vmatpush.msra.mxu0 0.0
    %3365 = vmatpush.msra.mxu0 %v3348
    %3366 = vmatpush.msra.mxu0 %v3346
    %3367 = vmatpush.msra.mxu0 %v3344
    %3368 = vmatpush.msra.mxu0 %v3342
    %3369 = vmatmul.f32.gmra.mxu0 %v2772
    %v3370 = vpop.f32.mrf.mxu0
    %v3371 = vadd.f32 0.0, %v3370
    %3372 = vdwg.mxu0
    %v3374 = vsel %vm1572, %v3291, 0
    %v3377 = vsel %vm1572, %v3331, 0
    %3379 = vmatpush.xpose.msra.mxu0 0.0
    %3380 = vmatpush.xpose.msra.mxu0 0.0
    %3381 = vmatpush.xpose.msra.mxu0 0.0
    %3382 = vmatpush.xpose.msra.mxu0 0.0
    %3383 = vmatpush.xpose.msra.mxu0 0.0
    %3384 = vmatpush.xpose.msra.mxu0 0.0
    %3385 = vmatpush.xpose.msra.mxu0 0.0
    %3386 = vmatpush.xpose.msra.mxu0 0.0
    %3387 = vmatpush.xpose.msra.mxu0 0.0
    %3388 = vmatpush.xpose.msra.mxu0 0.0
    %3389 = vmatpush.xpose.msra.mxu0 0.0
    %3390 = vmatpush.xpose.msra.mxu0 0.0
    %3391 = vmatpush.xpose.msra.mxu0 0.0
    %3392 = vmatpush.xpose.msra.mxu0 0.0
    %3393 = vmatpush.xpose.msra.mxu0 0.0
    %3394 = vmatpush.xpose.msra.mxu0 %v3377
    %3395 = vmatmul.f32.gmra.mxu0 %v3374
    %v3396 = vpop.f32.mrf.mxu0
    %v3397 = vadd.f32 0.0, %v3396
    %3398 = vdwg.mxu0
    %v3399 = vsel %vm1599, %v3397, -inf
    %3400 = vmax.xlane.f32.xlu0 %v3399
    %v3401 = vpop.xlane.xlu0 %3400
    %v3402 = vsub.f32 %v3397, %v3401
    %v3403 = vmul.f32 %v3402, 1.442695
    %v3404 = vpow.pop %v3403
    %v3405 = vsel %vm1599, %v3404, 0.0
    %3406 = vadd.xlane.f32.xlu0 %v3405
    %v3407 = vpop.xlane.xlu0 %3406
    %v3408 = vrcp.pop %v3407
    %v3409 = vmul.f32 %v3404, %v3408
    %s3410 = scalar_lea.vmem %s16, 56
    %3411 = vst.msk [vmem:[%s3410] sm:$0xff] %vm1599, %v3409
    %v3413 = vsel %vm1599, %v3409, 0
    %v3416 = vsel %vm1477, %v3371, 0
    %3418 = vmatpush.msra.mxu0 0.0
    %3419 = vmatpush.msra.mxu0 0.0
    %3420 = vmatpush.msra.mxu0 0.0
    %3421 = vmatpush.msra.mxu0 0.0
    %3422 = vmatpush.msra.mxu0 0.0
    %3423 = vmatpush.msra.mxu0 0.0
    %3424 = vmatpush.msra.mxu0 0.0
    %3425 = vmatpush.msra.mxu0 0.0
    %3426 = vmatpush.msra.mxu0 0.0
    %3427 = vmatpush.msra.mxu0 0.0
    %3428 = vmatpush.msra.mxu0 0.0
    %3429 = vmatpush.msra.mxu0 0.0
    %3430 = vmatpush.msra.mxu0 0.0
    %3431 = vmatpush.msra.mxu0 0.0
    %3432 = vmatpush.msra.mxu0 0.0
    %3433 = vmatpush.msra.mxu0 %v3416
    %3434 = vmatmul.f32.gmra.mxu0 %v3413
    %v3435 = vpop.f32.mrf.mxu0
    %v3436 = vadd.f32 0.0, %v3435
    %3437 = vdwg.mxu0
    %3439 = vrot.lane.b32.xlu0 %v3066, 8
    %v3440 = vpop.permute.xlu0 %3439
    %3443 = vrot.lane.b32.xlu0 %v3251, 16
    %v3444 = vpop.permute.xlu0 %3443
    %3447 = vrot.lane.b32.xlu0 %v3436, 24
    %v3448 = vpop.permute.xlu0 %3447
    %v3450 = vsel %vm1572, %v2881, %v3440
    %v3451 = vsel %vm101, %v3450, %v3444
    %v3452 = vsel %vm2207, %v3451, %v3448
    %v3453 = vld [vmem:[%s12] sm:$0xff]
    %v3454 = vld [vmem:[%s12 + $0x8] sm:$0xff]
    %v3455 = vld [vmem:[%s12 + $0x10] sm:$0xff]
    %v3456 = vld [vmem:[%s12 + $0x18] sm:$0xff]
    %v3458 = vsel %vm77, %v3452, 0
    %3460 = vmatpush.msra.mxu0 0.0
    %3461 = vmatpush.msra.mxu0 0.0
    %3462 = vmatpush.msra.mxu0 0.0
    %3463 = vmatpush.msra.mxu0 0.0
    %3464 = vmatpush.msra.mxu0 0.0
    %3465 = vmatpush.msra.mxu0 0.0
    %3466 = vmatpush.msra.mxu0 0.0
    %3467 = vmatpush.msra.mxu0 0.0
    %3468 = vmatpush.msra.mxu0 0.0
    %3469 = vmatpush.msra.mxu0 0.0
    %3470 = vmatpush.msra.mxu0 0.0
    %3471 = vmatpush.msra.mxu0 0.0
    %3472 = vmatpush.msra.mxu0 %v3456
    %3473 = vmatpush.msra.mxu0 %v3455
    %3474 = vmatpush.msra.mxu0 %v3454
    %3475 = vmatpush.msra.mxu0 %v3453
    %3476 = vmatmul.f32.gmra.mxu0 %v3458
    %v3477 = vpop.f32.mrf.mxu0
    %v3478 = vadd.f32 0.0, %v3477
    %3479 = vdwg.mxu0
    %v3480 = vmax.f32 %v3478, 0.0
    %v3481 = vld [vmem:[%s13] sm:$0xff]
    %v3482 = vld [vmem:[%s13 + $0x8] sm:$0xff]
    %v3483 = vld [vmem:[%s13 + $0x10] sm:$0xff]
    %v3484 = vld [vmem:[%s13 + $0x18] sm:$0xff]
    %v3486 = vsel %vm77, %v3480, 0
    %3488 = vmatpush.msra.mxu0 0.0
    %3489 = vmatpush.msra.mxu0 0.0
    %3490 = vmatpush.msra.mxu0 0.0
    %3491 = vmatpush.msra.mxu0 0.0
    %3492 = vmatpush.msra.mxu0 0.0
    %3493 = vmatpush.msra.mxu0 0.0
    %3494 = vmatpush.msra.mxu0 0.0
    %3495 = vmatpush.msra.mxu0 0.0
    %3496 = vmatpush.msra.mxu0 0.0
    %3497 = vmatpush.msra.mxu0 0.0
    %3498 = vmatpush.msra.mxu0 0.0
    %3499 = vmatpush.msra.mxu0 0.0
    %3500 = vmatpush.msra.mxu0 %v3484
    %3501 = vmatpush.msra.mxu0 %v3483
    %3502 = vmatpush.msra.mxu0 %v3482
    %3503 = vmatpush.msra.mxu0 %v3481
    %3504 = vmatmul.f32.gmra.mxu0 %v3486
    %v3505 = vpop.f32.mrf.mxu0
    %v3506 = vadd.f32 0.0, %v3505
    %3507 = vdwg.mxu0
    %v3508 = vadd.f32 %v1459, %v3506
    %v3509 = vld [vmem:[%s13 + $0x20] sm:$0xff]
    %v3510 = vld [vmem:[%s13 + $0x28] sm:$0xff]
    %v3511 = vld [vmem:[%s13 + $0x30] sm:$0xff]
    %v3512 = vld [vmem:[%s13 + $0x38] sm:$0xff]
    %v3513 = vrot.slane %v2237, 1
    %3514 = vrot.lane.b32.xlu0 %v3513, 32
    %v3515 = vpop.permute.xlu0 %3514
    %v3516 = vsel %vm77, %v3515, 0
    %3518 = vmatpush.msra.mxu0 0.0
    %3519 = vmatpush.msra.mxu0 0.0
    %3520 = vmatpush.msra.mxu0 0.0
    %3521 = vmatpush.msra.mxu0 0.0
    %3522 = vmatpush.msra.mxu0 0.0
    %3523 = vmatpush.msra.mxu0 0.0
    %3524 = vmatpush.msra.mxu0 0.0
    %3525 = vmatpush.msra.mxu0 0.0
    %3526 = vmatpush.msra.mxu0 0.0
    %3527 = vmatpush.msra.mxu0 0.0
    %3528 = vmatpush.msra.mxu0 0.0
    %3529 = vmatpush.msra.mxu0 0.0
    %3530 = vmatpush.msra.mxu0 %v3512
    %3531 = vmatpush.msra.mxu0 %v3511
    %3532 = vmatpush.msra.mxu0 %v3510
    %3533 = vmatpush.msra.mxu0 %v3509
    %3534 = vmatmul.f32.gmra.mxu0 %v3516
    %v3535 = vpop.f32.mrf.mxu0
    %v3536 = vadd.f32 0.0, %v3535
    %3537 = vdwg.mxu0
    %v3538 = vadd.f32 %v3508, %v3536
    %v3539 = vld [vmem:[%s13 + $0x40] sm:$0xff]
    %v3540 = vld [vmem:[%s13 + $0x48] sm:$0xff]
    %v3541 = vld [vmem:[%s13 + $0x50] sm:$0xff]
    %v3542 = vld [vmem:[%s13 + $0x58] sm:$0xff]
    %v3543 = vrot.slane %v3480, 1
    %v3544 = vsel %vm77, %v3543, 0
    %3546 = vmatpush.msra.mxu0 0.0
    %3547 = vmatpush.msra.mxu0 0.0
    %3548 = vmatpush.msra.mxu0 0.0
    %3549 = vmatpush.msra.mxu0 0.0
    %3550 = vmatpush.msra.mxu0 0.0
    %3551 = vmatpush.msra.mxu0 0.0
    %3552 = vmatpush.msra.mxu0 0.0
    %3553 = vmatpush.msra.mxu0 0.0
    %3554 = vmatpush.msra.mxu0 0.0
    %3555 = vmatpush.msra.mxu0 0.0
    %3556 = vmatpush.msra.mxu0 0.0
    %3557 = vmatpush.msra.mxu0 0.0
    %3558 = vmatpush.msra.mxu0 %v3542
    %3559 = vmatpush.msra.mxu0 %v3541
    %3560 = vmatpush.msra.mxu0 %v3540
    %3561 = vmatpush.msra.mxu0 %v3539
    %3562 = vmatmul.f32.gmra.mxu0 %v3544
    %v3563 = vpop.f32.mrf.mxu0
    %v3564 = vadd.f32 0.0, %v3563
    %3565 = vdwg.mxu0
    %v3566 = vadd.f32 %v3538, %v3564
    %v3567 = vld [vmem:[%s13 + $0x60] sm:$0xff]
    %v3568 = vld [vmem:[%s13 + $0x68] sm:$0xff]
    %v3569 = vld [vmem:[%s13 + $0x70] sm:$0xff]
    %v3570 = vld [vmem:[%s13 + $0x78] sm:$0xff]
    %v3571 = vrot.slane %v2296, 1
    %3572 = vrot.lane.b32.xlu0 %v3571, 32
    %v3573 = vpop.permute.xlu0 %3572
    %v3574 = vsel %vm77, %v3573, 0
    %3576 = vmatpush.msra.mxu0 0.0
    %3577 = vmatpush.msra.mxu0 0.0
    %3578 = vmatpush.msra.mxu0 0.0
    %3579 = vmatpush.msra.mxu0 0.0
    %3580 = vmatpush.msra.mxu0 0.0
    %3581 = vmatpush.msra.mxu0 0.0
    %3582 = vmatpush.msra.mxu0 0.0
    %3583 = vmatpush.msra.mxu0 0.0
    %3584 = vmatpush.msra.mxu0 0.0
    %3585 = vmatpush.msra.mxu0 0.0
    %3586 = vmatpush.msra.mxu0 0.0
    %3587 = vmatpush.msra.mxu0 0.0
    %3588 = vmatpush.msra.mxu0 %v3570
    %3589 = vmatpush.msra.mxu0 %v3569
    %3590 = vmatpush.msra.mxu0 %v3568
    %3591 = vmatpush.msra.mxu0 %v3567
    %3592 = vmatmul.f32.gmra.mxu0 %v3574
    %v3593 = vpop.f32.mrf.mxu0
    %v3594 = vadd.f32 0.0, %v3593
    %3595 = vdwg.mxu0
    %v3596 = vadd.f32 %v3566, %v3594
    %v3597 = vld [vmem:[%s13 + $0x80] sm:$0xff]
    %v3598 = vld [vmem:[%s13 + $0x88] sm:$0xff]
    %v3599 = vld [vmem:[%s13 + $0x90] sm:$0xff]
    %v3600 = vld [vmem:[%s13 + $0x98] sm:$0xff]
    %v3601 = vrot.slane %v3480, 2
    %v3602 = vsel %vm77, %v3601, 0
    %3604 = vmatpush.msra.mxu0 0.0
    %3605 = vmatpush.msra.mxu0 0.0
    %3606 = vmatpush.msra.mxu0 0.0
    %3607 = vmatpush.msra.mxu0 0.0
    %3608 = vmatpush.msra.mxu0 0.0
    %3609 = vmatpush.msra.mxu0 0.0
    %3610 = vmatpush.msra.mxu0 0.0
    %3611 = vmatpush.msra.mxu0 0.0
    %3612 = vmatpush.msra.mxu0 0.0
    %3613 = vmatpush.msra.mxu0 0.0
    %3614 = vmatpush.msra.mxu0 0.0
    %3615 = vmatpush.msra.mxu0 0.0
    %3616 = vmatpush.msra.mxu0 %v3600
    %3617 = vmatpush.msra.mxu0 %v3599
    %3618 = vmatpush.msra.mxu0 %v3598
    %3619 = vmatpush.msra.mxu0 %v3597
    %3620 = vmatmul.f32.gmra.mxu0 %v3602
    %v3621 = vpop.f32.mrf.mxu0
    %v3622 = vadd.f32 0.0, %v3621
    %3623 = vdwg.mxu0
    %v3624 = vadd.f32 %v3596, %v3622
    %v3625 = vld [vmem:[%s13 + $0xa0] sm:$0xff]
    %v3626 = vld [vmem:[%s13 + $0xa8] sm:$0xff]
    %v3627 = vld [vmem:[%s13 + $0xb0] sm:$0xff]
    %v3628 = vld [vmem:[%s13 + $0xb8] sm:$0xff]
    %v3629 = vrot.slane %v2355, 1
    %3630 = vrot.lane.b32.xlu0 %v3629, 32
    %v3631 = vpop.permute.xlu0 %3630
    %v3632 = vsel %vm77, %v3631, 0
    %3634 = vmatpush.msra.mxu0 0.0
    %3635 = vmatpush.msra.mxu0 0.0
    %3636 = vmatpush.msra.mxu0 0.0
    %3637 = vmatpush.msra.mxu0 0.0
    %3638 = vmatpush.msra.mxu0 0.0
    %3639 = vmatpush.msra.mxu0 0.0
    %3640 = vmatpush.msra.mxu0 0.0
    %3641 = vmatpush.msra.mxu0 0.0
    %3642 = vmatpush.msra.mxu0 0.0
    %3643 = vmatpush.msra.mxu0 0.0
    %3644 = vmatpush.msra.mxu0 0.0
    %3645 = vmatpush.msra.mxu0 0.0
    %3646 = vmatpush.msra.mxu0 %v3628
    %3647 = vmatpush.msra.mxu0 %v3627
    %3648 = vmatpush.msra.mxu0 %v3626
    %3649 = vmatpush.msra.mxu0 %v3625
    %3650 = vmatmul.f32.gmra.mxu0 %v3632
    %v3651 = vpop.f32.mrf.mxu0
    %v3652 = vadd.f32 0.0, %v3651
    %3653 = vdwg.mxu0
    %v3654 = vadd.f32 %v3624, %v3652
    %v3655 = vld [vmem:[%s13 + $0xc0] sm:$0xff]
    %v3656 = vld [vmem:[%s13 + $0xc8] sm:$0xff]
    %v3657 = vld [vmem:[%s13 + $0xd0] sm:$0xff]
    %v3658 = vld [vmem:[%s13 + $0xd8] sm:$0xff]
    %v3659 = vrot.slane %v3480, 3
    %v3660 = vsel %vm77, %v3659, 0
    %3662 = vmatpush.msra.mxu0 0.0
    %3663 = vmatpush.msra.mxu0 0.0
    %3664 = vmatpush.msra.mxu0 0.0
    %3665 = vmatpush.msra.mxu0 0.0
    %3666 = vmatpush.msra.mxu0 0.0
    %3667 = vmatpush.msra.mxu0 0.0
    %3668 = vmatpush.msra.mxu0 0.0
    %3669 = vmatpush.msra.mxu0 0.0
    %3670 = vmatpush.msra.mxu0 0.0
    %3671 = vmatpush.msra.mxu0 0.0
    %3672 = vmatpush.msra.mxu0 0.0
    %3673 = vmatpush.msra.mxu0 0.0
    %3674 = vmatpush.msra.mxu0 %v3658
    %3675 = vmatpush.msra.mxu0 %v3657
    %3676 = vmatpush.msra.mxu0 %v3656
    %3677 = vmatpush.msra.mxu0 %v3655
    %3678 = vmatmul.f32.gmra.mxu0 %v3660
    %v3679 = vpop.f32.mrf.mxu0
    %v3680 = vadd.f32 0.0, %v3679
    %3681 = vdwg.mxu0
    %v3682 = vadd.f32 %v3654, %v3680
    %v3683 = vld [vmem:[%s13 + $0xe0] sm:$0xff]
    %v3684 = vld [vmem:[%s13 + $0xe8] sm:$0xff]
    %v3685 = vld [vmem:[%s13 + $0xf0] sm:$0xff]
    %v3686 = vld [vmem:[%s13 + $0xf8] sm:$0xff]
    %v3687 = vrot.slane %v2414, 1
    %3688 = vrot.lane.b32.xlu0 %v3687, 32
    %v3689 = vpop.permute.xlu0 %3688
    %v3690 = vsel %vm77, %v3689, 0
    %3692 = vmatpush.msra.mxu0 0.0
    %3693 = vmatpush.msra.mxu0 0.0
    %3694 = vmatpush.msra.mxu0 0.0
    %3695 = vmatpush.msra.mxu0 0.0
    %3696 = vmatpush.msra.mxu0 0.0
    %3697 = vmatpush.msra.mxu0 0.0
    %3698 = vmatpush.msra.mxu0 0.0
    %3699 = vmatpush.msra.mxu0 0.0
    %3700 = vmatpush.msra.mxu0 0.0
    %3701 = vmatpush.msra.mxu0 0.0
    %3702 = vmatpush.msra.mxu0 0.0
    %3703 = vmatpush.msra.mxu0 0.0
    %3704 = vmatpush.msra.mxu0 %v3686
    %3705 = vmatpush.msra.mxu0 %v3685
    %3706 = vmatpush.msra.mxu0 %v3684
    %3707 = vmatpush.msra.mxu0 %v3683
    %3708 = vmatmul.f32.gmra.mxu0 %v3690
    %v3709 = vpop.f32.mrf.mxu0
    %v3710 = vadd.f32 0.0, %v3709
    %3711 = vdwg.mxu0
    %v3712 = vadd.f32 %v3682, %v3710
    %v3713 = vld [vmem:[%s13 + $0x100] sm:$0xff]
    %v3714 = vld [vmem:[%s13 + $0x108] sm:$0xff]
    %v3715 = vld [vmem:[%s13 + $0x110] sm:$0xff]
    %v3716 = vld [vmem:[%s13 + $0x118] sm:$0xff]
    %v3717 = vrot.slane %v3480, 4
    %v3718 = vsel %vm77, %v3717, 0
    %3720 = vmatpush.msra.mxu0 0.0
    %3721 = vmatpush.msra.mxu0 0.0
    %3722 = vmatpush.msra.mxu0 0.0
    %3723 = vmatpush.msra.mxu0 0.0
    %3724 = vmatpush.msra.mxu0 0.0
    %3725 = vmatpush.msra.mxu0 0.0
    %3726 = vmatpush.msra.mxu0 0.0
    %3727 = vmatpush.msra.mxu0 0.0
    %3728 = vmatpush.msra.mxu0 0.0
    %3729 = vmatpush.msra.mxu0 0.0
    %3730 = vmatpush.msra.mxu0 0.0
    %3731 = vmatpush.msra.mxu0 0.0
    %3732 = vmatpush.msra.mxu0 %v3716
    %3733 = vmatpush.msra.mxu0 %v3715
    %3734 = vmatpush.msra.mxu0 %v3714
    %3735 = vmatpush.msra.mxu0 %v3713
    %3736 = vmatmul.f32.gmra.mxu0 %v3718
    %v3737 = vpop.f32.mrf.mxu0
    %v3738 = vadd.f32 0.0, %v3737
    %3739 = vdwg.mxu0
    %v3740 = vadd.f32 %v3712, %v3738
    %v3741 = vld [vmem:[%s13 + $0x120] sm:$0xff]
    %v3742 = vld [vmem:[%s13 + $0x128] sm:$0xff]
    %v3743 = vld [vmem:[%s13 + $0x130] sm:$0xff]
    %v3744 = vld [vmem:[%s13 + $0x138] sm:$0xff]
    %v3745 = vrot.slane %v2473, 1
    %3746 = vrot.lane.b32.xlu0 %v3745, 32
    %v3747 = vpop.permute.xlu0 %3746
    %v3748 = vsel %vm77, %v3747, 0
    %3750 = vmatpush.msra.mxu0 0.0
    %3751 = vmatpush.msra.mxu0 0.0
    %3752 = vmatpush.msra.mxu0 0.0
    %3753 = vmatpush.msra.mxu0 0.0
    %3754 = vmatpush.msra.mxu0 0.0
    %3755 = vmatpush.msra.mxu0 0.0
    %3756 = vmatpush.msra.mxu0 0.0
    %3757 = vmatpush.msra.mxu0 0.0
    %3758 = vmatpush.msra.mxu0 0.0
    %3759 = vmatpush.msra.mxu0 0.0
    %3760 = vmatpush.msra.mxu0 0.0
    %3761 = vmatpush.msra.mxu0 0.0
    %3762 = vmatpush.msra.mxu0 %v3744
    %3763 = vmatpush.msra.mxu0 %v3743
    %3764 = vmatpush.msra.mxu0 %v3742
    %3765 = vmatpush.msra.mxu0 %v3741
    %3766 = vmatmul.f32.gmra.mxu0 %v3748
    %v3767 = vpop.f32.mrf.mxu0
    %v3768 = vadd.f32 0.0, %v3767
    %3769 = vdwg.mxu0
    %v3770 = vadd.f32 %v3740, %v3768
    %v3771 = vld [vmem:[%s13 + $0x140] sm:$0xff]
    %v3772 = vld [vmem:[%s13 + $0x148] sm:$0xff]
    %v3773 = vld [vmem:[%s13 + $0x150] sm:$0xff]
    %v3774 = vld [vmem:[%s13 + $0x158] sm:$0xff]
    %v3775 = vrot.slane %v3480, 5
    %v3776 = vsel %vm77, %v3775, 0
    %3778 = vmatpush.msra.mxu0 0.0
    %3779 = vmatpush.msra.mxu0 0.0
    %3780 = vmatpush.msra.mxu0 0.0
    %3781 = vmatpush.msra.mxu0 0.0
    %3782 = vmatpush.msra.mxu0 0.0
    %3783 = vmatpush.msra.mxu0 0.0
    %3784 = vmatpush.msra.mxu0 0.0
    %3785 = vmatpush.msra.mxu0 0.0
    %3786 = vmatpush.msra.mxu0 0.0
    %3787 = vmatpush.msra.mxu0 0.0
    %3788 = vmatpush.msra.mxu0 0.0
    %3789 = vmatpush.msra.mxu0 0.0
    %3790 = vmatpush.msra.mxu0 %v3774
    %3791 = vmatpush.msra.mxu0 %v3773
    %3792 = vmatpush.msra.mxu0 %v3772
    %3793 = vmatpush.msra.mxu0 %v3771
    %3794 = vmatmul.f32.gmra.mxu0 %v3776
    %v3795 = vpop.f32.mrf.mxu0
    %v3796 = vadd.f32 0.0, %v3795
    %3797 = vdwg.mxu0
    %v3798 = vadd.f32 %v3770, %v3796
    %v3799 = vld [vmem:[%s13 + $0x160] sm:$0xff]
    %v3800 = vld [vmem:[%s13 + $0x168] sm:$0xff]
    %v3801 = vld [vmem:[%s13 + $0x170] sm:$0xff]
    %v3802 = vld [vmem:[%s13 + $0x178] sm:$0xff]
    %v3803 = vrot.slane %v2532, 1
    %3804 = vrot.lane.b32.xlu0 %v3803, 32
    %v3805 = vpop.permute.xlu0 %3804
    %v3806 = vsel %vm77, %v3805, 0
    %3808 = vmatpush.msra.mxu0 0.0
    %3809 = vmatpush.msra.mxu0 0.0
    %3810 = vmatpush.msra.mxu0 0.0
    %3811 = vmatpush.msra.mxu0 0.0
    %3812 = vmatpush.msra.mxu0 0.0
    %3813 = vmatpush.msra.mxu0 0.0
    %3814 = vmatpush.msra.mxu0 0.0
    %3815 = vmatpush.msra.mxu0 0.0
    %3816 = vmatpush.msra.mxu0 0.0
    %3817 = vmatpush.msra.mxu0 0.0
    %3818 = vmatpush.msra.mxu0 0.0
    %3819 = vmatpush.msra.mxu0 0.0
    %3820 = vmatpush.msra.mxu0 %v3802
    %3821 = vmatpush.msra.mxu0 %v3801
    %3822 = vmatpush.msra.mxu0 %v3800
    %3823 = vmatpush.msra.mxu0 %v3799
    %3824 = vmatmul.f32.gmra.mxu0 %v3806
    %v3825 = vpop.f32.mrf.mxu0
    %v3826 = vadd.f32 0.0, %v3825
    %3827 = vdwg.mxu0
    %v3828 = vadd.f32 %v3798, %v3826
    %v3829 = vld [vmem:[%s13 + $0x180] sm:$0xff]
    %v3830 = vld [vmem:[%s13 + $0x188] sm:$0xff]
    %v3831 = vld [vmem:[%s13 + $0x190] sm:$0xff]
    %v3832 = vld [vmem:[%s13 + $0x198] sm:$0xff]
    %v3833 = vrot.slane %v3480, 6
    %v3834 = vsel %vm77, %v3833, 0
    %3836 = vmatpush.msra.mxu0 0.0
    %3837 = vmatpush.msra.mxu0 0.0
    %3838 = vmatpush.msra.mxu0 0.0
    %3839 = vmatpush.msra.mxu0 0.0
    %3840 = vmatpush.msra.mxu0 0.0
    %3841 = vmatpush.msra.mxu0 0.0
    %3842 = vmatpush.msra.mxu0 0.0
    %3843 = vmatpush.msra.mxu0 0.0
    %3844 = vmatpush.msra.mxu0 0.0
    %3845 = vmatpush.msra.mxu0 0.0
    %3846 = vmatpush.msra.mxu0 0.0
    %3847 = vmatpush.msra.mxu0 0.0
    %3848 = vmatpush.msra.mxu0 %v3832
    %3849 = vmatpush.msra.mxu0 %v3831
    %3850 = vmatpush.msra.mxu0 %v3830
    %3851 = vmatpush.msra.mxu0 %v3829
    %3852 = vmatmul.f32.gmra.mxu0 %v3834
    %v3853 = vpop.f32.mrf.mxu0
    %v3854 = vadd.f32 0.0, %v3853
    %3855 = vdwg.mxu0
    %v3856 = vadd.f32 %v3828, %v3854
    %v3857 = vld [vmem:[%s13 + $0x1a0] sm:$0xff]
    %v3858 = vld [vmem:[%s13 + $0x1a8] sm:$0xff]
    %v3859 = vld [vmem:[%s13 + $0x1b0] sm:$0xff]
    %v3860 = vld [vmem:[%s13 + $0x1b8] sm:$0xff]
    %v3861 = vrot.slane %v2591, 1
    %3862 = vrot.lane.b32.xlu0 %v3861, 32
    %v3863 = vpop.permute.xlu0 %3862
    %v3864 = vsel %vm77, %v3863, 0
    %3866 = vmatpush.msra.mxu0 0.0
    %3867 = vmatpush.msra.mxu0 0.0
    %3868 = vmatpush.msra.mxu0 0.0
    %3869 = vmatpush.msra.mxu0 0.0
    %3870 = vmatpush.msra.mxu0 0.0
    %3871 = vmatpush.msra.mxu0 0.0
    %3872 = vmatpush.msra.mxu0 0.0
    %3873 = vmatpush.msra.mxu0 0.0
    %3874 = vmatpush.msra.mxu0 0.0
    %3875 = vmatpush.msra.mxu0 0.0
    %3876 = vmatpush.msra.mxu0 0.0
    %3877 = vmatpush.msra.mxu0 0.0
    %3878 = vmatpush.msra.mxu0 %v3860
    %3879 = vmatpush.msra.mxu0 %v3859
    %3880 = vmatpush.msra.mxu0 %v3858
    %3881 = vmatpush.msra.mxu0 %v3857
    %3882 = vmatmul.f32.gmra.mxu0 %v3864
    %v3883 = vpop.f32.mrf.mxu0
    %v3884 = vadd.f32 0.0, %v3883
    %3885 = vdwg.mxu0
    %v3886 = vadd.f32 %v3856, %v3884
    %v3887 = vld [vmem:[%s13 + $0x1c0] sm:$0xff]
    %v3888 = vld [vmem:[%s13 + $0x1c8] sm:$0xff]
    %v3889 = vld [vmem:[%s13 + $0x1d0] sm:$0xff]
    %v3890 = vld [vmem:[%s13 + $0x1d8] sm:$0xff]
    %v3891 = vrot.slane %v3480, 7
    %v3892 = vsel %vm77, %v3891, 0
    %3894 = vmatpush.msra.mxu0 0.0
    %3895 = vmatpush.msra.mxu0 0.0
    %3896 = vmatpush.msra.mxu0 0.0
    %3897 = vmatpush.msra.mxu0 0.0
    %3898 = vmatpush.msra.mxu0 0.0
    %3899 = vmatpush.msra.mxu0 0.0
    %3900 = vmatpush.msra.mxu0 0.0
    %3901 = vmatpush.msra.mxu0 0.0
    %3902 = vmatpush.msra.mxu0 0.0
    %3903 = vmatpush.msra.mxu0 0.0
    %3904 = vmatpush.msra.mxu0 0.0
    %3905 = vmatpush.msra.mxu0 0.0
    %3906 = vmatpush.msra.mxu0 %v3890
    %3907 = vmatpush.msra.mxu0 %v3889
    %3908 = vmatpush.msra.mxu0 %v3888
    %3909 = vmatpush.msra.mxu0 %v3887
    %3910 = vmatmul.f32.gmra.mxu0 %v3892
    %v3911 = vpop.f32.mrf.mxu0
    %v3912 = vadd.f32 0.0, %v3911
    %3913 = vdwg.mxu0
    %v3914 = vadd.f32 %v3886, %v3912
    %v3915 = vld [vmem:[%s13 + $0x1e0] sm:$0xff]
    %v3916 = vld [vmem:[%s13 + $0x1e8] sm:$0xff]
    %v3917 = vld [vmem:[%s13 + $0x1f0] sm:$0xff]
    %v3918 = vld [vmem:[%s13 + $0x1f8] sm:$0xff]
    %v3919 = vrot.slane %v2650, 1
    %3920 = vrot.lane.b32.xlu0 %v3919, 32
    %v3921 = vpop.permute.xlu0 %3920
    %v3922 = vsel %vm77, %v3921, 0
    %3924 = vmatpush.msra.mxu0 0.0
    %3925 = vmatpush.msra.mxu0 0.0
    %3926 = vmatpush.msra.mxu0 0.0
    %3927 = vmatpush.msra.mxu0 0.0
    %3928 = vmatpush.msra.mxu0 0.0
    %3929 = vmatpush.msra.mxu0 0.0
    %3930 = vmatpush.msra.mxu0 0.0
    %3931 = vmatpush.msra.mxu0 0.0
    %3932 = vmatpush.msra.mxu0 0.0
    %3933 = vmatpush.msra.mxu0 0.0
    %3934 = vmatpush.msra.mxu0 0.0
    %3935 = vmatpush.msra.mxu0 0.0
    %3936 = vmatpush.msra.mxu0 %v3918
    %3937 = vmatpush.msra.mxu0 %v3917
    %3938 = vmatpush.msra.mxu0 %v3916
    %3939 = vmatpush.msra.mxu0 %v3915
    %3940 = vmatmul.f32.gmra.mxu0 %v3922
    %v3941 = vpop.f32.mrf.mxu0
    %v3942 = vadd.f32 0.0, %v3941
    %3943 = vdwg.mxu0
    %v3944 = vadd.f32 %v3914, %v3942
    %3945 = vst.msk [vmem:[#allocation2 + $0x1] sm:$0x1] %vm2709, %v3944
    // Predicated region
    $region62: #{lstm_dec_forward.1} parent=1 // pred_check
      _
    $region63: #{lstm_dec_forward.1} parent=1 // pred_check_branch
      %3947 = sbr.rel (0) target = $region65
    $region64: #{lstm_dec_forward.1} parent=1 // pred_region
      %3949 = vsyncadd [#allocation3], 0
      %s3951 = sshll.u32 [#allocation2], 4
      %s3952 = int_to_ptr.vmem [resolvable:$true] %s3951
      %s3953 = sshll.u32 %s15, 4
      %s3954 = int_to_ptr.hbm [resolvable:$true] %s3953
      %3956 = dma.vmem_to_hbm [thread:$0]  %s3952, 32, %s3954, [#allocation3]
    $region65: #{lstm_dec_forward.1} parent=1 // pred_fallthru
      _
    // Predicated region
    $region66: #{lstm_dec_forward.1} parent=1 // pred_check
      _
    $region67: #{lstm_dec_forward.1} parent=1 // pred_check_branch
      %3958 = sbr.rel (0) target = $region69
    $region68: #{lstm_dec_forward.1} parent=1 // pred_region
      _
    $region69: #{lstm_dec_forward.1} parent=1 // pred_fallthru
      _
    // Predicated region
    $region70: #{lstm_dec_forward.1} parent=1 // pred_check
      _
    $region71: #{lstm_dec_forward.1} parent=1 // pred_check_branch
      %3960 = sbr.rel (0) target = $region73
    $region72: #{lstm_dec_forward.1} parent=1 // pred_region
      %3962 = dma.done [#allocation3], 32
    $region73: #{lstm_dec_forward.1} parent=1 // pred_fallthru
      _
    // Predicated region
    $region74: #{lstm_dec_forward.1} parent=1 // pred_check
      _
    $region75: #{lstm_dec_forward.1} parent=1 // pred_check_branch
      %3964 = sbr.rel (0) target = $region77
    $region76: #{lstm_dec_forward.1} parent=1 // pred_region
      _
    $region77: #{lstm_dec_forward.1} parent=1 // pred_fallthru
      _
    %3965 = vsyncpa [#allocation3], 1

</llo_original>
